<compile_context>
chip_gen: v7x
topology: tpu7x:2x2x1
jax: 0.10.0
libtpu: 0.0.40
codegen_flags: <defaults>
</compile_context>

<pallas_src>
import functools

import jax
import jax.numpy as jnp
from jax.experimental import pallas as pl
from jax.experimental.pallas import tpu as pltpu

LANE = 128


def _round_up(x, m):
    return (x + m - 1) // m * m


# ----------------------------- Pallas kernels --------------------------------
def _matmul_stats_kernel(g_ref, w_ref, y_ref, stats_ref):
    """One N-tile of the sparse conv: y = G @ W plus per-tile BN partial sums.

    g_ref:     (tile_n, Kc) bf16  gathered features (K offsets folded into contraction)
    w_ref:     (Kc, Cp)     bf16  folded weight (constant index_map -> VMEM-resident)
    y_ref:     (tile_n, Cp) f32   pre-BN conv output tile
    stats_ref: (1, 8, Cp)   f32   row 0 = sum(y), row 1 = sum(y*y) for this tile
    """
    y = jnp.dot(g_ref[...], w_ref[...], preferred_element_type=jnp.float32)
    y_ref[...] = y
    s1 = jnp.sum(y, axis=0, keepdims=True)
    s2 = jnp.sum(y * y, axis=0, keepdims=True)
    cp = y.shape[1]
    rid = jax.lax.broadcasted_iota(jnp.int32, (8, cp), 0)
    stats_ref[0] = jnp.where(rid == 0, s1, jnp.where(rid == 1, s2, 0.0))


def _bn_act_kernel(y_ref, scale_ref, shift_ref, o_ref, *, relu):
    """Folded BatchNorm affine (+ optional ReLU): o = act(y * scale + shift). f32 epilogue."""
    out = y_ref[...] * scale_ref[...] + shift_ref[...]
    if relu:
        out = jnp.maximum(out, 0.0)
    o_ref[...] = out.astype(o_ref.dtype)


def _bn_add_relu_kernel(y_ref, r_ref, sy_ref, shy_ref, sr_ref, shr_ref, o_ref):
    """o = relu(BN(y) + BN(residual)) with both BNs pre-folded into scale/shift vectors."""
    main = y_ref[...] * sy_ref[...] + shy_ref[...]
    res = r_ref[...] * sr_ref[...] + shr_ref[...]
    o_ref[...] = jnp.maximum(main + res, 0.0).astype(o_ref.dtype)


# --------------------------- pallas_call wrappers -----------------------------
def conv_matmul_with_stats(g, w, *, tile_n):
    """g: [N_pad, Kc] bf16, w: [Kc, Cp] bf16 -> (y [N_pad, Cp] f32, stats [nt, 8, Cp] f32)."""
    n_p, kc = g.shape
    cp = w.shape[1]
    nt = n_p // tile_n
    return pl.pallas_call(
        _matmul_stats_kernel,
        out_shape=(jax.ShapeDtypeStruct((n_p, cp), jnp.float32),
                   jax.ShapeDtypeStruct((nt, 8, cp), jnp.float32)),
        grid_spec=pltpu.PrefetchScalarGridSpec(
            num_scalar_prefetch=0,
            grid=(nt,),
            in_specs=[pl.BlockSpec((tile_n, kc), lambda i: (i, 0)),
                      pl.BlockSpec((kc, cp), lambda i: (0, 0))],
            out_specs=[pl.BlockSpec((tile_n, cp), lambda i: (i, 0)),
                       pl.BlockSpec((1, 8, cp), lambda i: (i, 0, 0))],
        ),
        compiler_params=pltpu.CompilerParams(dimension_semantics=("parallel",)),
    )(g, w)


def bn_act(y, scale, shift, *, relu, out_dtype, tile_n):
    n_p, cp = y.shape
    nt = n_p // tile_n
    kernel = functools.partial(_bn_act_kernel, relu=relu)
    return pl.pallas_call(
        kernel,
        out_shape=jax.ShapeDtypeStruct((n_p, cp), out_dtype),
        grid_spec=pltpu.PrefetchScalarGridSpec(
            num_scalar_prefetch=0,
            grid=(nt,),
            in_specs=[pl.BlockSpec((tile_n, cp), lambda i: (i, 0)),
                      pl.BlockSpec((1, cp), lambda i: (0, 0)),
                      pl.BlockSpec((1, cp), lambda i: (0, 0))],
            out_specs=pl.BlockSpec((tile_n, cp), lambda i: (i, 0)),
        ),
        compiler_params=pltpu.CompilerParams(dimension_semantics=("parallel",)),
    )(y, scale, shift)


def bn_add_relu(y, res, sy, shy, sr, shr, *, tile_n):
    n_p, cp = y.shape
    nt = n_p // tile_n
    return pl.pallas_call(
        _bn_add_relu_kernel,
        out_shape=jax.ShapeDtypeStruct((n_p, cp), jnp.float32),
        grid_spec=pltpu.PrefetchScalarGridSpec(
            num_scalar_prefetch=0,
            grid=(nt,),
            in_specs=[pl.BlockSpec((tile_n, cp), lambda i: (i, 0)),
                      pl.BlockSpec((tile_n, cp), lambda i: (i, 0)),
                      pl.BlockSpec((1, cp), lambda i: (0, 0)),
                      pl.BlockSpec((1, cp), lambda i: (0, 0)),
                      pl.BlockSpec((1, cp), lambda i: (0, 0)),
                      pl.BlockSpec((1, cp), lambda i: (0, 0))],
            out_specs=pl.BlockSpec((tile_n, cp), lambda i: (i, 0)),
        ),
        compiler_params=pltpu.CompilerParams(dimension_semantics=("parallel",)),
    )(y, res, sy, shy, sr, shr)


# ------------------------------ JAX glue --------------------------------------
def kernel_offsets(ks):
    r = ks // 2
    offs = [(dz, dy, dx)
            for dz in range(-r, r + 1)
            for dy in range(-r, r + 1)
            for dx in range(-r, r + 1)]
    return jnp.array(offs, dtype=jnp.int32)                       # [K, 3]


def build_rulebook(coords, ks, dilation, spatial_bound):
    """Sort/searchsorted neighbor lookup.  idx[k, i] = row j with coords[j] == coords[i] + off_k*dil,
    or N (sentinel -> zero row) if no such point exists."""
    n = coords.shape[0]
    r = ks // 2
    offs = kernel_offsets(ks)
    shift = r * dilation
    bound = spatial_bound + 2 * shift

    def key_of(c):
        return (c[..., 0] * bound + c[..., 1]) * bound + c[..., 2]

    keys = key_of(coords + shift)
    order = jnp.argsort(keys)
    sorted_keys = keys[order]

    def one_offset(off):
        tgt = key_of(coords + off * dilation + shift)
        pos = jnp.clip(jnp.searchsorted(sorted_keys, tgt), 0, n - 1)
        found = sorted_keys[pos] == tgt
        return jnp.where(found, order[pos], n)

    return jax.vmap(one_offset)(offs)                             # [K, N] int32


def gather_fold(feats, rulebook, n_pad, kc_pad):
    """[N, Cin] -> gathered/folded [n_pad, kc_pad] bf16 (zeros where no neighbor / padding)."""
    n, cin = feats.shape
    k = rulebook.shape[0]
    f_ext = jnp.concatenate([feats, jnp.zeros((1, cin), feats.dtype)], axis=0)
    g = f_ext[rulebook.T].reshape(n, k * cin)
    g = jnp.pad(g, ((0, n_pad - n), (0, kc_pad - k * cin)))
    return g.astype(jnp.bfloat16)


def fold_weight(w, kc_pad, cp):
    k, cin, cout = w.shape
    wf = jnp.pad(w.reshape(k * cin, cout), ((0, kc_pad - k * cin), (0, cp - cout)))
    return wf.astype(jnp.bfloat16)


def bn_fold(stats, gamma, beta, n_valid, cp, eps):
    """Fold biased batch stats + affine into scale/shift channel vectors ([1, Cp] each)."""
    s = jnp.sum(stats, axis=0)                                    # [8, Cp]
    mean = s[0] / n_valid
    var = jnp.maximum(s[1] / n_valid - mean * mean, 0.0)
    gamma_p = jnp.pad(gamma.reshape(-1), (0, cp - gamma.size))
    beta_p = jnp.pad(beta.reshape(-1), (0, cp - beta.size))
    scale = gamma_p * jax.lax.rsqrt(var + eps)
    shift = beta_p - mean * scale
    return scale[None, :], shift[None, :]


def sparse_residual_block_pallas(coords, feats, params, *, ks=3, stride=1, dilation=1,
                                 spatial_bound=16, eps=1e-5, tile_n=128):
    if stride != 1:
        # TODO(synk): stride > 1 requires building a downsampled output coordinate set.
        raise NotImplementedError("stride > 1 sparse conv not implemented")
    n, inc = feats.shape
    w1, g1, b1 = params["w1"], params["g1"], params["b1"]
    w2, g2, b2 = params["w2"], params["g2"], params["b2"]
    k, outc = w1.shape[0], w1.shape[-1]
    cp = _round_up(outc, LANE)
    n_pad = _round_up(n, tile_n)

    rulebook = build_rulebook(coords, ks, dilation, spatial_bound)

    # ---- conv1 (ks^3, inc -> outc) + BN1 + ReLU ------------------------------
    kc1 = _round_up(k * inc, LANE)
    y1, st1 = conv_matmul_with_stats(gather_fold(feats, rulebook, n_pad, kc1),
                                     fold_weight(w1, kc1, cp), tile_n=tile_n)
    sc1, sh1 = bn_fold(st1, g1, b1, n, cp, eps)
    z1 = bn_act(y1, sc1, sh1, relu=True, out_dtype=jnp.bfloat16, tile_n=tile_n)
    z1 = z1[:n, :outc]                       # drop row/channel padding before re-gather

    # ---- conv2 (ks^3, outc -> outc) + BN2 ------------------------------------
    kc2 = _round_up(k * outc, LANE)
    y2, st2 = conv_matmul_with_stats(gather_fold(z1, rulebook, n_pad, kc2),
                                     fold_weight(w2, kc2, cp), tile_n=tile_n)
    sc2, sh2 = bn_fold(st2, g2, b2, n, cp, eps)

    # ---- downsample path -----------------------------------------------------
    if inc == outc and stride == 1:
        res = jnp.pad(feats.astype(jnp.float32), ((0, n_pad - n), (0, cp - inc)))
        scd = jnp.ones((1, cp), jnp.float32)
        shd = jnp.zeros((1, cp), jnp.float32)
    else:
        wd, gd, bd = params["wd"], params["gd"], params["bd"]
        kcd = _round_up(inc, LANE)
        g_d = jnp.pad(feats, ((0, n_pad - n), (0, kcd - inc))).astype(jnp.bfloat16)
        res, std = conv_matmul_with_stats(g_d, fold_weight(wd, kcd, cp), tile_n=tile_n)
        scd, shd = bn_fold(std, gd, bd, n, cp, eps)

    # ---- out = ReLU(BN2(conv2) + BN_d(downsample)) ---------------------------
    out = bn_add_relu(y2, res, sc2, sh2, scd, shd, tile_n=tile_n)
    return out[:n, :outc]


# ------------------------------ reference -------------------------------------
def reference_forward(coords, feats, params, *, ks, dilation, spatial_bound, eps=1e-5):
    """Plain-JAX forward mirroring the kernel's precision choices (bf16 matmul operands)."""
    n = feats.shape[0]
    rulebook = build_rulebook(coords, ks, dilation, spatial_bound)

    def conv(f, w):
        kk, cin, cout = w.shape
        if kk == 1:
            g = f
        else:
            f_ext = jnp.concatenate([f, jnp.zeros((1, cin), f.dtype)], axis=0)
            g = f_ext[rulebook.T].reshape(n, kk * cin)
        return jnp.dot(g.astype(jnp.bfloat16), w.reshape(kk * cin, cout).astype(jnp.bfloat16),
                       preferred_element_type=jnp.float32)

    def bn(y, gamma, beta):
        mean = jnp.mean(y, axis=0, keepdims=True)
        var = jnp.maximum(jnp.mean(y * y, axis=0, keepdims=True) - mean * mean, 0.0)
        return (y - mean) * jax.lax.rsqrt(var + eps) * gamma[None, :] + beta[None, :]

    z1 = jnp.maximum(bn(conv(feats, params["w1"]), params["g1"], params["b1"]), 0.0)
    z1 = z1.astype(jnp.bfloat16).astype(jnp.float32)   # kernel stores the ReLU output as bf16
    z2 = bn(conv(z1, params["w2"]), params["g2"], params["b2"])
    inc, outc = feats.shape[1], params["w1"].shape[-1]
    if inc == outc:
        zd = feats
    else:
        zd = bn(conv(feats, params["wd"]), params["gd"], params["bd"])
    return jnp.maximum(z2 + zd, 0.0)


# -------------------------------- main -----------------------------------------
if __name__ == "__main__":
    key = jax.random.PRNGKey(0)
    keys = jax.random.split(key, 11)
    (k_coord, k_feat, kw1, kg1, kb1, kw2, kg2, kb2, kwd, kgd, kbd) = keys

    # SparseResidualBlock(inc=16, outc=32, ks=3, stride=1, dilation=1) -> downsample path active
    inc, outc, ks, stride, dilation = 16, 32, 3, 1, 1
    n, spatial = 256, 16
    k = ks ** 3

    flat = jax.random.permutation(k_coord, spatial ** 3)[:n]
    coords = jnp.stack([flat // (spatial * spatial), (flat // spatial) % spatial, flat % spatial],
                       axis=-1).astype(jnp.int32)
    feats = jax.random.normal(k_feat, (n, inc), dtype=jnp.float32)

    params = dict(
        w1=0.1 * jax.random.normal(kw1, (k, inc, outc), jnp.float32),
        g1=1.0 + 0.1 * jax.random.normal(kg1, (outc,), jnp.float32),
        b1=0.1 * jax.random.normal(kb1, (outc,), jnp.float32),
        w2=0.1 * jax.random.normal(kw2, (k, outc, outc), jnp.float32),
        g2=1.0 + 0.1 * jax.random.normal(kg2, (outc,), jnp.float32),
        b2=0.1 * jax.random.normal(kb2, (outc,), jnp.float32),
        wd=0.1 * jax.random.normal(kwd, (1, inc, outc), jnp.float32),
        gd=1.0 + 0.1 * jax.random.normal(kgd, (outc,), jnp.float32),
        bd=0.1 * jax.random.normal(kbd, (outc,), jnp.float32),
    )

    block_fn = jax.jit(functools.partial(
        sparse_residual_block_pallas, ks=ks, stride=stride, dilation=dilation,
        spatial_bound=spatial, eps=1e-5, tile_n=128))

    out = jax.block_until_ready(block_fn(coords, feats, params))

    ref = reference_forward(coords, feats, params, ks=ks, dilation=dilation,
                            spatial_bound=spatial)
    assert out.shape == (n, outc)
    err = jnp.max(jnp.abs(out - ref))
    assert jnp.allclose(out, ref, rtol=1e-2, atol=1e-2), f"max err {err}"
    print("KERNEL_OK")
</pallas_src>

<mosaic_0001>
module attributes {stable_mosaic.version = 11 : i64} {
  func.func @_matmul_stats_kernel(%arg0: i32, %arg1: memref<128x512xbf16, #tpu.memory_space<vmem>>, %arg2: memref<512x128xbf16, #tpu.memory_space<vmem>>, %arg3: memref<128x128xf32, #tpu.memory_space<vmem>>, %arg4: memref<1x8x128xf32, #tpu.memory_space<vmem>>) attributes {dimension_semantics = [#tpu.dimension_semantics<parallel>], iteration_bounds = array<i64: 2>, scalar_prefetch = 0 : i64, scratch_operands = 0 : i64, tpu.core_type = #tpu.core_type<tc>, window_params = [{transform_indices = @transform_0, window_bounds = array<i64: 128, 512>}, {pipeline_mode = #tpu.pipeline_mode<synchronous>, transform_indices = @transform_1, window_bounds = array<i64: 512, 128>}, {transform_indices = @transform_2, window_bounds = array<i64: 128, 128>}, {transform_indices = @transform_3, window_bounds = array<i64: 1, 8, 128>}]} {
    %c0 = arith.constant 0 : index
    %c0_0 = arith.constant 0 : index
    %0 = vector.load %arg1[%c0, %c0_0] : memref<128x512xbf16, #tpu.memory_space<vmem>>, vector<128x512xbf16>
    %c0_1 = arith.constant 0 : index
    %c0_2 = arith.constant 0 : index
    %1 = vector.load %arg2[%c0_1, %c0_2] : memref<512x128xbf16, #tpu.memory_space<vmem>>, vector<512x128xbf16>
    %cst = arith.constant dense<0.000000e+00> : vector<128x128xf32>
    %2 = tpu.matmul %0, %1, %cst {dimension_numbers = #tpu.dot_dimension_numbers<[1], [0], [0], [1], [0, 0, 1, 1], [], []>} : vector<128x512xbf16>, vector<512x128xbf16>, vector<128x128xf32> -> vector<128x128xf32>
    %c0_3 = arith.constant 0 : index
    %c0_4 = arith.constant 0 : index
    %3 = vector.load %arg3[%c0_3, %c0_4] : memref<128x128xf32, #tpu.memory_space<vmem>>, vector<128x128xf32>
    tpu.vector_store %arg3[%c0_3, %c0_4], %2 {strides = array<i32>} : memref<128x128xf32, #tpu.memory_space<vmem>>, vector<128x128xf32>,
    %cst_5 = arith.constant dense<0.000000e+00> : vector<128xf32>
    %4 = vector.multi_reduction <add>, %2, %cst_5 [0] : vector<128x128xf32> to vector<128xf32>
    %5 = vector.shape_cast %4 : vector<128xf32> to vector<1x128xf32>
    %6 = arith.mulf %2, %2 : vector<128x128xf32>
    %cst_6 = arith.constant dense<0.000000e+00> : vector<128xf32>
    %7 = vector.multi_reduction <add>, %6, %cst_6 [0] : vector<128x128xf32> to vector<128xf32>
    %8 = vector.shape_cast %7 : vector<128xf32> to vector<1x128xf32>
    %9 = tpu.iota {dimensions = array<i32: 0>} : vector<8x128xi32>
    %c0_i32 = arith.constant 0 : i32
    %10 = vector.broadcast %c0_i32 : i32 to vector<8x128xi32>
    %11 = arith.cmpi eq, %9, %10 : vector<8x128xi32>
    %c1_i32 = arith.constant 1 : i32
    %12 = vector.broadcast %c1_i32 : i32 to vector<8x128xi32>
    %13 = arith.cmpi eq, %9, %12 : vector<8x128xi32>
    %cst_7 = arith.constant 0.000000e+00 : f32
    %14 = vector.shape_cast %8 : vector<1x128xf32> to vector<1x128xf32>
    %15 = vector.broadcast %14 : vector<1x128xf32> to vector<8x128xf32>
    %16 = vector.broadcast %cst_7 : f32 to vector<8x128xf32>
    %17 = arith.select %13, %15, %16 : vector<8x128xi1>, vector<8x128xf32>
    %18 = vector.shape_cast %5 : vector<1x128xf32> to vector<1x128xf32>
    %19 = vector.broadcast %18 : vector<1x128xf32> to vector<8x128xf32>
    %20 = arith.select %11, %19, %17 : vector<8x128xi1>, vector<8x128xf32>
    %c0_8 = arith.constant 0 : index
    %c0_9 = arith.constant 0 : index
    %c0_10 = arith.constant 0 : index
    %21 = vector.load %arg4[%c0_8, %c0_9, %c0_10] : memref<1x8x128xf32, #tpu.memory_space<vmem>>, vector<1x8x128xf32>
    %22 = vector.shape_cast %21 : vector<1x8x128xf32> to vector<8x128xf32>
    %23 = vector.shape_cast %20 : vector<8x128xf32> to vector<1x8x128xf32>
    tpu.vector_store %arg4[%c0_8, %c0_9, %c0_10], %23 {strides = array<i32>} : memref<1x8x128xf32, #tpu.memory_space<vmem>>, vector<1x8x128xf32>,
    return
  }
  func.func @transform_0(%arg0: i32) -> (i32, i32) {
    %c0_i32 = arith.constant 0 : i32
    %c0_i32_0 = arith.constant 0 : i32
    return %arg0, %c0_i32 : i32, i32
  }
  func.func @transform_1(%arg0: i32) -> (i32, i32) {
    %c0_i32 = arith.constant 0 : i32
    %c0_i32_0 = arith.constant 0 : i32
    %c0_i32_1 = arith.constant 0 : i32
    return %c0_i32, %c0_i32_0 : i32, i32
  }
  func.func @transform_2(%arg0: i32) -> (i32, i32) {
    %c0_i32 = arith.constant 0 : i32
    %c0_i32_0 = arith.constant 0 : i32
    return %arg0, %c0_i32 : i32, i32
  }
  func.func @transform_3(%arg0: i32) -> (i32, i32, i32) {
    %c0_i32 = arith.constant 0 : i32
    %c0_i32_0 = arith.constant 0 : i32
    %c0_i32_1 = arith.constant 0 : i32
    return %arg0, %c0_i32, %c0_i32_0 : i32, i32, i32
  }
}

module attributes {stable_mosaic.version = 11 : i64} {
  func.func @_bn_act_kernel(%arg0: i32, %arg1: memref<128x128xf32, #tpu.memory_space<vmem>>, %arg2: memref<1x128xf32, #tpu.memory_space<vmem>>, %arg3: memref<1x128xf32, #tpu.memory_space<vmem>>, %arg4: memref<128x128xbf16, #tpu.memory_space<vmem>>) attributes {dimension_semantics = [#tpu.dimension_semantics<parallel>], iteration_bounds = array<i64: 2>, scalar_prefetch = 0 : i64, scratch_operands = 0 : i64, tpu.core_type = #tpu.core_type<tc>, window_params = [{transform_indices = @transform_0, window_bounds = array<i64: 128, 128>}, {pipeline_mode = #tpu.pipeline_mode<synchronous>, transform_indices = @transform_1, window_bounds = array<i64: 1, 128>}, {pipeline_mode = #tpu.pipeline_mode<synchronous>, transform_indices = @transform_2, window_bounds = array<i64: 1, 128>}, {transform_indices = @transform_3, window_bounds = array<i64: 128, 128>}]} {
    %c0 = arith.constant 0 : index
    %c0_0 = arith.constant 0 : index
    %0 = vector.load %arg1[%c0, %c0_0] : memref<128x128xf32, #tpu.memory_space<vmem>>, vector<128x128xf32>
    %c0_1 = arith.constant 0 : index
    %c0_2 = arith.constant 0 : index
    %1 = vector.load %arg2[%c0_1, %c0_2] : memref<1x128xf32, #tpu.memory_space<vmem>>, vector<1x128xf32>
    %2 = vector.broadcast %1 : vector<1x128xf32> to vector<128x128xf32>
    %3 = arith.mulf %0, %2 : vector<128x128xf32>
    %c0_3 = arith.constant 0 : index
    %c0_4 = arith.constant 0 : index
    %4 = vector.load %arg3[%c0_3, %c0_4] : memref<1x128xf32, #tpu.memory_space<vmem>>, vector<1x128xf32>
    %5 = vector.broadcast %4 : vector<1x128xf32> to vector<128x128xf32>
    %6 = arith.addf %3, %5 : vector<128x128xf32>
    %cst = arith.constant 0.000000e+00 : f32
    %7 = vector.broadcast %cst : f32 to vector<128x128xf32>
    %8 = arith.maximumf %6, %7 : vector<128x128xf32>
    %9 = arith.truncf %8 : vector<128x128xf32> to vector<128x128xbf16>
    %c0_5 = arith.constant 0 : index
    %c0_6 = arith.constant 0 : index
    %10 = vector.load %arg4[%c0_5, %c0_6] : memref<128x128xbf16, #tpu.memory_space<vmem>>, vector<128x128xbf16>
    tpu.vector_store %arg4[%c0_5, %c0_6], %9 {strides = array<i32>} : memref<128x128xbf16, #tpu.memory_space<vmem>>, vector<128x128xbf16>,
    return
  }
  func.func @transform_0(%arg0: i32) -> (i32, i32) {
    %c0_i32 = arith.constant 0 : i32
    %c0_i32_0 = arith.constant 0 : i32
    return %arg0, %c0_i32 : i32, i32
  }
  func.func @transform_1(%arg0: i32) -> (i32, i32) {
    %c0_i32 = arith.constant 0 : i32
    %c0_i32_0 = arith.constant 0 : i32
    %c0_i32_1 = arith.constant 0 : i32
    return %c0_i32, %c0_i32_0 : i32, i32
  }
  func.func @transform_2(%arg0: i32) -> (i32, i32) {
    %c0_i32 = arith.constant 0 : i32
    %c0_i32_0 = arith.constant 0 : i32
    %c0_i32_1 = arith.constant 0 : i32
    return %c0_i32, %c0_i32_0 : i32, i32
  }
  func.func @transform_3(%arg0: i32) -> (i32, i32) {
    %c0_i32 = arith.constant 0 : i32
    %c0_i32_0 = arith.constant 0 : i32
    return %arg0, %c0_i32 : i32, i32
  }
}

module attributes {stable_mosaic.version = 11 : i64} {
  func.func @_matmul_stats_kernel(%arg0: i32, %arg1: memref<128x896xbf16, #tpu.memory_space<vmem>>, %arg2: memref<896x128xbf16, #tpu.memory_space<vmem>>, %arg3: memref<128x128xf32, #tpu.memory_space<vmem>>, %arg4: memref<1x8x128xf32, #tpu.memory_space<vmem>>) attributes {dimension_semantics = [#tpu.dimension_semantics<parallel>], iteration_bounds = array<i64: 2>, scalar_prefetch = 0 : i64, scratch_operands = 0 : i64, tpu.core_type = #tpu.core_type<tc>, window_params = [{transform_indices = @transform_0, window_bounds = array<i64: 128, 896>}, {pipeline_mode = #tpu.pipeline_mode<synchronous>, transform_indices = @transform_1, window_bounds = array<i64: 896, 128>}, {transform_indices = @transform_2, window_bounds = array<i64: 128, 128>}, {transform_indices = @transform_3, window_bounds = array<i64: 1, 8, 128>}]} {
    %c0 = arith.constant 0 : index
    %c0_0 = arith.constant 0 : index
    %0 = vector.load %arg1[%c0, %c0_0] : memref<128x896xbf16, #tpu.memory_space<vmem>>, vector<128x896xbf16>
    %c0_1 = arith.constant 0 : index
    %c0_2 = arith.constant 0 : index
    %1 = vector.load %arg2[%c0_1, %c0_2] : memref<896x128xbf16, #tpu.memory_space<vmem>>, vector<896x128xbf16>
    %cst = arith.constant dense<0.000000e+00> : vector<128x128xf32>
    %2 = tpu.matmul %0, %1, %cst {dimension_numbers = #tpu.dot_dimension_numbers<[1], [0], [0], [1], [0, 0, 1, 1], [], []>} : vector<128x896xbf16>, vector<896x128xbf16>, vector<128x128xf32> -> vector<128x128xf32>
    %c0_3 = arith.constant 0 : index
    %c0_4 = arith.constant 0 : index
    %3 = vector.load %arg3[%c0_3, %c0_4] : memref<128x128xf32, #tpu.memory_space<vmem>>, vector<128x128xf32>
    tpu.vector_store %arg3[%c0_3, %c0_4], %2 {strides = array<i32>} : memref<128x128xf32, #tpu.memory_space<vmem>>, vector<128x128xf32>,
    %cst_5 = arith.constant dense<0.000000e+00> : vector<128xf32>
    %4 = vector.multi_reduction <add>, %2, %cst_5 [0] : vector<128x128xf32> to vector<128xf32>
    %5 = vector.shape_cast %4 : vector<128xf32> to vector<1x128xf32>
    %6 = arith.mulf %2, %2 : vector<128x128xf32>
    %cst_6 = arith.constant dense<0.000000e+00> : vector<128xf32>
    %7 = vector.multi_reduction <add>, %6, %cst_6 [0] : vector<128x128xf32> to vector<128xf32>
    %8 = vector.shape_cast %7 : vector<128xf32> to vector<1x128xf32>
    %9 = tpu.iota {dimensions = array<i32: 0>} : vector<8x128xi32>
    %c0_i32 = arith.constant 0 : i32
    %10 = vector.broadcast %c0_i32 : i32 to vector<8x128xi32>
    %11 = arith.cmpi eq, %9, %10 : vector<8x128xi32>
    %c1_i32 = arith.constant 1 : i32
    %12 = vector.broadcast %c1_i32 : i32 to vector<8x128xi32>
    %13 = arith.cmpi eq, %9, %12 : vector<8x128xi32>
    %cst_7 = arith.constant 0.000000e+00 : f32
    %14 = vector.shape_cast %8 : vector<1x128xf32> to vector<1x128xf32>
    %15 = vector.broadcast %14 : vector<1x128xf32> to vector<8x128xf32>
    %16 = vector.broadcast %cst_7 : f32 to vector<8x128xf32>
    %17 = arith.select %13, %15, %16 : vector<8x128xi1>, vector<8x128xf32>
    %18 = vector.shape_cast %5 : vector<1x128xf32> to vector<1x128xf32>
    %19 = vector.broadcast %18 : vector<1x128xf32> to vector<8x128xf32>
    %20 = arith.select %11, %19, %17 : vector<8x128xi1>, vector<8x128xf32>
    %c0_8 = arith.constant 0 : index
    %c0_9 = arith.constant 0 : index
    %c0_10 = arith.constant 0 : index
    %21 = vector.load %arg4[%c0_8, %c0_9, %c0_10] : memref<1x8x128xf32, #tpu.memory_space<vmem>>, vector<1x8x128xf32>
    %22 = vector.shape_cast %21 : vector<1x8x128xf32> to vector<8x128xf32>
    %23 = vector.shape_cast %20 : vector<8x128xf32> to vector<1x8x128xf32>
    tpu.vector_store %arg4[%c0_8, %c0_9, %c0_10], %23 {strides = array<i32>} : memref<1x8x128xf32, #tpu.memory_space<vmem>>, vector<1x8x128xf32>,
    return
  }
  func.func @transform_0(%arg0: i32) -> (i32, i32) {
    %c0_i32 = arith.constant 0 : i32
    %c0_i32_0 = arith.constant 0 : i32
    return %arg0, %c0_i32 : i32, i32
  }
  func.func @transform_1(%arg0: i32) -> (i32, i32) {
    %c0_i32 = arith.constant 0 : i32
    %c0_i32_0 = arith.constant 0 : i32
    %c0_i32_1 = arith.constant 0 : i32
    return %c0_i32, %c0_i32_0 : i32, i32
  }
  func.func @transform_2(%arg0: i32) -> (i32, i32) {
    %c0_i32 = arith.constant 0 : i32
    %c0_i32_0 = arith.constant 0 : i32
    return %arg0, %c0_i32 : i32, i32
  }
  func.func @transform_3(%arg0: i32) -> (i32, i32, i32) {
    %c0_i32 = arith.constant 0 : i32
    %c0_i32_0 = arith.constant 0 : i32
    %c0_i32_1 = arith.constant 0 : i32
    return %arg0, %c0_i32, %c0_i32_0 : i32, i32, i32
  }
}

module attributes {stable_mosaic.version = 11 : i64} {
  func.func @_matmul_stats_kernel(%arg0: i32, %arg1: memref<128x128xbf16, #tpu.memory_space<vmem>>, %arg2: memref<128x128xbf16, #tpu.memory_space<vmem>>, %arg3: memref<128x128xf32, #tpu.memory_space<vmem>>, %arg4: memref<1x8x128xf32, #tpu.memory_space<vmem>>) attributes {dimension_semantics = [#tpu.dimension_semantics<parallel>], iteration_bounds = array<i64: 2>, scalar_prefetch = 0 : i64, scratch_operands = 0 : i64, tpu.core_type = #tpu.core_type<tc>, window_params = [{transform_indices = @transform_0, window_bounds = array<i64: 128, 128>}, {pipeline_mode = #tpu.pipeline_mode<synchronous>, transform_indices = @transform_1, window_bounds = array<i64: 128, 128>}, {transform_indices = @transform_2, window_bounds = array<i64: 128, 128>}, {transform_indices = @transform_3, window_bounds = array<i64: 1, 8, 128>}]} {
    %c0 = arith.constant 0 : index
    %c0_0 = arith.constant 0 : index
    %0 = vector.load %arg1[%c0, %c0_0] : memref<128x128xbf16, #tpu.memory_space<vmem>>, vector<128x128xbf16>
    %c0_1 = arith.constant 0 : index
    %c0_2 = arith.constant 0 : index
    %1 = vector.load %arg2[%c0_1, %c0_2] : memref<128x128xbf16, #tpu.memory_space<vmem>>, vector<128x128xbf16>
    %cst = arith.constant dense<0.000000e+00> : vector<128x128xf32>
    %2 = tpu.matmul %0, %1, %cst {dimension_numbers = #tpu.dot_dimension_numbers<[1], [0], [0], [1], [0, 0, 1, 1], [], []>} : vector<128x128xbf16>, vector<128x128xbf16>, vector<128x128xf32> -> vector<128x128xf32>
    %c0_3 = arith.constant 0 : index
    %c0_4 = arith.constant 0 : index
    %3 = vector.load %arg3[%c0_3, %c0_4] : memref<128x128xf32, #tpu.memory_space<vmem>>, vector<128x128xf32>
    tpu.vector_store %arg3[%c0_3, %c0_4], %2 {strides = array<i32>} : memref<128x128xf32, #tpu.memory_space<vmem>>, vector<128x128xf32>,
    %cst_5 = arith.constant dense<0.000000e+00> : vector<128xf32>
    %4 = vector.multi_reduction <add>, %2, %cst_5 [0] : vector<128x128xf32> to vector<128xf32>
    %5 = vector.shape_cast %4 : vector<128xf32> to vector<1x128xf32>
    %6 = arith.mulf %2, %2 : vector<128x128xf32>
    %cst_6 = arith.constant dense<0.000000e+00> : vector<128xf32>
    %7 = vector.multi_reduction <add>, %6, %cst_6 [0] : vector<128x128xf32> to vector<128xf32>
    %8 = vector.shape_cast %7 : vector<128xf32> to vector<1x128xf32>
    %9 = tpu.iota {dimensions = array<i32: 0>} : vector<8x128xi32>
    %c0_i32 = arith.constant 0 : i32
    %10 = vector.broadcast %c0_i32 : i32 to vector<8x128xi32>
    %11 = arith.cmpi eq, %9, %10 : vector<8x128xi32>
    %c1_i32 = arith.constant 1 : i32
    %12 = vector.broadcast %c1_i32 : i32 to vector<8x128xi32>
    %13 = arith.cmpi eq, %9, %12 : vector<8x128xi32>
    %cst_7 = arith.constant 0.000000e+00 : f32
    %14 = vector.shape_cast %8 : vector<1x128xf32> to vector<1x128xf32>
    %15 = vector.broadcast %14 : vector<1x128xf32> to vector<8x128xf32>
    %16 = vector.broadcast %cst_7 : f32 to vector<8x128xf32>
    %17 = arith.select %13, %15, %16 : vector<8x128xi1>, vector<8x128xf32>
    %18 = vector.shape_cast %5 : vector<1x128xf32> to vector<1x128xf32>
    %19 = vector.broadcast %18 : vector<1x128xf32> to vector<8x128xf32>
    %20 = arith.select %11, %19, %17 : vector<8x128xi1>, vector<8x128xf32>
    %c0_8 = arith.constant 0 : index
    %c0_9 = arith.constant 0 : index
    %c0_10 = arith.constant 0 : index
    %21 = vector.load %arg4[%c0_8, %c0_9, %c0_10] : memref<1x8x128xf32, #tpu.memory_space<vmem>>, vector<1x8x128xf32>
    %22 = vector.shape_cast %21 : vector<1x8x128xf32> to vector<8x128xf32>
    %23 = vector.shape_cast %20 : vector<8x128xf32> to vector<1x8x128xf32>
    tpu.vector_store %arg4[%c0_8, %c0_9, %c0_10], %23 {strides = array<i32>} : memref<1x8x128xf32, #tpu.memory_space<vmem>>, vector<1x8x128xf32>,
    return
  }
  func.func @transform_0(%arg0: i32) -> (i32, i32) {
    %c0_i32 = arith.constant 0 : i32
    %c0_i32_0 = arith.constant 0 : i32
    return %arg0, %c0_i32 : i32, i32
  }
  func.func @transform_1(%arg0: i32) -> (i32, i32) {
    %c0_i32 = arith.constant 0 : i32
    %c0_i32_0 = arith.constant 0 : i32
    %c0_i32_1 = arith.constant 0 : i32
    return %c0_i32, %c0_i32_0 : i32, i32
  }
  func.func @transform_2(%arg0: i32) -> (i32, i32) {
    %c0_i32 = arith.constant 0 : i32
    %c0_i32_0 = arith.constant 0 : i32
    return %arg0, %c0_i32 : i32, i32
  }
  func.func @transform_3(%arg0: i32) -> (i32, i32, i32) {
    %c0_i32 = arith.constant 0 : i32
    %c0_i32_0 = arith.constant 0 : i32
    %c0_i32_1 = arith.constant 0 : i32
    return %arg0, %c0_i32, %c0_i32_0 : i32, i32, i32
  }
}

module attributes {stable_mosaic.version = 11 : i64} {
  func.func @_bn_add_relu_kernel(%arg0: i32, %arg1: memref<128x128xf32, #tpu.memory_space<vmem>>, %arg2: memref<128x128xf32, #tpu.memory_space<vmem>>, %arg3: memref<1x128xf32, #tpu.memory_space<vmem>>, %arg4: memref<1x128xf32, #tpu.memory_space<vmem>>, %arg5: memref<1x128xf32, #tpu.memory_space<vmem>>, %arg6: memref<1x128xf32, #tpu.memory_space<vmem>>, %arg7: memref<128x128xf32, #tpu.memory_space<vmem>>) attributes {dimension_semantics = [#tpu.dimension_semantics<parallel>], iteration_bounds = array<i64: 2>, scalar_prefetch = 0 : i64, scratch_operands = 0 : i64, tpu.core_type = #tpu.core_type<tc>, window_params = [{transform_indices = @transform_0, window_bounds = array<i64: 128, 128>}, {transform_indices = @transform_1, window_bounds = array<i64: 128, 128>}, {pipeline_mode = #tpu.pipeline_mode<synchronous>, transform_indices = @transform_2, window_bounds = array<i64: 1, 128>}, {pipeline_mode = #tpu.pipeline_mode<synchronous>, transform_indices = @transform_3, window_bounds = array<i64: 1, 128>}, {pipeline_mode = #tpu.pipeline_mode<synchronous>, transform_indices = @transform_4, window_bounds = array<i64: 1, 128>}, {pipeline_mode = #tpu.pipeline_mode<synchronous>, transform_indices = @transform_5, window_bounds = array<i64: 1, 128>}, {transform_indices = @transform_6, window_bounds = array<i64: 128, 128>}]} {
    %c0 = arith.constant 0 : index
    %c0_0 = arith.constant 0 : index
    %0 = vector.load %arg1[%c0, %c0_0] : memref<128x128xf32, #tpu.memory_space<vmem>>, vector<128x128xf32>
    %c0_1 = arith.constant 0 : index
    %c0_2 = arith.constant 0 : index
    %1 = vector.load %arg3[%c0_1, %c0_2] : memref<1x128xf32, #tpu.memory_space<vmem>>, vector<1x128xf32>
    %2 = vector.broadcast %1 : vector<1x128xf32> to vector<128x128xf32>
    %3 = arith.mulf %0, %2 : vector<128x128xf32>
    %c0_3 = arith.constant 0 : index
    %c0_4 = arith.constant 0 : index
    %4 = vector.load %arg4[%c0_3, %c0_4] : memref<1x128xf32, #tpu.memory_space<vmem>>, vector<1x128xf32>
    %5 = vector.broadcast %4 : vector<1x128xf32> to vector<128x128xf32>
    %6 = arith.addf %3, %5 : vector<128x128xf32>
    %c0_5 = arith.constant 0 : index
    %c0_6 = arith.constant 0 : index
    %7 = vector.load %arg2[%c0_5, %c0_6] : memref<128x128xf32, #tpu.memory_space<vmem>>, vector<128x128xf32>
    %c0_7 = arith.constant 0 : index
    %c0_8 = arith.constant 0 : index
    %8 = vector.load %arg5[%c0_7, %c0_8] : memref<1x128xf32, #tpu.memory_space<vmem>>, vector<1x128xf32>
    %9 = vector.broadcast %8 : vector<1x128xf32> to vector<128x128xf32>
    %10 = arith.mulf %7, %9 : vector<128x128xf32>
    %c0_9 = arith.constant 0 : index
    %c0_10 = arith.constant 0 : index
    %11 = vector.load %arg6[%c0_9, %c0_10] : memref<1x128xf32, #tpu.memory_space<vmem>>, vector<1x128xf32>
    %12 = vector.broadcast %11 : vector<1x128xf32> to vector<128x128xf32>
    %13 = arith.addf %10, %12 : vector<128x128xf32>
    %14 = arith.addf %6, %13 : vector<128x128xf32>
    %cst = arith.constant 0.000000e+00 : f32
    %15 = vector.broadcast %cst : f32 to vector<128x128xf32>
    %16 = arith.maximumf %14, %15 : vector<128x128xf32>
    %c0_11 = arith.constant 0 : index
    %c0_12 = arith.constant 0 : index
    %17 = vector.load %arg7[%c0_11, %c0_12] : memref<128x128xf32, #tpu.memory_space<vmem>>, vector<128x128xf32>
    tpu.vector_store %arg7[%c0_11, %c0_12], %16 {strides = array<i32>} : memref<128x128xf32, #tpu.memory_space<vmem>>, vector<128x128xf32>,
    return
  }
  func.func @transform_0(%arg0: i32) -> (i32, i32) {
    %c0_i32 = arith.constant 0 : i32
    %c0_i32_0 = arith.constant 0 : i32
    return %arg0, %c0_i32 : i32, i32
  }
  func.func @transform_1(%arg0: i32) -> (i32, i32) {
    %c0_i32 = arith.constant 0 : i32
    %c0_i32_0 = arith.constant 0 : i32
    return %arg0, %c0_i32 : i32, i32
  }
  func.func @transform_2(%arg0: i32) -> (i32, i32) {
    %c0_i32 = arith.constant 0 : i32
    %c0_i32_0 = arith.constant 0 : i32
    %c0_i32_1 = arith.constant 0 : i32
    return %c0_i32, %c0_i32_0 : i32, i32
  }
  func.func @transform_3(%arg0: i32) -> (i32, i32) {
    %c0_i32 = arith.constant 0 : i32
    %c0_i32_0 = arith.constant 0 : i32
    %c0_i32_1 = arith.constant 0 : i32
    return %c0_i32, %c0_i32_0 : i32, i32
  }
  func.func @transform_4(%arg0: i32) -> (i32, i32) {
    %c0_i32 = arith.constant 0 : i32
    %c0_i32_0 = arith.constant 0 : i32
    %c0_i32_1 = arith.constant 0 : i32
    return %c0_i32, %c0_i32_0 : i32, i32
  }
  func.func @transform_5(%arg0: i32) -> (i32, i32) {
    %c0_i32 = arith.constant 0 : i32
    %c0_i32_0 = arith.constant 0 : i32
    %c0_i32_1 = arith.constant 0 : i32
    return %c0_i32, %c0_i32_0 : i32, i32
  }
  func.func @transform_6(%arg0: i32) -> (i32, i32) {
    %c0_i32 = arith.constant 0 : i32
    %c0_i32_0 = arith.constant 0 : i32
    return %arg0, %c0_i32 : i32, i32
  }
}

</mosaic_0001>

<llo_original>
// kernel: custom-call
$region0: #{custom-call}
  %s0 = inlined_call_operand.vmem [shape: u32[27,256], index: 0, kind: output, shape index: {}]

// kernel: squeeze.6
$region0: #{squeeze.6}
  %s0 = inlined_call_operand.vmem [shape: s32[6912], index: 0, kind: input, shape index: {}]
  %s1 = inlined_call_operand.vmem [shape: s32[27,256], index: 1, kind: output, shape index: {}]
  %v2 = vld [vmem:[%s0] sm:$0xff]
  %3 = vst [vmem:[%s1] ss:$8 sm:$0x3] %v2
  %s4 = scalar_lea.vmem %s1, 4294967281
  %5 = vst [vmem:[%s4] ss:$8 sm:$0xc] %v2
  %s6 = scalar_lea.vmem %s1, 4294967266
  %7 = vst [vmem:[%s6] ss:$8 sm:$0x30] %v2
  %s8 = scalar_lea.vmem %s1, 4294967251
  %9 = vst [vmem:[%s8] ss:$8 sm:$0xc0] %v2
  %s10 = scalar_lea.vmem %s0, 8
  %v11 = vld [vmem:[%s10] sm:$0xff]
  %s12 = scalar_lea.vmem %s1, 4
  %13 = vst [vmem:[%s12] ss:$8 sm:$0x3] %v11
  %s14 = scalar_lea.vmem %s1, 4294967285
  %15 = vst [vmem:[%s14] ss:$8 sm:$0xc] %v11
  %s16 = scalar_lea.vmem %s1, 4294967270
  %17 = vst [vmem:[%s16] ss:$8 sm:$0x30] %v11
  %s18 = scalar_lea.vmem %s1, 4294967255
  %19 = vst [vmem:[%s18] ss:$8 sm:$0xc0] %v11
  %s20 = scalar_lea.vmem %s0, 16
  %v21 = vld [vmem:[%s20] sm:$0xff]
  %s22 = scalar_lea.vmem %s1, 16
  %23 = vst [vmem:[%s22] ss:$8 sm:$0x3] %v21
  %s24 = scalar_lea.vmem %s1, 1
  %25 = vst [vmem:[%s24] ss:$8 sm:$0xc] %v21
  %s26 = scalar_lea.vmem %s1, 4294967282
  %27 = vst [vmem:[%s26] ss:$8 sm:$0x30] %v21
  %s28 = scalar_lea.vmem %s1, 4294967267
  %29 = vst [vmem:[%s28] ss:$8 sm:$0xc0] %v21
  %s30 = scalar_lea.vmem %s0, 24
  %v31 = vld [vmem:[%s30] sm:$0xff]
  %s32 = scalar_lea.vmem %s1, 20
  %33 = vst [vmem:[%s32] ss:$8 sm:$0x3] %v31
  %s34 = scalar_lea.vmem %s1, 5
  %35 = vst [vmem:[%s34] ss:$8 sm:$0xc] %v31
  %s36 = scalar_lea.vmem %s1, 4294967286
  %37 = vst [vmem:[%s36] ss:$8 sm:$0x30] %v31
  %s38 = scalar_lea.vmem %s1, 4294967271
  %39 = vst [vmem:[%s38] ss:$8 sm:$0xc0] %v31
  %s40 = scalar_lea.vmem %s0, 32
  %v41 = vld [vmem:[%s40] sm:$0xff]
  %s42 = scalar_lea.vmem %s1, 32
  %43 = vst [vmem:[%s42] ss:$8 sm:$0x3] %v41
  %s44 = scalar_lea.vmem %s1, 17
  %45 = vst [vmem:[%s44] ss:$8 sm:$0xc] %v41
  %s46 = scalar_lea.vmem %s1, 2
  %47 = vst [vmem:[%s46] ss:$8 sm:$0x30] %v41
  %s48 = scalar_lea.vmem %s1, 4294967283
  %49 = vst [vmem:[%s48] ss:$8 sm:$0xc0] %v41
  %s50 = scalar_lea.vmem %s0, 40
  %v51 = vld [vmem:[%s50] sm:$0xff]
  %s52 = scalar_lea.vmem %s1, 36
  %53 = vst [vmem:[%s52] ss:$8 sm:$0x3] %v51
  %s54 = scalar_lea.vmem %s1, 21
  %55 = vst [vmem:[%s54] ss:$8 sm:$0xc] %v51
  %s56 = scalar_lea.vmem %s1, 6
  %57 = vst [vmem:[%s56] ss:$8 sm:$0x30] %v51
  %s58 = scalar_lea.vmem %s1, 4294967287
  %59 = vst [vmem:[%s58] ss:$8 sm:$0xc0] %v51
  %s60 = scalar_lea.vmem %s0, 48
  %v61 = vld [vmem:[%s60] sm:$0x3f]
  %s62 = scalar_lea.vmem %s1, 48
  %63 = vst [vmem:[%s62] ss:$8 sm:$0x3] %v61
  %s64 = scalar_lea.vmem %s1, 33
  %65 = vst [vmem:[%s64] ss:$8 sm:$0xc] %v61
  %s66 = scalar_lea.vmem %s1, 18
  %67 = vst [vmem:[%s66] ss:$8 sm:$0x30] %v61

// kernel: sparse_residual_block_pallas.6
$region0: #{sparse_residual_block_pallas.6}
  #allocation0 [shape = 'u32[]', space=smem, size = 0x4, offset = 0x4, fixed_abs, tag = 'smem constant byte address 0x4 - core index']
  #allocation1 [shape = 'u32[144,128]{1,0:T(1,128)}', space=vmem, size = 0x12000, scoped, tag = 'internal scratch']
  %s0 = inlined_call_operand.vmem [shape: f32[256,128], index: 0, kind: input, shape index: {}]
  %s1 = inlined_call_operand.vmem [shape: f32[1,128], index: 1, kind: input, shape index: {}]
  %s2 = inlined_call_operand.vmem [shape: f32[1,128], index: 2, kind: input, shape index: {}]
  %s3 = inlined_call_operand.vmem [shape: bf16[256,128], index: 3, kind: output, shape index: {}]
  %s4 = sld [smem:[#allocation0]]
  $region45: #{sparse_residual_block_pallas.6} parent=0
    _
  %s6 = ssub.s32 1, %s4
  %s7 = scalar_select 0, %s6, %s4
  loop: start=0, step=1, limit=4
  $region2: #{sparse_residual_block_pallas.6} parent=0 // loop_pre_header
    _
  $region3: #{sparse_residual_block_pallas.6} parent=0 // loop_header
    %s9 = sphi 0, %s13
    %p10 = scmp.ge.s32.totalorder %s9, 4
    %s19 = sphi 0, %s21
    %s22 = sphi 0, %s19
    %s23 = sphi 0, %s22
    %s39 = sphi 0, %s23
    %s43 = sphi 0, %s43
    %s45 = sphi 0, %s43
    %s46 = sphi 0, %s45
    %s60 = sphi 0, %s46
    %s64 = sphi 0, %s64
    %s66 = sphi 0, %s64
    %s67 = sphi 0, %s66
    %s81 = sphi 0, %s67
    %s87 = sphi 0, %s89
    %s90 = sphi 0, %s87
    %s91 = sphi 0, %s90
    %s107 = sphi 0, %s91
  $region4: #{sparse_residual_block_pallas.6} parent=0 // loop_header_branch
    %12 = sbr.rel (%p10) target = $region8
  $region5: #{sparse_residual_block_pallas.6} parent=0 // loop_body
    %s14 = ssub.s32 %s9, 1
    %s15 = ssub.s32 %s9, 2
    %s16 = sadd.s32 %s9, 1
    %s17 = ssub.s32 %s9, %s16
    %p18 = scmp.eq.s32.totalorder %s17, 0
    %s20 = sadd.s32 %s19, 1
    %s21 = scalar_select %p18, %s19, %s20
    %p24 = pneg %p18
    %p25 = scmp.eq.s32.totalorder %s9, 1
    %p26 = por %p24, %p25
    %p27 = scmp.ne.s32.totalorder %s19, %s22
    %p28 = scmp.eq.s32.totalorder %s9, 0
    %p29 = por %p27, %p28
    %p30 = scmp.ne.s32.totalorder %s19, %s22
    %p31 = scmp.eq.s32.totalorder %s14, 1
    %p32 = por %p30, %p31
    %p33 = scmp.ne.s32.totalorder %s22, %s23
    %p34 = scmp.eq.s32.totalorder %s14, 0
    %p35 = por %p33, %p34
    %p36 = scmp.ne.s32.totalorder %s22, %s23
    %p37 = scmp.eq.s32.totalorder %s15, 1
    %p38 = por %p36, %p37
    %p40 = scmp.ne.s32.totalorder %s23, %s39
    %p41 = scmp.eq.s32.totalorder %s15, 0
    %p42 = por %p40, %p41
    %s44 = sadd.s32 %s43, 1
    %p47 = scmp.eq.s32.totalorder %s9, 1
    %p48 = scmp.ne.s32.totalorder %s43, %s45
    %p49 = scmp.eq.s32.totalorder %s9, 0
    %p50 = por %p48, %p49
    %p51 = scmp.ne.s32.totalorder %s43, %s45
    %p52 = scmp.eq.s32.totalorder %s14, 1
    %p53 = por %p51, %p52
    %p54 = scmp.ne.s32.totalorder %s45, %s46
    %p55 = scmp.eq.s32.totalorder %s14, 0
    %p56 = por %p54, %p55
    %p57 = scmp.ne.s32.totalorder %s45, %s46
    %p58 = scmp.eq.s32.totalorder %s15, 1
    %p59 = por %p57, %p58
    %p61 = scmp.ne.s32.totalorder %s46, %s60
    %p62 = scmp.eq.s32.totalorder %s15, 0
    %p63 = por %p61, %p62
    %s65 = sadd.s32 %s64, 1
    %p68 = scmp.eq.s32.totalorder %s9, 1
    %p69 = scmp.ne.s32.totalorder %s64, %s66
    %p70 = scmp.eq.s32.totalorder %s9, 0
    %p71 = por %p69, %p70
    %p72 = scmp.ne.s32.totalorder %s64, %s66
    %p73 = scmp.eq.s32.totalorder %s14, 1
    %p74 = por %p72, %p73
    %p75 = scmp.ne.s32.totalorder %s66, %s67
    %p76 = scmp.eq.s32.totalorder %s14, 0
    %p77 = por %p75, %p76
    %p78 = scmp.ne.s32.totalorder %s66, %s67
    %p79 = scmp.eq.s32.totalorder %s15, 1
    %p80 = por %p78, %p79
    %p82 = scmp.ne.s32.totalorder %s67, %s81
    %p83 = scmp.eq.s32.totalorder %s15, 0
    %p84 = por %p82, %p83
    %s85 = ssub.s32 %s9, %s16
    %p86 = scmp.eq.s32.totalorder %s85, 0
    %s88 = sadd.s32 %s87, 1
    %s89 = scalar_select %p86, %s87, %s88
    %p92 = pneg %p86
    %p93 = scmp.eq.s32.totalorder %s9, 1
    %p94 = por %p92, %p93
    %p95 = scmp.ne.s32.totalorder %s87, %s90
    %p96 = scmp.eq.s32.totalorder %s9, 0
    %p97 = por %p95, %p96
    %p98 = scmp.ne.s32.totalorder %s87, %s90
    %p99 = scmp.eq.s32.totalorder %s14, 1
    %p100 = por %p98, %p99
    %p101 = scmp.ne.s32.totalorder %s90, %s91
    %p102 = scmp.eq.s32.totalorder %s14, 0
    %p103 = por %p101, %p102
    %p104 = scmp.ne.s32.totalorder %s90, %s91
    %p105 = scmp.eq.s32.totalorder %s15, 1
    %p106 = por %p104, %p105
    %p108 = scmp.ne.s32.totalorder %s91, %s107
    %p109 = scmp.eq.s32.totalorder %s15, 0
    %p110 = por %p108, %p109
    %p111 = scmp.le.s32.totalorder 1, %s9
    %p112 = scmp.lt.s32.totalorder %s9, 3
    %p113 = pnand %p111, %p112
    %p114 = pneg %p113
    // Predicated region
    $region9: #{sparse_residual_block_pallas.6} parent=5 // pred_check
      _
    $region10: #{sparse_residual_block_pallas.6} parent=5 // pred_check_branch
      %116 = sbr.rel (%p113) target = $region12
    $region11: #{sparse_residual_block_pallas.6} parent=5 // pred_region
      %s117 = ssub.s32 %s9, 1
      // Predicated region
      $region13: #{sparse_residual_block_pallas.6} parent=11 // pred_check
        %p118 = pneg %p56
      $region14: #{sparse_residual_block_pallas.6} parent=11 // pred_check_branch
        %120 = sbr.rel (%p118) target = $region16
      $region15: #{sparse_residual_block_pallas.6} parent=11 // pred_region
        _
      $region16: #{sparse_residual_block_pallas.6} parent=11 // pred_fallthru
        _
      // Predicated region
      $region17: #{sparse_residual_block_pallas.6} parent=11 // pred_check
        %p121 = pneg %p77
      $region18: #{sparse_residual_block_pallas.6} parent=11 // pred_check_branch
        %123 = sbr.rel (%p121) target = $region20
      $region19: #{sparse_residual_block_pallas.6} parent=11 // pred_region
        _
      $region20: #{sparse_residual_block_pallas.6} parent=11 // pred_fallthru
        _
    $region12: #{sparse_residual_block_pallas.6} parent=5 // pred_fallthru
      _
    %p124 = scmp.lt.s32.totalorder %s9, 2
    // Predicated region
    $region21: #{sparse_residual_block_pallas.6} parent=5 // pred_check
      %p125 = pneg %p124
    $region22: #{sparse_residual_block_pallas.6} parent=5 // pred_check_branch
      %127 = sbr.rel (%p125) target = $region24
    $region23: #{sparse_residual_block_pallas.6} parent=5 // pred_region
      // Predicated region
      $region25: #{sparse_residual_block_pallas.6} parent=23 // pred_check
        %p128 = pneg %p29
      $region26: #{sparse_residual_block_pallas.6} parent=23 // pred_check_branch
        %130 = sbr.rel (%p128) target = $region28
      $region27: #{sparse_residual_block_pallas.6} parent=23 // pred_region
        %s131 = smul.u32 16, %s9
        %p132 = scmp.lt.s32.totalorder %s131, 31
        %s133 = scalar_select %p132, %s131, 31
        %s134 = smul.addr %s133, 8
        %s135 = scalar_lea.vmem %s0, %s134
        %s136 = smul.u32 16, %s9
      $region28: #{sparse_residual_block_pallas.6} parent=23 // pred_fallthru
        _
    $region24: #{sparse_residual_block_pallas.6} parent=5 // pred_fallthru
      _
    %p137 = scmp.le.s32.totalorder 1, %s9
    %p138 = scmp.lt.s32.totalorder %s9, 3
    %p139 = pnand %p137, %p138
    %p140 = pneg %p139
    // Predicated region
    $region29: #{sparse_residual_block_pallas.6} parent=5 // pred_check
      _
    $region30: #{sparse_residual_block_pallas.6} parent=5 // pred_check_branch
      %142 = sbr.rel (%p139) target = $region32
    $region31: #{sparse_residual_block_pallas.6} parent=5 // pred_region
      %s143 = ssub.s32 %s9, 1
      %s144 = smul.u32 16, %s14
      %p145 = scmp.lt.s32.totalorder %s144, 31
      %s146 = scalar_select %p145, %s144, 31
      %s147 = smul.addr %s146, 8
      %s148 = scalar_lea.vmem %s0, %s147
      %p149 = pneg %p35
      %p150 = pneg %p32
      %p151 = pneg %p56
      %p152 = pneg %p53
      %p153 = pneg %p77
      %p154 = pneg %p74
      %p155 = pneg %p103
      %p156 = pneg %p100
      %s157 = smul.u32 16, %s14
      %p158 = scmp.lt.s32.totalorder %s157, 31
      %s159 = scalar_select %p158, %s157, 31
      %s160 = smul.addr %s159, 4
      %s161 = scalar_lea.vmem %s3, %s160
      %s162 = smul.u32 16, %s14
      %p163 = scmp.lt.s32.totalorder %s162, 31
      %s164 = scalar_select %p163, %s162, 31
      %s165 = smul.addr %s164, 8
      %s166 = scalar_lea.vmem %s0, %s165
      %s167 = smul.u32 16, %s14
      %s168 = smul.u32 16, %s14
      %p169 = scmp.lt.s32.totalorder %s168, 31
      %s170 = scalar_select %p169, %s168, 31
      %s171 = smul.addr %s170, 4
      %s172 = scalar_lea.vmem %s3, %s171
      %s173 = smul.u32 16, %s14
      %v174 = vld [vmem:[%s166] sm:$0xff]
      %v175 = vld [vmem:[%s166 + $0x8] sm:$0xff]
      %v176 = vld [vmem:[%s166 + $0x10] sm:$0xff]
      %v177 = vld [vmem:[%s166 + $0x18] sm:$0xff]
      %v178 = vld [vmem:[%s166 + $0x20] sm:$0xff]
      %v179 = vld [vmem:[%s166 + $0x28] sm:$0xff]
      %v180 = vld [vmem:[%s166 + $0x30] sm:$0xff]
      %v181 = vld [vmem:[%s166 + $0x38] sm:$0xff]
      %v182 = vld [vmem:[%s166 + $0x40] sm:$0xff]
      %v183 = vld [vmem:[%s166 + $0x48] sm:$0xff]
      %v184 = vld [vmem:[%s166 + $0x50] sm:$0xff]
      %v185 = vld [vmem:[%s166 + $0x58] sm:$0xff]
      %v186 = vld [vmem:[%s166 + $0x60] sm:$0xff]
      %v187 = vld [vmem:[%s166 + $0x68] sm:$0xff]
      %v188 = vld [vmem:[%s166 + $0x70] sm:$0xff]
      %v189 = vld [vmem:[%s166 + $0x78] sm:$0xff]
      %v190 = vld [vmem:[%s1] sm:$0x1]
      %v192 = vlaneseq
      %v193 = vshrl.u32 %v192, 7
      %v194 = vsub.s32 0, %v193
      %v195 = vrot.slane %v190, %v194
      %v197 = vmul.f32 %v174, %v195
      %v198 = vmul.f32 %v175, %v195
      %v199 = vmul.f32 %v176, %v195
      %v200 = vmul.f32 %v177, %v195
      %v201 = vmul.f32 %v178, %v195
      %v202 = vmul.f32 %v179, %v195
      %v203 = vmul.f32 %v180, %v195
      %v204 = vmul.f32 %v181, %v195
      %v205 = vmul.f32 %v182, %v195
      %v206 = vmul.f32 %v183, %v195
      %v207 = vmul.f32 %v184, %v195
      %v208 = vmul.f32 %v185, %v195
      %v209 = vmul.f32 %v186, %v195
      %v210 = vmul.f32 %v187, %v195
      %v211 = vmul.f32 %v188, %v195
      %v212 = vmul.f32 %v189, %v195
      %v213 = vld [vmem:[%s2] sm:$0x1]
      %v215 = vlaneseq
      %v216 = vshrl.u32 %v215, 7
      %v217 = vsub.s32 0, %v216
      %v218 = vrot.slane %v213, %v217
      %v220 = vadd.f32 %v197, %v218
      %v221 = vadd.f32 %v198, %v218
      %v222 = vadd.f32 %v199, %v218
      %v223 = vadd.f32 %v200, %v218
      %v224 = vadd.f32 %v201, %v218
      %v225 = vadd.f32 %v202, %v218
      %v226 = vadd.f32 %v203, %v218
      %v227 = vadd.f32 %v204, %v218
      %v228 = vadd.f32 %v205, %v218
      %v229 = vadd.f32 %v206, %v218
      %v230 = vadd.f32 %v207, %v218
      %v231 = vadd.f32 %v208, %v218
      %v232 = vadd.f32 %v209, %v218
      %v233 = vadd.f32 %v210, %v218
      %v234 = vadd.f32 %v211, %v218
      %v235 = vadd.f32 %v212, %v218
      %v236 = vmax.f32 %v220, 0.0
      %v237 = vmax.f32 %v221, 0.0
      %v238 = vmax.f32 %v222, 0.0
      %v239 = vmax.f32 %v223, 0.0
      %v240 = vmax.f32 %v224, 0.0
      %v241 = vmax.f32 %v225, 0.0
      %v242 = vmax.f32 %v226, 0.0
      %v243 = vmax.f32 %v227, 0.0
      %v244 = vmax.f32 %v228, 0.0
      %v245 = vmax.f32 %v229, 0.0
      %v246 = vmax.f32 %v230, 0.0
      %v247 = vmax.f32 %v231, 0.0
      %v248 = vmax.f32 %v232, 0.0
      %v249 = vmax.f32 %v233, 0.0
      %v250 = vmax.f32 %v234, 0.0
      %v251 = vmax.f32 %v235, 0.0
      %v252 = vpack.c.bf16 %v237, %v236
      %v253 = vpack.c.bf16 %v239, %v238
      %v254 = vpack.c.bf16 %v241, %v240
      %v255 = vpack.c.bf16 %v243, %v242
      %v256 = vpack.c.bf16 %v245, %v244
      %v257 = vpack.c.bf16 %v247, %v246
      %v258 = vpack.c.bf16 %v249, %v248
      %v259 = vpack.c.bf16 %v251, %v250
      %v268 = vunpack.c.l.b16 %v252
      %v269 = vunpack.c.h.b16 %v252
      %v270 = vunpack.c.l.b16 %v253
      %v271 = vunpack.c.h.b16 %v253
      %v272 = vunpack.c.l.b16 %v254
      %v273 = vunpack.c.h.b16 %v254
      %v274 = vunpack.c.l.b16 %v255
      %v275 = vunpack.c.h.b16 %v255
      %v276 = vunpack.c.l.b16 %v256
      %v277 = vunpack.c.h.b16 %v256
      %v278 = vunpack.c.l.b16 %v257
      %v279 = vunpack.c.h.b16 %v257
      %v280 = vunpack.c.l.b16 %v258
      %v281 = vunpack.c.h.b16 %v258
      %v282 = vunpack.c.l.b16 %v259
      %v283 = vunpack.c.h.b16 %v259
      %v284 = vpack.c.b16 %v268, %v268
      %v285 = vpack.c.b16 %v269, %v269
      %v286 = vpack.c.b16 %v270, %v270
      %v287 = vpack.c.b16 %v271, %v271
      %v288 = vpack.c.b16 %v272, %v272
      %v289 = vpack.c.b16 %v273, %v273
      %v290 = vpack.c.b16 %v274, %v274
      %v291 = vpack.c.b16 %v275, %v275
      %v292 = vpack.c.b16 %v276, %v276
      %v293 = vpack.c.b16 %v277, %v277
      %v294 = vpack.c.b16 %v278, %v278
      %v295 = vpack.c.b16 %v279, %v279
      %v296 = vpack.c.b16 %v280, %v280
      %v297 = vpack.c.b16 %v281, %v281
      %v298 = vpack.c.b16 %v282, %v282
      %v299 = vpack.c.b16 %v283, %v283
      %316 = vst [vmem:[%s172] sm:$0xf] %v284
      %317 = vst [vmem:[%s172 + $0x4] sm:$0xf] %v285
      %318 = vst [vmem:[%s172 + $0x8] sm:$0xf] %v286
      %319 = vst [vmem:[%s172 + $0xc] sm:$0xf] %v287
      %320 = vst [vmem:[%s172 + $0x10] sm:$0xf] %v288
      %321 = vst [vmem:[%s172 + $0x14] sm:$0xf] %v289
      %322 = vst [vmem:[%s172 + $0x18] sm:$0xf] %v290
      %323 = vst [vmem:[%s172 + $0x1c] sm:$0xf] %v291
      %324 = vst [vmem:[%s172 + $0x20] sm:$0xf] %v292
      %325 = vst [vmem:[%s172 + $0x24] sm:$0xf] %v293
      %326 = vst [vmem:[%s172 + $0x28] sm:$0xf] %v294
      %327 = vst [vmem:[%s172 + $0x2c] sm:$0xf] %v295
      %328 = vst [vmem:[%s172 + $0x30] sm:$0xf] %v296
      %329 = vst [vmem:[%s172 + $0x34] sm:$0xf] %v297
      %330 = vst [vmem:[%s172 + $0x38] sm:$0xf] %v298
      %331 = vst [vmem:[%s172 + $0x3c] sm:$0xf] %v299
      %s332 = smul.u32 16, %s14
      %p333 = scmp.lt.s32.totalorder %s332, 31
      %s334 = scalar_select %p333, %s332, 31
      %s335 = smul.addr %s334, 4
      %s336 = scalar_lea.vmem %s3, %s335
      // Predicated region
      $region33: #{sparse_residual_block_pallas.6} parent=31 // pred_check
        %p337 = pneg %p100
      $region34: #{sparse_residual_block_pallas.6} parent=31 // pred_check_branch
        %339 = sbr.rel (%p337) target = $region36
      $region35: #{sparse_residual_block_pallas.6} parent=31 // pred_region
        %s340 = smul.u32 16, %s14
      $region36: #{sparse_residual_block_pallas.6} parent=31 // pred_fallthru
        _
    $region32: #{sparse_residual_block_pallas.6} parent=5 // pred_fallthru
      _
    %p341 = scmp.le.s32.totalorder 2, %s9
    // Predicated region
    $region37: #{sparse_residual_block_pallas.6} parent=5 // pred_check
      %p342 = pneg %p341
    $region38: #{sparse_residual_block_pallas.6} parent=5 // pred_check_branch
      %344 = sbr.rel (%p342) target = $region40
    $region39: #{sparse_residual_block_pallas.6} parent=5 // pred_region
      %s345 = ssub.s32 %s9, 2
      // Predicated region
      $region41: #{sparse_residual_block_pallas.6} parent=39 // pred_check
        %p346 = pneg %p106
      $region42: #{sparse_residual_block_pallas.6} parent=39 // pred_check_branch
        %348 = sbr.rel (%p346) target = $region44
      $region43: #{sparse_residual_block_pallas.6} parent=39 // pred_region
        %s349 = smul.u32 16, %s15
        %p350 = scmp.lt.s32.totalorder %s349, 31
        %s351 = scalar_select %p350, %s349, 31
        %s352 = smul.addr %s351, 4
        %s353 = scalar_lea.vmem %s3, %s352
      $region44: #{sparse_residual_block_pallas.6} parent=39 // pred_fallthru
        _
    $region40: #{sparse_residual_block_pallas.6} parent=5 // pred_fallthru
      _
  $region6: #{sparse_residual_block_pallas.6} parent=0 // loop_footer
    %s13 = sadd.s32 1, %s9
  $region7: #{sparse_residual_block_pallas.6} parent=0 // loop_footer_branch
    %8 = sbr.rel target = $region3
  $region8: #{sparse_residual_block_pallas.6} parent=0 // loop_exit
    _

// kernel: sparse_residual_block_pallas.5
$region0: #{sparse_residual_block_pallas.5}
  #allocation0 [shape = 'u32[]', space=smem, size = 0x4, offset = 0x4, fixed_abs, tag = 'smem constant byte address 0x4 - core index']
  #allocation1 [shape = 'u32[144,128]{1,0:T(1,128)}', space=vmem, size = 0x12000, scoped, tag = 'internal scratch']
  %s0 = inlined_call_operand.vmem [shape: bf16[256,512], index: 0, kind: input, shape index: {}]
  %s1 = inlined_call_operand.vmem [shape: bf16[512,128], index: 1, kind: input, shape index: {}]
  %s2 = inlined_call_operand.vmem [shape: f32[256,128], index: 2, kind: output, shape index: {0}]
  %s3 = inlined_call_operand.vmem [shape: f32[2,8,128], index: 3, kind: output, shape index: {1}]
  %4 = xla_tuple %s2, %s3
  %s5 = sld [smem:[#allocation0]]
  $region49: #{sparse_residual_block_pallas.5} parent=0
    _
  %s7 = ssub.s32 1, %s5
  %s8 = scalar_select 0, %s7, %s5
  loop: start=0, step=1, limit=4
  $region2: #{sparse_residual_block_pallas.5} parent=0 // loop_pre_header
    _
  $region3: #{sparse_residual_block_pallas.5} parent=0 // loop_header
    %s10 = sphi 0, %s14
    %p11 = scmp.ge.s32.totalorder %s10, 4
    %s20 = sphi 0, %s22
    %s23 = sphi 0, %s20
    %s24 = sphi 0, %s23
    %s40 = sphi 0, %s24
    %s44 = sphi 0, %s44
    %s46 = sphi 0, %s44
    %s47 = sphi 0, %s46
    %s61 = sphi 0, %s47
    %s67 = sphi 0, %s69
    %s70 = sphi 0, %s67
    %s71 = sphi 0, %s70
    %s87 = sphi 0, %s71
    %s93 = sphi 0, %s95
    %s96 = sphi 0, %s93
    %s97 = sphi 0, %s96
    %s113 = sphi 0, %s97
  $region4: #{sparse_residual_block_pallas.5} parent=0 // loop_header_branch
    %13 = sbr.rel (%p11) target = $region8
  $region5: #{sparse_residual_block_pallas.5} parent=0 // loop_body
    %s15 = ssub.s32 %s10, 1
    %s16 = ssub.s32 %s10, 2
    %s17 = sadd.s32 %s10, 1
    %s18 = ssub.s32 %s10, %s17
    %p19 = scmp.eq.s32.totalorder %s18, 0
    %s21 = sadd.s32 %s20, 1
    %s22 = scalar_select %p19, %s20, %s21
    %p25 = pneg %p19
    %p26 = scmp.eq.s32.totalorder %s10, 1
    %p27 = por %p25, %p26
    %p28 = scmp.ne.s32.totalorder %s20, %s23
    %p29 = scmp.eq.s32.totalorder %s10, 0
    %p30 = por %p28, %p29
    %p31 = scmp.ne.s32.totalorder %s20, %s23
    %p32 = scmp.eq.s32.totalorder %s15, 1
    %p33 = por %p31, %p32
    %p34 = scmp.ne.s32.totalorder %s23, %s24
    %p35 = scmp.eq.s32.totalorder %s15, 0
    %p36 = por %p34, %p35
    %p37 = scmp.ne.s32.totalorder %s23, %s24
    %p38 = scmp.eq.s32.totalorder %s16, 1
    %p39 = por %p37, %p38
    %p41 = scmp.ne.s32.totalorder %s24, %s40
    %p42 = scmp.eq.s32.totalorder %s16, 0
    %p43 = por %p41, %p42
    %s45 = sadd.s32 %s44, 1
    %p48 = scmp.eq.s32.totalorder %s10, 1
    %p49 = scmp.ne.s32.totalorder %s44, %s46
    %p50 = scmp.eq.s32.totalorder %s10, 0
    %p51 = por %p49, %p50
    %p52 = scmp.ne.s32.totalorder %s44, %s46
    %p53 = scmp.eq.s32.totalorder %s15, 1
    %p54 = por %p52, %p53
    %p55 = scmp.ne.s32.totalorder %s46, %s47
    %p56 = scmp.eq.s32.totalorder %s15, 0
    %p57 = por %p55, %p56
    %p58 = scmp.ne.s32.totalorder %s46, %s47
    %p59 = scmp.eq.s32.totalorder %s16, 1
    %p60 = por %p58, %p59
    %p62 = scmp.ne.s32.totalorder %s47, %s61
    %p63 = scmp.eq.s32.totalorder %s16, 0
    %p64 = por %p62, %p63
    %s65 = ssub.s32 %s10, %s17
    %p66 = scmp.eq.s32.totalorder %s65, 0
    %s68 = sadd.s32 %s67, 1
    %s69 = scalar_select %p66, %s67, %s68
    %p72 = pneg %p66
    %p73 = scmp.eq.s32.totalorder %s10, 1
    %p74 = por %p72, %p73
    %p75 = scmp.ne.s32.totalorder %s67, %s70
    %p76 = scmp.eq.s32.totalorder %s10, 0
    %p77 = por %p75, %p76
    %p78 = scmp.ne.s32.totalorder %s67, %s70
    %p79 = scmp.eq.s32.totalorder %s15, 1
    %p80 = por %p78, %p79
    %p81 = scmp.ne.s32.totalorder %s70, %s71
    %p82 = scmp.eq.s32.totalorder %s15, 0
    %p83 = por %p81, %p82
    %p84 = scmp.ne.s32.totalorder %s70, %s71
    %p85 = scmp.eq.s32.totalorder %s16, 1
    %p86 = por %p84, %p85
    %p88 = scmp.ne.s32.totalorder %s71, %s87
    %p89 = scmp.eq.s32.totalorder %s16, 0
    %p90 = por %p88, %p89
    %s91 = ssub.s32 %s10, %s17
    %p92 = scmp.eq.s32.totalorder %s91, 0
    %s94 = sadd.s32 %s93, 1
    %s95 = scalar_select %p92, %s93, %s94
    %p98 = pneg %p92
    %p99 = scmp.eq.s32.totalorder %s10, 1
    %p100 = por %p98, %p99
    %p101 = scmp.ne.s32.totalorder %s93, %s96
    %p102 = scmp.eq.s32.totalorder %s10, 0
    %p103 = por %p101, %p102
    %p104 = scmp.ne.s32.totalorder %s93, %s96
    %p105 = scmp.eq.s32.totalorder %s15, 1
    %p106 = por %p104, %p105
    %p107 = scmp.ne.s32.totalorder %s96, %s97
    %p108 = scmp.eq.s32.totalorder %s15, 0
    %p109 = por %p107, %p108
    %p110 = scmp.ne.s32.totalorder %s96, %s97
    %p111 = scmp.eq.s32.totalorder %s16, 1
    %p112 = por %p110, %p111
    %p114 = scmp.ne.s32.totalorder %s97, %s113
    %p115 = scmp.eq.s32.totalorder %s16, 0
    %p116 = por %p114, %p115
    %p117 = scmp.le.s32.totalorder 1, %s10
    %p118 = scmp.lt.s32.totalorder %s10, 3
    %p119 = pnand %p117, %p118
    %p120 = pneg %p119
    // Predicated region
    $region9: #{sparse_residual_block_pallas.5} parent=5 // pred_check
      _
    $region10: #{sparse_residual_block_pallas.5} parent=5 // pred_check_branch
      %122 = sbr.rel (%p119) target = $region12
    $region11: #{sparse_residual_block_pallas.5} parent=5 // pred_region
      %s123 = ssub.s32 %s10, 1
      // Predicated region
      $region13: #{sparse_residual_block_pallas.5} parent=11 // pred_check
        %p124 = pneg %p57
      $region14: #{sparse_residual_block_pallas.5} parent=11 // pred_check_branch
        %126 = sbr.rel (%p124) target = $region16
      $region15: #{sparse_residual_block_pallas.5} parent=11 // pred_region
        _
      $region16: #{sparse_residual_block_pallas.5} parent=11 // pred_fallthru
        _
    $region12: #{sparse_residual_block_pallas.5} parent=5 // pred_fallthru
      _
    %p127 = scmp.lt.s32.totalorder %s10, 2
    // Predicated region
    $region17: #{sparse_residual_block_pallas.5} parent=5 // pred_check
      %p128 = pneg %p127
    $region18: #{sparse_residual_block_pallas.5} parent=5 // pred_check_branch
      %130 = sbr.rel (%p128) target = $region20
    $region19: #{sparse_residual_block_pallas.5} parent=5 // pred_region
      // Predicated region
      $region21: #{sparse_residual_block_pallas.5} parent=19 // pred_check
        %p131 = pneg %p30
      $region22: #{sparse_residual_block_pallas.5} parent=19 // pred_check_branch
        %133 = sbr.rel (%p131) target = $region24
      $region23: #{sparse_residual_block_pallas.5} parent=19 // pred_region
        %s134 = smul.u32 16, %s10
        %p135 = scmp.lt.s32.totalorder %s134, 31
        %s136 = scalar_select %p135, %s134, 31
        %s137 = smul.addr %s136, 4
        %s138 = smul.addr %s137, 4
        %s139 = scalar_lea.vmem %s0, %s138
        %s140 = smul.u32 16, %s10
      $region24: #{sparse_residual_block_pallas.5} parent=19 // pred_fallthru
        _
    $region20: #{sparse_residual_block_pallas.5} parent=5 // pred_fallthru
      _
    %p141 = scmp.le.s32.totalorder 1, %s10
    %p142 = scmp.lt.s32.totalorder %s10, 3
    %p143 = pnand %p141, %p142
    %p144 = pneg %p143
    // Predicated region
    $region25: #{sparse_residual_block_pallas.5} parent=5 // pred_check
      _
    $region26: #{sparse_residual_block_pallas.5} parent=5 // pred_check_branch
      %146 = sbr.rel (%p143) target = $region28
    $region27: #{sparse_residual_block_pallas.5} parent=5 // pred_region
      %s147 = ssub.s32 %s10, 1
      %s148 = smul.u32 16, %s15
      %p149 = scmp.lt.s32.totalorder %s148, 31
      %s150 = scalar_select %p149, %s148, 31
      %s151 = smul.addr %s150, 4
      %s152 = smul.addr %s151, 4
      %s153 = scalar_lea.vmem %s0, %s152
      %p154 = pneg %p36
      %p155 = pneg %p33
      %p156 = pneg %p57
      %p157 = pneg %p54
      %p158 = pneg %p83
      %p159 = pneg %p80
      %s160 = smul.u32 16, %s15
      %p161 = scmp.lt.s32.totalorder %s160, 31
      %s162 = scalar_select %p161, %s160, 31
      %s163 = smul.addr %s162, 8
      %s164 = scalar_lea.vmem %s2, %s163
      %p165 = pneg %p109
      %p166 = pneg %p106
      %p167 = scmp.lt.s32.totalorder %s15, 1
      %s168 = scalar_select %p167, %s15, 1
      %s169 = smul.addr %s168, 8
      %s170 = scalar_lea.vmem %s3, %s169
      %s171 = smul.u32 16, %s15
      %p172 = scmp.lt.s32.totalorder %s171, 31
      %s173 = scalar_select %p172, %s171, 31
      %s174 = smul.addr %s173, 4
      %s175 = smul.addr %s174, 4
      %s176 = scalar_lea.vmem %s0, %s175
      %s177 = smul.u32 16, %s15
      %s178 = smul.u32 16, %s15
      %p179 = scmp.lt.s32.totalorder %s178, 31
      %s180 = scalar_select %p179, %s178, 31
      %s181 = smul.addr %s180, 8
      %s182 = scalar_lea.vmem %s2, %s181
      %s183 = smul.u32 16, %s15
      %p184 = scmp.lt.s32.totalorder %s15, 1
      %s185 = scalar_select %p184, %s15, 1
      %s186 = smul.addr %s185, 8
      %s187 = scalar_lea.vmem %s3, %s186
      %v189 = vld [vmem:[%s176] sm:$0xff]
      %v190 = vld [vmem:[%s176 + $0x8] sm:$0xff]
      %v191 = vld [vmem:[%s176 + $0x10] sm:$0xff]
      %v192 = vld [vmem:[%s176 + $0x18] sm:$0xff]
      %v193 = vld [vmem:[%s176 + $0x20] sm:$0xff]
      %v194 = vld [vmem:[%s176 + $0x28] sm:$0xff]
      %v195 = vld [vmem:[%s176 + $0x30] sm:$0xff]
      %v196 = vld [vmem:[%s176 + $0x38] sm:$0xff]
      %v197 = vld [vmem:[%s176 + $0x40] sm:$0xff]
      %v198 = vld [vmem:[%s176 + $0x48] sm:$0xff]
      %v199 = vld [vmem:[%s176 + $0x50] sm:$0xff]
      %v200 = vld [vmem:[%s176 + $0x58] sm:$0xff]
      %v201 = vld [vmem:[%s176 + $0x60] sm:$0xff]
      %v202 = vld [vmem:[%s176 + $0x68] sm:$0xff]
      %v203 = vld [vmem:[%s176 + $0x70] sm:$0xff]
      %v204 = vld [vmem:[%s176 + $0x78] sm:$0xff]
      %v205 = vld [vmem:[%s176 + $0x80] sm:$0xff]
      %v206 = vld [vmem:[%s176 + $0x88] sm:$0xff]
      %v207 = vld [vmem:[%s176 + $0x90] sm:$0xff]
      %v208 = vld [vmem:[%s176 + $0x98] sm:$0xff]
      %v209 = vld [vmem:[%s176 + $0xa0] sm:$0xff]
      %v210 = vld [vmem:[%s176 + $0xa8] sm:$0xff]
      %v211 = vld [vmem:[%s176 + $0xb0] sm:$0xff]
      %v212 = vld [vmem:[%s176 + $0xb8] sm:$0xff]
      %v213 = vld [vmem:[%s176 + $0xc0] sm:$0xff]
      %v214 = vld [vmem:[%s176 + $0xc8] sm:$0xff]
      %v215 = vld [vmem:[%s176 + $0xd0] sm:$0xff]
      %v216 = vld [vmem:[%s176 + $0xd8] sm:$0xff]
      %v217 = vld [vmem:[%s176 + $0xe0] sm:$0xff]
      %v218 = vld [vmem:[%s176 + $0xe8] sm:$0xff]
      %v219 = vld [vmem:[%s176 + $0xf0] sm:$0xff]
      %v220 = vld [vmem:[%s176 + $0xf8] sm:$0xff]
      %v221 = vld [vmem:[%s1] sm:$0xf]
      %v222 = vld [vmem:[%s1 + $0x4] sm:$0xf]
      %v223 = vld [vmem:[%s1 + $0x8] sm:$0xf]
      %v224 = vld [vmem:[%s1 + $0xc] sm:$0xf]
      %v225 = vld [vmem:[%s1 + $0x10] sm:$0xf]
      %v226 = vld [vmem:[%s1 + $0x14] sm:$0xf]
      %v227 = vld [vmem:[%s1 + $0x18] sm:$0xf]
      %v228 = vld [vmem:[%s1 + $0x1c] sm:$0xf]
      %v229 = vld [vmem:[%s1 + $0x20] sm:$0xf]
      %v230 = vld [vmem:[%s1 + $0x24] sm:$0xf]
      %v231 = vld [vmem:[%s1 + $0x28] sm:$0xf]
      %v232 = vld [vmem:[%s1 + $0x2c] sm:$0xf]
      %v233 = vld [vmem:[%s1 + $0x30] sm:$0xf]
      %v234 = vld [vmem:[%s1 + $0x34] sm:$0xf]
      %v235 = vld [vmem:[%s1 + $0x38] sm:$0xf]
      %v236 = vld [vmem:[%s1 + $0x3c] sm:$0xf]
      %v237 = vld [vmem:[%s1 + $0x40] sm:$0xf]
      %v238 = vld [vmem:[%s1 + $0x44] sm:$0xf]
      %v239 = vld [vmem:[%s1 + $0x48] sm:$0xf]
      %v240 = vld [vmem:[%s1 + $0x4c] sm:$0xf]
      %v241 = vld [vmem:[%s1 + $0x50] sm:$0xf]
      %v242 = vld [vmem:[%s1 + $0x54] sm:$0xf]
      %v243 = vld [vmem:[%s1 + $0x58] sm:$0xf]
      %v244 = vld [vmem:[%s1 + $0x5c] sm:$0xf]
      %v245 = vld [vmem:[%s1 + $0x60] sm:$0xf]
      %v246 = vld [vmem:[%s1 + $0x64] sm:$0xf]
      %v247 = vld [vmem:[%s1 + $0x68] sm:$0xf]
      %v248 = vld [vmem:[%s1 + $0x6c] sm:$0xf]
      %v249 = vld [vmem:[%s1 + $0x70] sm:$0xf]
      %v250 = vld [vmem:[%s1 + $0x74] sm:$0xf]
      %v251 = vld [vmem:[%s1 + $0x78] sm:$0xf]
      %v252 = vld [vmem:[%s1 + $0x7c] sm:$0xf]
      %v253 = vld [vmem:[%s1 + $0x80] sm:$0xf]
      %v254 = vld [vmem:[%s1 + $0x84] sm:$0xf]
      %v255 = vld [vmem:[%s1 + $0x88] sm:$0xf]
      %v256 = vld [vmem:[%s1 + $0x8c] sm:$0xf]
      %v257 = vld [vmem:[%s1 + $0x90] sm:$0xf]
      %v258 = vld [vmem:[%s1 + $0x94] sm:$0xf]
      %v259 = vld [vmem:[%s1 + $0x98] sm:$0xf]
      %v260 = vld [vmem:[%s1 + $0x9c] sm:$0xf]
      %v261 = vld [vmem:[%s1 + $0xa0] sm:$0xf]
      %v262 = vld [vmem:[%s1 + $0xa4] sm:$0xf]
      %v263 = vld [vmem:[%s1 + $0xa8] sm:$0xf]
      %v264 = vld [vmem:[%s1 + $0xac] sm:$0xf]
      %v265 = vld [vmem:[%s1 + $0xb0] sm:$0xf]
      %v266 = vld [vmem:[%s1 + $0xb4] sm:$0xf]
      %v267 = vld [vmem:[%s1 + $0xb8] sm:$0xf]
      %v268 = vld [vmem:[%s1 + $0xbc] sm:$0xf]
      %v269 = vld [vmem:[%s1 + $0xc0] sm:$0xf]
      %v270 = vld [vmem:[%s1 + $0xc4] sm:$0xf]
      %v271 = vld [vmem:[%s1 + $0xc8] sm:$0xf]
      %v272 = vld [vmem:[%s1 + $0xcc] sm:$0xf]
      %v273 = vld [vmem:[%s1 + $0xd0] sm:$0xf]
      %v274 = vld [vmem:[%s1 + $0xd4] sm:$0xf]
      %v275 = vld [vmem:[%s1 + $0xd8] sm:$0xf]
      %v276 = vld [vmem:[%s1 + $0xdc] sm:$0xf]
      %v277 = vld [vmem:[%s1 + $0xe0] sm:$0xf]
      %v278 = vld [vmem:[%s1 + $0xe4] sm:$0xf]
      %v279 = vld [vmem:[%s1 + $0xe8] sm:$0xf]
      %v280 = vld [vmem:[%s1 + $0xec] sm:$0xf]
      %v281 = vld [vmem:[%s1 + $0xf0] sm:$0xf]
      %v282 = vld [vmem:[%s1 + $0xf4] sm:$0xf]
      %v283 = vld [vmem:[%s1 + $0xf8] sm:$0xf]
      %v284 = vld [vmem:[%s1 + $0xfc] sm:$0xf]
      %v317 = vunpack.c.l.b16 %v189
      %v318 = vunpack.c.h.b16 %v189
      %v319 = vunpack.c.l.b16 %v190
      %v320 = vunpack.c.h.b16 %v190
      %v321 = vunpack.c.l.b16 %v191
      %v322 = vunpack.c.h.b16 %v191
      %v323 = vunpack.c.l.b16 %v192
      %v324 = vunpack.c.h.b16 %v192
      %v325 = vunpack.c.l.b16 %v193
      %v326 = vunpack.c.h.b16 %v193
      %v327 = vunpack.c.l.b16 %v194
      %v328 = vunpack.c.h.b16 %v194
      %v329 = vunpack.c.l.b16 %v195
      %v330 = vunpack.c.h.b16 %v195
      %v331 = vunpack.c.l.b16 %v196
      %v332 = vunpack.c.h.b16 %v196
      %v333 = vunpack.c.l.b16 %v197
      %v334 = vunpack.c.h.b16 %v197
      %v335 = vunpack.c.l.b16 %v198
      %v336 = vunpack.c.h.b16 %v198
      %v337 = vunpack.c.l.b16 %v199
      %v338 = vunpack.c.h.b16 %v199
      %v339 = vunpack.c.l.b16 %v200
      %v340 = vunpack.c.h.b16 %v200
      %v341 = vunpack.c.l.b16 %v201
      %v342 = vunpack.c.h.b16 %v201
      %v343 = vunpack.c.l.b16 %v202
      %v344 = vunpack.c.h.b16 %v202
      %v345 = vunpack.c.l.b16 %v203
      %v346 = vunpack.c.h.b16 %v203
      %v347 = vunpack.c.l.b16 %v204
      %v348 = vunpack.c.h.b16 %v204
      %v349 = vunpack.c.l.b16 %v205
      %v350 = vunpack.c.h.b16 %v205
      %v351 = vunpack.c.l.b16 %v206
      %v352 = vunpack.c.h.b16 %v206
      %v353 = vunpack.c.l.b16 %v207
      %v354 = vunpack.c.h.b16 %v207
      %v355 = vunpack.c.l.b16 %v208
      %v356 = vunpack.c.h.b16 %v208
      %v357 = vunpack.c.l.b16 %v209
      %v358 = vunpack.c.h.b16 %v209
      %v359 = vunpack.c.l.b16 %v210
      %v360 = vunpack.c.h.b16 %v210
      %v361 = vunpack.c.l.b16 %v211
      %v362 = vunpack.c.h.b16 %v211
      %v363 = vunpack.c.l.b16 %v212
      %v364 = vunpack.c.h.b16 %v212
      %v365 = vunpack.c.l.b16 %v213
      %v366 = vunpack.c.h.b16 %v213
      %v367 = vunpack.c.l.b16 %v214
      %v368 = vunpack.c.h.b16 %v214
      %v369 = vunpack.c.l.b16 %v215
      %v370 = vunpack.c.h.b16 %v215
      %v371 = vunpack.c.l.b16 %v216
      %v372 = vunpack.c.h.b16 %v216
      %v373 = vunpack.c.l.b16 %v217
      %v374 = vunpack.c.h.b16 %v217
      %v375 = vunpack.c.l.b16 %v218
      %v376 = vunpack.c.h.b16 %v218
      %v377 = vunpack.c.l.b16 %v219
      %v378 = vunpack.c.h.b16 %v219
      %v379 = vunpack.c.l.b16 %v220
      %v380 = vunpack.c.h.b16 %v220
      %v381 = vpack.c.b16 %v321, %v317
      %v382 = vpack.c.b16 %v322, %v318
      %v383 = vpack.c.b16 %v323, %v319
      %v384 = vpack.c.b16 %v324, %v320
      %v385 = vpack.c.b16 %v329, %v325
      %v386 = vpack.c.b16 %v330, %v326
      %v387 = vpack.c.b16 %v331, %v327
      %v388 = vpack.c.b16 %v332, %v328
      %v389 = vpack.c.b16 %v337, %v333
      %v390 = vpack.c.b16 %v338, %v334
      %v391 = vpack.c.b16 %v339, %v335
      %v392 = vpack.c.b16 %v340, %v336
      %v393 = vpack.c.b16 %v345, %v341
      %v394 = vpack.c.b16 %v346, %v342
      %v395 = vpack.c.b16 %v347, %v343
      %v396 = vpack.c.b16 %v348, %v344
      %v397 = vpack.c.b16 %v353, %v349
      %v398 = vpack.c.b16 %v354, %v350
      %v399 = vpack.c.b16 %v355, %v351
      %v400 = vpack.c.b16 %v356, %v352
      %v401 = vpack.c.b16 %v361, %v357
      %v402 = vpack.c.b16 %v362, %v358
      %v403 = vpack.c.b16 %v363, %v359
      %v404 = vpack.c.b16 %v364, %v360
      %v405 = vpack.c.b16 %v369, %v365
      %v406 = vpack.c.b16 %v370, %v366
      %v407 = vpack.c.b16 %v371, %v367
      %v408 = vpack.c.b16 %v372, %v368
      %v409 = vpack.c.b16 %v377, %v373
      %v410 = vpack.c.b16 %v378, %v374
      %v411 = vpack.c.b16 %v379, %v375
      %v412 = vpack.c.b16 %v380, %v376
      %v509 = vunpack.c.l.b16 %v221
      %v510 = vunpack.c.l.b16 %v222
      %v511 = vunpack.c.l.b16 %v223
      %v512 = vunpack.c.l.b16 %v224
      %v513 = vunpack.c.l.b16 %v225
      %v514 = vunpack.c.l.b16 %v226
      %v515 = vunpack.c.l.b16 %v227
      %v516 = vunpack.c.l.b16 %v228
      %v517 = vunpack.c.l.b16 %v229
      %v518 = vunpack.c.l.b16 %v230
      %v519 = vunpack.c.l.b16 %v231
      %v520 = vunpack.c.l.b16 %v232
      %v521 = vunpack.c.l.b16 %v233
      %v522 = vunpack.c.l.b16 %v234
      %v523 = vunpack.c.l.b16 %v235
      %v524 = vunpack.c.l.b16 %v236
      %v525 = vunpack.c.l.b16 %v237
      %v526 = vunpack.c.l.b16 %v238
      %v527 = vunpack.c.l.b16 %v239
      %v528 = vunpack.c.l.b16 %v240
      %v529 = vunpack.c.l.b16 %v241
      %v530 = vunpack.c.l.b16 %v242
      %v531 = vunpack.c.l.b16 %v243
      %v532 = vunpack.c.l.b16 %v244
      %v533 = vunpack.c.l.b16 %v245
      %v534 = vunpack.c.l.b16 %v246
      %v535 = vunpack.c.l.b16 %v247
      %v536 = vunpack.c.l.b16 %v248
      %v537 = vunpack.c.l.b16 %v249
      %v538 = vunpack.c.l.b16 %v250
      %v539 = vunpack.c.l.b16 %v251
      %v540 = vunpack.c.l.b16 %v252
      %v541 = vunpack.c.l.b16 %v253
      %v542 = vunpack.c.l.b16 %v254
      %v543 = vunpack.c.l.b16 %v255
      %v544 = vunpack.c.l.b16 %v256
      %v545 = vunpack.c.l.b16 %v257
      %v546 = vunpack.c.l.b16 %v258
      %v547 = vunpack.c.l.b16 %v259
      %v548 = vunpack.c.l.b16 %v260
      %v549 = vunpack.c.l.b16 %v261
      %v550 = vunpack.c.l.b16 %v262
      %v551 = vunpack.c.l.b16 %v263
      %v552 = vunpack.c.l.b16 %v264
      %v553 = vunpack.c.l.b16 %v265
      %v554 = vunpack.c.l.b16 %v266
      %v555 = vunpack.c.l.b16 %v267
      %v556 = vunpack.c.l.b16 %v268
      %v557 = vunpack.c.l.b16 %v269
      %v558 = vunpack.c.l.b16 %v270
      %v559 = vunpack.c.l.b16 %v271
      %v560 = vunpack.c.l.b16 %v272
      %v561 = vunpack.c.l.b16 %v273
      %v562 = vunpack.c.l.b16 %v274
      %v563 = vunpack.c.l.b16 %v275
      %v564 = vunpack.c.l.b16 %v276
      %v565 = vunpack.c.l.b16 %v277
      %v566 = vunpack.c.l.b16 %v278
      %v567 = vunpack.c.l.b16 %v279
      %v568 = vunpack.c.l.b16 %v280
      %v569 = vunpack.c.l.b16 %v281
      %v570 = vunpack.c.l.b16 %v282
      %v571 = vunpack.c.l.b16 %v283
      %v572 = vunpack.c.l.b16 %v284
      %v573 = vpack.c.b16 %v510, %v509
      %v574 = vpack.c.b16 %v512, %v511
      %v575 = vpack.c.b16 %v514, %v513
      %v576 = vpack.c.b16 %v516, %v515
      %v577 = vpack.c.b16 %v518, %v517
      %v578 = vpack.c.b16 %v520, %v519
      %v579 = vpack.c.b16 %v522, %v521
      %v580 = vpack.c.b16 %v524, %v523
      %v581 = vpack.c.b16 %v526, %v525
      %v582 = vpack.c.b16 %v528, %v527
      %v583 = vpack.c.b16 %v530, %v529
      %v584 = vpack.c.b16 %v532, %v531
      %v585 = vpack.c.b16 %v534, %v533
      %v586 = vpack.c.b16 %v536, %v535
      %v587 = vpack.c.b16 %v538, %v537
      %v588 = vpack.c.b16 %v540, %v539
      %v589 = vpack.c.b16 %v542, %v541
      %v590 = vpack.c.b16 %v544, %v543
      %v591 = vpack.c.b16 %v546, %v545
      %v592 = vpack.c.b16 %v548, %v547
      %v593 = vpack.c.b16 %v550, %v549
      %v594 = vpack.c.b16 %v552, %v551
      %v595 = vpack.c.b16 %v554, %v553
      %v596 = vpack.c.b16 %v556, %v555
      %v597 = vpack.c.b16 %v558, %v557
      %v598 = vpack.c.b16 %v560, %v559
      %v599 = vpack.c.b16 %v562, %v561
      %v600 = vpack.c.b16 %v564, %v563
      %v601 = vpack.c.b16 %v566, %v565
      %v602 = vpack.c.b16 %v568, %v567
      %v603 = vpack.c.b16 %v570, %v569
      %v604 = vpack.c.b16 %v572, %v571
      %637 = vmatprep.subr.bf16.mxu0 0
      %638 = vmatpush1.bf16.msra.mxu0 %v573
      %639 = vmatprep.subr.bf16.mxu0 0
      %640 = vmatpush1.bf16.msra.mxu0 %v574
      %641 = vmatprep.subr.bf16.mxu0 0
      %642 = vmatpush1.bf16.msra.mxu0 %v575
      %643 = vmatprep.subr.bf16.mxu0 0
      %644 = vmatpush1.bf16.msra.mxu0 %v576
      %645 = vmatprep.subr.bf16.mxu0 0
      %646 = vmatpush1.bf16.msra.mxu0 %v577
      %647 = vmatprep.subr.bf16.mxu0 0
      %648 = vmatpush1.bf16.msra.mxu0 %v578
      %649 = vmatprep.subr.bf16.mxu0 0
      %650 = vmatpush1.bf16.msra.mxu0 %v579
      %651 = vmatprep.subr.bf16.mxu0 0
      %652 = vmatpush1.bf16.msra.mxu0 %v580
      %653 = vmatprep.subr.bf16.mxu0 0
      %654 = vmatpush1.bf16.msra.mxu0 %v581
      %655 = vmatprep.subr.bf16.mxu0 0
      %656 = vmatpush1.bf16.msra.mxu0 %v582
      %657 = vmatprep.subr.bf16.mxu0 0
      %658 = vmatpush1.bf16.msra.mxu0 %v583
      %659 = vmatprep.subr.bf16.mxu0 0
      %660 = vmatpush1.bf16.msra.mxu0 %v584
      %661 = vmatprep.subr.bf16.mxu0 0
      %662 = vmatpush1.bf16.msra.mxu0 %v585
      %663 = vmatprep.subr.bf16.mxu0 0
      %664 = vmatpush1.bf16.msra.mxu0 %v586
      %665 = vmatprep.subr.bf16.mxu0 0
      %666 = vmatpush1.bf16.msra.mxu0 %v587
      %667 = vmatprep.subr.bf16.mxu0 0
      %668 = vmatpush1.bf16.msra.mxu0 %v588
      %669 = vmatprep.mubr.bf16.mxu0 %v382
      %670 = vmatmul.mubr.bf16.gmra.mrb[0].mxu0 %v381
      %v671 = vpop.f32.mrb[0].mxu0
      %v672 = vadd.f32 0.0, %v671
      %v673 = vpop.f32.mrb[0].mxu0
      %v674 = vpop.f32.mrb[0].mxu0
      %v675 = vadd.f32 0.0, %v674
      %v676 = vpop.f32.mrb[0].mxu0
      %677 = vmatprep.mubr.bf16.mxu0 %v386
      %678 = vmatmul.mubr.bf16.gmra.mrb[0].mxu0 %v385
      %v679 = vpop.f32.mrb[0].mxu0
      %v680 = vadd.f32 0.0, %v679
      %v681 = vpop.f32.mrb[0].mxu0
      %v682 = vpop.f32.mrb[0].mxu0
      %v683 = vadd.f32 0.0, %v682
      %v684 = vpop.f32.mrb[0].mxu0
      %685 = vmatprep.mubr.bf16.mxu0 %v390
      %686 = vmatmul.mubr.bf16.gmra.mrb[0].mxu0 %v389
      %v687 = vpop.f32.mrb[0].mxu0
      %v688 = vadd.f32 0.0, %v687
      %v689 = vpop.f32.mrb[0].mxu0
      %v690 = vpop.f32.mrb[0].mxu0
      %v691 = vadd.f32 0.0, %v690
      %v692 = vpop.f32.mrb[0].mxu0
      %693 = vmatprep.mubr.bf16.mxu0 %v394
      %694 = vmatmul.mubr.bf16.gmra.mrb[0].mxu0 %v393
      %v695 = vpop.f32.mrb[0].mxu0
      %v696 = vadd.f32 0.0, %v695
      %v697 = vpop.f32.mrb[0].mxu0
      %v698 = vpop.f32.mrb[0].mxu0
      %v699 = vadd.f32 0.0, %v698
      %v700 = vpop.f32.mrb[0].mxu0
      %701 = vmatprep.mubr.bf16.mxu0 %v398
      %702 = vmatmul.mubr.bf16.gmra.mrb[0].mxu0 %v397
      %v703 = vpop.f32.mrb[0].mxu0
      %v704 = vadd.f32 0.0, %v703
      %v705 = vpop.f32.mrb[0].mxu0
      %v706 = vpop.f32.mrb[0].mxu0
      %v707 = vadd.f32 0.0, %v706
      %v708 = vpop.f32.mrb[0].mxu0
      %709 = vmatprep.mubr.bf16.mxu0 %v402
      %710 = vmatmul.mubr.bf16.gmra.mrb[0].mxu0 %v401
      %v711 = vpop.f32.mrb[0].mxu0
      %v712 = vadd.f32 0.0, %v711
      %v713 = vpop.f32.mrb[0].mxu0
      %v714 = vpop.f32.mrb[0].mxu0
      %v715 = vadd.f32 0.0, %v714
      %v716 = vpop.f32.mrb[0].mxu0
      %717 = vmatprep.mubr.bf16.mxu0 %v406
      %718 = vmatmul.mubr.bf16.gmra.mrb[0].mxu0 %v405
      %v719 = vpop.f32.mrb[0].mxu0
      %v720 = vadd.f32 0.0, %v719
      %v721 = vpop.f32.mrb[0].mxu0
      %v722 = vpop.f32.mrb[0].mxu0
      %v723 = vadd.f32 0.0, %v722
      %v724 = vpop.f32.mrb[0].mxu0
      %725 = vmatprep.mubr.bf16.mxu0 %v410
      %726 = vmatmul.mubr.bf16.gmra.mrb[0].mxu0 %v409
      %v727 = vpop.f32.mrb[0].mxu0
      %v728 = vadd.f32 0.0, %v727
      %v729 = vpop.f32.mrb[0].mxu0
      %v730 = vpop.f32.mrb[0].mxu0
      %v731 = vadd.f32 0.0, %v730
      %v732 = vpop.f32.mrb[0].mxu0
      %733 = vdwg.mxu0
      %734 = vmatprep.subr.bf16.mxu0 0
      %735 = vmatpush1.bf16.msra.mxu0 %v589
      %736 = vmatprep.subr.bf16.mxu0 0
      %737 = vmatpush1.bf16.msra.mxu0 %v590
      %738 = vmatprep.subr.bf16.mxu0 0
      %739 = vmatpush1.bf16.msra.mxu0 %v591
      %740 = vmatprep.subr.bf16.mxu0 0
      %741 = vmatpush1.bf16.msra.mxu0 %v592
      %742 = vmatprep.subr.bf16.mxu0 0
      %743 = vmatpush1.bf16.msra.mxu0 %v593
      %744 = vmatprep.subr.bf16.mxu0 0
      %745 = vmatpush1.bf16.msra.mxu0 %v594
      %746 = vmatprep.subr.bf16.mxu0 0
      %747 = vmatpush1.bf16.msra.mxu0 %v595
      %748 = vmatprep.subr.bf16.mxu0 0
      %749 = vmatpush1.bf16.msra.mxu0 %v596
      %750 = vmatprep.subr.bf16.mxu0 0
      %751 = vmatpush1.bf16.msra.mxu0 %v597
      %752 = vmatprep.subr.bf16.mxu0 0
      %753 = vmatpush1.bf16.msra.mxu0 %v598
      %754 = vmatprep.subr.bf16.mxu0 0
      %755 = vmatpush1.bf16.msra.mxu0 %v599
      %756 = vmatprep.subr.bf16.mxu0 0
      %757 = vmatpush1.bf16.msra.mxu0 %v600
      %758 = vmatprep.subr.bf16.mxu0 0
      %759 = vmatpush1.bf16.msra.mxu0 %v601
      %760 = vmatprep.subr.bf16.mxu0 0
      %761 = vmatpush1.bf16.msra.mxu0 %v602
      %762 = vmatprep.subr.bf16.mxu0 0
      %763 = vmatpush1.bf16.msra.mxu0 %v603
      %764 = vmatprep.subr.bf16.mxu0 0
      %765 = vmatpush1.bf16.msra.mxu0 %v604
      %766 = vmatprep.mubr.bf16.mxu0 %v384
      %767 = vmatmul.mubr.bf16.gmra.mrb[0].mxu0 %v383
      %v768 = vpop.f32.mrb[0].mxu0
      %v769 = vadd.f32 %v672, %v768
      %v770 = vpop.f32.mrb[0].mxu0
      %v771 = vpop.f32.mrb[0].mxu0
      %v772 = vadd.f32 %v675, %v771
      %v773 = vpop.f32.mrb[0].mxu0
      %774 = vmatprep.mubr.bf16.mxu0 %v388
      %775 = vmatmul.mubr.bf16.gmra.mrb[0].mxu0 %v387
      %v776 = vpop.f32.mrb[0].mxu0
      %v777 = vadd.f32 %v680, %v776
      %v778 = vpop.f32.mrb[0].mxu0
      %v779 = vpop.f32.mrb[0].mxu0
      %v780 = vadd.f32 %v683, %v779
      %v781 = vpop.f32.mrb[0].mxu0
      %782 = vmatprep.mubr.bf16.mxu0 %v392
      %783 = vmatmul.mubr.bf16.gmra.mrb[0].mxu0 %v391
      %v784 = vpop.f32.mrb[0].mxu0
      %v785 = vadd.f32 %v688, %v784
      %v786 = vpop.f32.mrb[0].mxu0
      %v787 = vpop.f32.mrb[0].mxu0
      %v788 = vadd.f32 %v691, %v787
      %v789 = vpop.f32.mrb[0].mxu0
      %790 = vmatprep.mubr.bf16.mxu0 %v396
      %791 = vmatmul.mubr.bf16.gmra.mrb[0].mxu0 %v395
      %v792 = vpop.f32.mrb[0].mxu0
      %v793 = vadd.f32 %v696, %v792
      %v794 = vpop.f32.mrb[0].mxu0
      %v795 = vpop.f32.mrb[0].mxu0
      %v796 = vadd.f32 %v699, %v795
      %v797 = vpop.f32.mrb[0].mxu0
      %798 = vmatprep.mubr.bf16.mxu0 %v400
      %799 = vmatmul.mubr.bf16.gmra.mrb[0].mxu0 %v399
      %v800 = vpop.f32.mrb[0].mxu0
      %v801 = vadd.f32 %v704, %v800
      %v802 = vpop.f32.mrb[0].mxu0
      %v803 = vpop.f32.mrb[0].mxu0
      %v804 = vadd.f32 %v707, %v803
      %v805 = vpop.f32.mrb[0].mxu0
      %806 = vmatprep.mubr.bf16.mxu0 %v404
      %807 = vmatmul.mubr.bf16.gmra.mrb[0].mxu0 %v403
      %v808 = vpop.f32.mrb[0].mxu0
      %v809 = vadd.f32 %v712, %v808
      %v810 = vpop.f32.mrb[0].mxu0
      %v811 = vpop.f32.mrb[0].mxu0
      %v812 = vadd.f32 %v715, %v811
      %v813 = vpop.f32.mrb[0].mxu0
      %814 = vmatprep.mubr.bf16.mxu0 %v408
      %815 = vmatmul.mubr.bf16.gmra.mrb[0].mxu0 %v407
      %v816 = vpop.f32.mrb[0].mxu0
      %v817 = vadd.f32 %v720, %v816
      %v818 = vpop.f32.mrb[0].mxu0
      %v819 = vpop.f32.mrb[0].mxu0
      %v820 = vadd.f32 %v723, %v819
      %v821 = vpop.f32.mrb[0].mxu0
      %822 = vmatprep.mubr.bf16.mxu0 %v412
      %823 = vmatmul.mubr.bf16.gmra.mrb[0].mxu0 %v411
      %v824 = vpop.f32.mrb[0].mxu0
      %v825 = vadd.f32 %v728, %v824
      %v826 = vpop.f32.mrb[0].mxu0
      %v827 = vpop.f32.mrb[0].mxu0
      %v828 = vadd.f32 %v731, %v827
      %v829 = vpop.f32.mrb[0].mxu0
      %830 = vdwg.mxu0
      %831 = vst [vmem:[%s182] sm:$0xff] %v769
      %832 = vst [vmem:[%s182 + $0x8] sm:$0xff] %v772
      %833 = vst [vmem:[%s182 + $0x10] sm:$0xff] %v777
      %834 = vst [vmem:[%s182 + $0x18] sm:$0xff] %v780
      %835 = vst [vmem:[%s182 + $0x20] sm:$0xff] %v785
      %836 = vst [vmem:[%s182 + $0x28] sm:$0xff] %v788
      %837 = vst [vmem:[%s182 + $0x30] sm:$0xff] %v793
      %838 = vst [vmem:[%s182 + $0x38] sm:$0xff] %v796
      %839 = vst [vmem:[%s182 + $0x40] sm:$0xff] %v801
      %840 = vst [vmem:[%s182 + $0x48] sm:$0xff] %v804
      %841 = vst [vmem:[%s182 + $0x50] sm:$0xff] %v809
      %842 = vst [vmem:[%s182 + $0x58] sm:$0xff] %v812
      %843 = vst [vmem:[%s182 + $0x60] sm:$0xff] %v817
      %844 = vst [vmem:[%s182 + $0x68] sm:$0xff] %v820
      %845 = vst [vmem:[%s182 + $0x70] sm:$0xff] %v825
      %846 = vst [vmem:[%s182 + $0x78] sm:$0xff] %v828
      %v847 = vadd.f32 %v769, %v772
      %v848 = vadd.f32 %v847, %v777
      %v849 = vadd.f32 %v848, %v780
      %v850 = vadd.f32 %v849, %v785
      %v851 = vadd.f32 %v850, %v788
      %v852 = vadd.f32 %v851, %v793
      %v853 = vadd.f32 %v852, %v796
      %v854 = vadd.f32 %v853, %v801
      %v855 = vadd.f32 %v854, %v804
      %v856 = vadd.f32 %v855, %v809
      %v857 = vadd.f32 %v856, %v812
      %v858 = vadd.f32 %v857, %v817
      %v859 = vadd.f32 %v858, %v820
      %v860 = vadd.f32 %v859, %v825
      %v861 = vadd.f32 %v860, %v828
      %v862 = vrot.slane %v861, 4
      %v863 = vadd.f32 %v861, %v862
      %v864 = vrot.slane %v863, 2
      %v865 = vadd.f32 %v863, %v864
      %v866 = vrot.slane %v865, 1
      %v867 = vadd.f32 %v865, %v866
      %v868 = vmul.f32 %v769, %v769
      %v869 = vmul.f32 %v772, %v772
      %v870 = vmul.f32 %v777, %v777
      %v871 = vmul.f32 %v780, %v780
      %v872 = vmul.f32 %v785, %v785
      %v873 = vmul.f32 %v788, %v788
      %v874 = vmul.f32 %v793, %v793
      %v875 = vmul.f32 %v796, %v796
      %v876 = vmul.f32 %v801, %v801
      %v877 = vmul.f32 %v804, %v804
      %v878 = vmul.f32 %v809, %v809
      %v879 = vmul.f32 %v812, %v812
      %v880 = vmul.f32 %v817, %v817
      %v881 = vmul.f32 %v820, %v820
      %v882 = vmul.f32 %v825, %v825
      %v883 = vmul.f32 %v828, %v828
      %v884 = vadd.f32 %v868, %v869
      %v885 = vadd.f32 %v884, %v870
      %v886 = vadd.f32 %v885, %v871
      %v887 = vadd.f32 %v886, %v872
      %v888 = vadd.f32 %v887, %v873
      %v889 = vadd.f32 %v888, %v874
      %v890 = vadd.f32 %v889, %v875
      %v891 = vadd.f32 %v890, %v876
      %v892 = vadd.f32 %v891, %v877
      %v893 = vadd.f32 %v892, %v878
      %v894 = vadd.f32 %v893, %v879
      %v895 = vadd.f32 %v894, %v880
      %v896 = vadd.f32 %v895, %v881
      %v897 = vadd.f32 %v896, %v882
      %v898 = vadd.f32 %v897, %v883
      %v899 = vrot.slane %v898, 4
      %v900 = vadd.f32 %v898, %v899
      %v901 = vrot.slane %v900, 2
      %v902 = vadd.f32 %v900, %v901
      %v903 = vrot.slane %v902, 1
      %v904 = vadd.f32 %v902, %v903
      %v905 = vlaneseq
      %v906 = vshrl.u32 %v905, 7
      %vm907 = vcmp.eq.s32.totalorder %v906, 0
      %vm908 = vcmp.eq.s32.totalorder %v906, 1
      %v909 = vsel %vm908, %v904, 0.0
      %v910 = vsel %vm907, %v867, %v909
      %911 = vst [vmem:[%s187] sm:$0xff] %v910
      %s912 = smul.u32 16, %s15
      %p913 = scmp.lt.s32.totalorder %s912, 31
      %s914 = scalar_select %p913, %s912, 31
      %s915 = smul.addr %s914, 8
      %s916 = scalar_lea.vmem %s2, %s915
      %p917 = scmp.lt.s32.totalorder %s15, 1
      %s918 = scalar_select %p917, %s15, 1
      %s919 = smul.addr %s918, 8
      %s920 = scalar_lea.vmem %s3, %s919
      // Predicated region
      $region29: #{sparse_residual_block_pallas.5} parent=27 // pred_check
        %p921 = pneg %p80
      $region30: #{sparse_residual_block_pallas.5} parent=27 // pred_check_branch
        %923 = sbr.rel (%p921) target = $region32
      $region31: #{sparse_residual_block_pallas.5} parent=27 // pred_region
        %s924 = smul.u32 16, %s15
      $region32: #{sparse_residual_block_pallas.5} parent=27 // pred_fallthru
        _
      // Predicated region
      $region33: #{sparse_residual_block_pallas.5} parent=27 // pred_check
        %p925 = pneg %p106
      $region34: #{sparse_residual_block_pallas.5} parent=27 // pred_check_branch
        %927 = sbr.rel (%p925) target = $region36
      $region35: #{sparse_residual_block_pallas.5} parent=27 // pred_region
        _
      $region36: #{sparse_residual_block_pallas.5} parent=27 // pred_fallthru
        _
    $region28: #{sparse_residual_block_pallas.5} parent=5 // pred_fallthru
      _
    %p928 = scmp.le.s32.totalorder 2, %s10
    // Predicated region
    $region37: #{sparse_residual_block_pallas.5} parent=5 // pred_check
      %p929 = pneg %p928
    $region38: #{sparse_residual_block_pallas.5} parent=5 // pred_check_branch
      %931 = sbr.rel (%p929) target = $region40
    $region39: #{sparse_residual_block_pallas.5} parent=5 // pred_region
      %s932 = ssub.s32 %s10, 2
      // Predicated region
      $region41: #{sparse_residual_block_pallas.5} parent=39 // pred_check
        %p933 = pneg %p86
      $region42: #{sparse_residual_block_pallas.5} parent=39 // pred_check_branch
        %935 = sbr.rel (%p933) target = $region44
      $region43: #{sparse_residual_block_pallas.5} parent=39 // pred_region
        %s936 = smul.u32 16, %s16
        %p937 = scmp.lt.s32.totalorder %s936, 31
        %s938 = scalar_select %p937, %s936, 31
        %s939 = smul.addr %s938, 8
        %s940 = scalar_lea.vmem %s2, %s939
      $region44: #{sparse_residual_block_pallas.5} parent=39 // pred_fallthru
        _
      // Predicated region
      $region45: #{sparse_residual_block_pallas.5} parent=39 // pred_check
        %p941 = pneg %p112
      $region46: #{sparse_residual_block_pallas.5} parent=39 // pred_check_branch
        %943 = sbr.rel (%p941) target = $region48
      $region47: #{sparse_residual_block_pallas.5} parent=39 // pred_region
        %p944 = scmp.lt.s32.totalorder %s16, 1
        %s945 = scalar_select %p944, %s16, 1
        %s946 = smul.addr %s945, 8
        %s947 = scalar_lea.vmem %s3, %s946
      $region48: #{sparse_residual_block_pallas.5} parent=39 // pred_fallthru
        _
    $region40: #{sparse_residual_block_pallas.5} parent=5 // pred_fallthru
      _
  $region6: #{sparse_residual_block_pallas.5} parent=0 // loop_footer
    %s14 = sadd.s32 1, %s10
  $region7: #{sparse_residual_block_pallas.5} parent=0 // loop_footer_branch
    %9 = sbr.rel target = $region3
  $region8: #{sparse_residual_block_pallas.5} parent=0 // loop_exit
    _

// kernel: sparse_residual_block_pallas.7
$region0: #{sparse_residual_block_pallas.7}
  #allocation0 [shape = 'u32[]', space=smem, size = 0x4, offset = 0x4, fixed_abs, tag = 'smem constant byte address 0x4 - core index']
  #allocation1 [shape = 'u32[144,128]{1,0:T(1,128)}', space=vmem, size = 0x12000, scoped, tag = 'internal scratch']
  %s0 = inlined_call_operand.vmem [shape: bf16[256,896], index: 0, kind: input, shape index: {}]
  %s1 = inlined_call_operand.vmem [shape: bf16[896,128], index: 1, kind: input, shape index: {}]
  %s2 = inlined_call_operand.vmem [shape: f32[256,128], index: 2, kind: output, shape index: {0}]
  %s3 = inlined_call_operand.vmem [shape: f32[2,8,128], index: 3, kind: output, shape index: {1}]
  %4 = xla_tuple %s2, %s3
  %s5 = sld [smem:[#allocation0]]
  $region49: #{sparse_residual_block_pallas.7} parent=0
    _
  %s7 = ssub.s32 1, %s5
  %s8 = scalar_select 0, %s7, %s5
  loop: start=0, step=1, limit=4
  $region2: #{sparse_residual_block_pallas.7} parent=0 // loop_pre_header
    _
  $region3: #{sparse_residual_block_pallas.7} parent=0 // loop_header
    %s10 = sphi 0, %s14
    %p11 = scmp.ge.s32.totalorder %s10, 4
    %s20 = sphi 0, %s22
    %s23 = sphi 0, %s20
    %s24 = sphi 0, %s23
    %s40 = sphi 0, %s24
    %s44 = sphi 0, %s44
    %s46 = sphi 0, %s44
    %s47 = sphi 0, %s46
    %s61 = sphi 0, %s47
    %s67 = sphi 0, %s69
    %s70 = sphi 0, %s67
    %s71 = sphi 0, %s70
    %s87 = sphi 0, %s71
    %s93 = sphi 0, %s95
    %s96 = sphi 0, %s93
    %s97 = sphi 0, %s96
    %s113 = sphi 0, %s97
  $region4: #{sparse_residual_block_pallas.7} parent=0 // loop_header_branch
    %13 = sbr.rel (%p11) target = $region8
  $region5: #{sparse_residual_block_pallas.7} parent=0 // loop_body
    %s15 = ssub.s32 %s10, 1
    %s16 = ssub.s32 %s10, 2
    %s17 = sadd.s32 %s10, 1
    %s18 = ssub.s32 %s10, %s17
    %p19 = scmp.eq.s32.totalorder %s18, 0
    %s21 = sadd.s32 %s20, 1
    %s22 = scalar_select %p19, %s20, %s21
    %p25 = pneg %p19
    %p26 = scmp.eq.s32.totalorder %s10, 1
    %p27 = por %p25, %p26
    %p28 = scmp.ne.s32.totalorder %s20, %s23
    %p29 = scmp.eq.s32.totalorder %s10, 0
    %p30 = por %p28, %p29
    %p31 = scmp.ne.s32.totalorder %s20, %s23
    %p32 = scmp.eq.s32.totalorder %s15, 1
    %p33 = por %p31, %p32
    %p34 = scmp.ne.s32.totalorder %s23, %s24
    %p35 = scmp.eq.s32.totalorder %s15, 0
    %p36 = por %p34, %p35
    %p37 = scmp.ne.s32.totalorder %s23, %s24
    %p38 = scmp.eq.s32.totalorder %s16, 1
    %p39 = por %p37, %p38
    %p41 = scmp.ne.s32.totalorder %s24, %s40
    %p42 = scmp.eq.s32.totalorder %s16, 0
    %p43 = por %p41, %p42
    %s45 = sadd.s32 %s44, 1
    %p48 = scmp.eq.s32.totalorder %s10, 1
    %p49 = scmp.ne.s32.totalorder %s44, %s46
    %p50 = scmp.eq.s32.totalorder %s10, 0
    %p51 = por %p49, %p50
    %p52 = scmp.ne.s32.totalorder %s44, %s46
    %p53 = scmp.eq.s32.totalorder %s15, 1
    %p54 = por %p52, %p53
    %p55 = scmp.ne.s32.totalorder %s46, %s47
    %p56 = scmp.eq.s32.totalorder %s15, 0
    %p57 = por %p55, %p56
    %p58 = scmp.ne.s32.totalorder %s46, %s47
    %p59 = scmp.eq.s32.totalorder %s16, 1
    %p60 = por %p58, %p59
    %p62 = scmp.ne.s32.totalorder %s47, %s61
    %p63 = scmp.eq.s32.totalorder %s16, 0
    %p64 = por %p62, %p63
    %s65 = ssub.s32 %s10, %s17
    %p66 = scmp.eq.s32.totalorder %s65, 0
    %s68 = sadd.s32 %s67, 1
    %s69 = scalar_select %p66, %s67, %s68
    %p72 = pneg %p66
    %p73 = scmp.eq.s32.totalorder %s10, 1
    %p74 = por %p72, %p73
    %p75 = scmp.ne.s32.totalorder %s67, %s70
    %p76 = scmp.eq.s32.totalorder %s10, 0
    %p77 = por %p75, %p76
    %p78 = scmp.ne.s32.totalorder %s67, %s70
    %p79 = scmp.eq.s32.totalorder %s15, 1
    %p80 = por %p78, %p79
    %p81 = scmp.ne.s32.totalorder %s70, %s71
    %p82 = scmp.eq.s32.totalorder %s15, 0
    %p83 = por %p81, %p82
    %p84 = scmp.ne.s32.totalorder %s70, %s71
    %p85 = scmp.eq.s32.totalorder %s16, 1
    %p86 = por %p84, %p85
    %p88 = scmp.ne.s32.totalorder %s71, %s87
    %p89 = scmp.eq.s32.totalorder %s16, 0
    %p90 = por %p88, %p89
    %s91 = ssub.s32 %s10, %s17
    %p92 = scmp.eq.s32.totalorder %s91, 0
    %s94 = sadd.s32 %s93, 1
    %s95 = scalar_select %p92, %s93, %s94
    %p98 = pneg %p92
    %p99 = scmp.eq.s32.totalorder %s10, 1
    %p100 = por %p98, %p99
    %p101 = scmp.ne.s32.totalorder %s93, %s96
    %p102 = scmp.eq.s32.totalorder %s10, 0
    %p103 = por %p101, %p102
    %p104 = scmp.ne.s32.totalorder %s93, %s96
    %p105 = scmp.eq.s32.totalorder %s15, 1
    %p106 = por %p104, %p105
    %p107 = scmp.ne.s32.totalorder %s96, %s97
    %p108 = scmp.eq.s32.totalorder %s15, 0
    %p109 = por %p107, %p108
    %p110 = scmp.ne.s32.totalorder %s96, %s97
    %p111 = scmp.eq.s32.totalorder %s16, 1
    %p112 = por %p110, %p111
    %p114 = scmp.ne.s32.totalorder %s97, %s113
    %p115 = scmp.eq.s32.totalorder %s16, 0
    %p116 = por %p114, %p115
    %p117 = scmp.le.s32.totalorder 1, %s10
    %p118 = scmp.lt.s32.totalorder %s10, 3
    %p119 = pnand %p117, %p118
    %p120 = pneg %p119
    // Predicated region
    $region9: #{sparse_residual_block_pallas.7} parent=5 // pred_check
      _
    $region10: #{sparse_residual_block_pallas.7} parent=5 // pred_check_branch
      %122 = sbr.rel (%p119) target = $region12
    $region11: #{sparse_residual_block_pallas.7} parent=5 // pred_region
      %s123 = ssub.s32 %s10, 1
      // Predicated region
      $region13: #{sparse_residual_block_pallas.7} parent=11 // pred_check
        %p124 = pneg %p57
      $region14: #{sparse_residual_block_pallas.7} parent=11 // pred_check_branch
        %126 = sbr.rel (%p124) target = $region16
      $region15: #{sparse_residual_block_pallas.7} parent=11 // pred_region
        _
      $region16: #{sparse_residual_block_pallas.7} parent=11 // pred_fallthru
        _
    $region12: #{sparse_residual_block_pallas.7} parent=5 // pred_fallthru
      _
    %p127 = scmp.lt.s32.totalorder %s10, 2
    // Predicated region
    $region17: #{sparse_residual_block_pallas.7} parent=5 // pred_check
      %p128 = pneg %p127
    $region18: #{sparse_residual_block_pallas.7} parent=5 // pred_check_branch
      %130 = sbr.rel (%p128) target = $region20
    $region19: #{sparse_residual_block_pallas.7} parent=5 // pred_region
      // Predicated region
      $region21: #{sparse_residual_block_pallas.7} parent=19 // pred_check
        %p131 = pneg %p30
      $region22: #{sparse_residual_block_pallas.7} parent=19 // pred_check_branch
        %133 = sbr.rel (%p131) target = $region24
      $region23: #{sparse_residual_block_pallas.7} parent=19 // pred_region
        %s134 = smul.u32 16, %s10
        %p135 = scmp.lt.s32.totalorder %s134, 31
        %s136 = scalar_select %p135, %s134, 31
        %s137 = smul.addr %s136, 7
        %s138 = smul.addr %s137, 4
        %s139 = scalar_lea.vmem %s0, %s138
        %s140 = smul.u32 16, %s10
      $region24: #{sparse_residual_block_pallas.7} parent=19 // pred_fallthru
        _
    $region20: #{sparse_residual_block_pallas.7} parent=5 // pred_fallthru
      _
    %p141 = scmp.le.s32.totalorder 1, %s10
    %p142 = scmp.lt.s32.totalorder %s10, 3
    %p143 = pnand %p141, %p142
    %p144 = pneg %p143
    // Predicated region
    $region25: #{sparse_residual_block_pallas.7} parent=5 // pred_check
      _
    $region26: #{sparse_residual_block_pallas.7} parent=5 // pred_check_branch
      %146 = sbr.rel (%p143) target = $region28
    $region27: #{sparse_residual_block_pallas.7} parent=5 // pred_region
      %s147 = ssub.s32 %s10, 1
      %s148 = smul.u32 16, %s15
      %p149 = scmp.lt.s32.totalorder %s148, 31
      %s150 = scalar_select %p149, %s148, 31
      %s151 = smul.addr %s150, 7
      %s152 = smul.addr %s151, 4
      %s153 = scalar_lea.vmem %s0, %s152
      %p154 = pneg %p36
      %p155 = pneg %p33
      %p156 = pneg %p57
      %p157 = pneg %p54
      %p158 = pneg %p83
      %p159 = pneg %p80
      %s160 = smul.u32 16, %s15
      %p161 = scmp.lt.s32.totalorder %s160, 31
      %s162 = scalar_select %p161, %s160, 31
      %s163 = smul.addr %s162, 8
      %s164 = scalar_lea.vmem %s2, %s163
      %p165 = pneg %p109
      %p166 = pneg %p106
      %p167 = scmp.lt.s32.totalorder %s15, 1
      %s168 = scalar_select %p167, %s15, 1
      %s169 = smul.addr %s168, 8
      %s170 = scalar_lea.vmem %s3, %s169
      %s171 = smul.u32 16, %s15
      %p172 = scmp.lt.s32.totalorder %s171, 31
      %s173 = scalar_select %p172, %s171, 31
      %s174 = smul.addr %s173, 7
      %s175 = smul.addr %s174, 4
      %s176 = scalar_lea.vmem %s0, %s175
      %s177 = smul.u32 16, %s15
      %s178 = smul.u32 16, %s15
      %p179 = scmp.lt.s32.totalorder %s178, 31
      %s180 = scalar_select %p179, %s178, 31
      %s181 = smul.addr %s180, 8
      %s182 = scalar_lea.vmem %s2, %s181
      %s183 = smul.u32 16, %s15
      %p184 = scmp.lt.s32.totalorder %s15, 1
      %s185 = scalar_select %p184, %s15, 1
      %s186 = smul.addr %s185, 8
      %s187 = scalar_lea.vmem %s3, %s186
      %v189 = vld [vmem:[%s176] sm:$0xff]
      %v190 = vld [vmem:[%s176 + $0x8] sm:$0xff]
      %v191 = vld [vmem:[%s176 + $0x10] sm:$0xff]
      %v192 = vld [vmem:[%s176 + $0x18] sm:$0xf]
      %v193 = vld [vmem:[%s176 + $0x1c] sm:$0xff]
      %v194 = vld [vmem:[%s176 + $0x24] sm:$0xff]
      %v195 = vld [vmem:[%s176 + $0x2c] sm:$0xff]
      %v196 = vld [vmem:[%s176 + $0x34] sm:$0xf]
      %v197 = vld [vmem:[%s176 + $0x38] sm:$0xff]
      %v198 = vld [vmem:[%s176 + $0x40] sm:$0xff]
      %v199 = vld [vmem:[%s176 + $0x48] sm:$0xff]
      %v200 = vld [vmem:[%s176 + $0x50] sm:$0xf]
      %v201 = vld [vmem:[%s176 + $0x54] sm:$0xff]
      %v202 = vld [vmem:[%s176 + $0x5c] sm:$0xff]
      %v203 = vld [vmem:[%s176 + $0x64] sm:$0xff]
      %v204 = vld [vmem:[%s176 + $0x6c] sm:$0xf]
      %v205 = vld [vmem:[%s176 + $0x70] sm:$0xff]
      %v206 = vld [vmem:[%s176 + $0x78] sm:$0xff]
      %v207 = vld [vmem:[%s176 + $0x80] sm:$0xff]
      %v208 = vld [vmem:[%s176 + $0x88] sm:$0xf]
      %v209 = vld [vmem:[%s176 + $0x8c] sm:$0xff]
      %v210 = vld [vmem:[%s176 + $0x94] sm:$0xff]
      %v211 = vld [vmem:[%s176 + $0x9c] sm:$0xff]
      %v212 = vld [vmem:[%s176 + $0xa4] sm:$0xf]
      %v213 = vld [vmem:[%s176 + $0xa8] sm:$0xff]
      %v214 = vld [vmem:[%s176 + $0xb0] sm:$0xff]
      %v215 = vld [vmem:[%s176 + $0xb8] sm:$0xff]
      %v216 = vld [vmem:[%s176 + $0xc0] sm:$0xf]
      %v217 = vld [vmem:[%s176 + $0xc4] sm:$0xff]
      %v218 = vld [vmem:[%s176 + $0xcc] sm:$0xff]
      %v219 = vld [vmem:[%s176 + $0xd4] sm:$0xff]
      %v220 = vld [vmem:[%s176 + $0xdc] sm:$0xf]
      %v221 = vld [vmem:[%s176 + $0xe0] sm:$0xff]
      %v222 = vld [vmem:[%s176 + $0xe8] sm:$0xff]
      %v223 = vld [vmem:[%s176 + $0xf0] sm:$0xff]
      %v224 = vld [vmem:[%s176 + $0xf8] sm:$0xf]
      %v225 = vld [vmem:[%s176 + $0xfc] sm:$0xff]
      %v226 = vld [vmem:[%s176 + $0x104] sm:$0xff]
      %v227 = vld [vmem:[%s176 + $0x10c] sm:$0xff]
      %v228 = vld [vmem:[%s176 + $0x114] sm:$0xf]
      %v229 = vld [vmem:[%s176 + $0x118] sm:$0xff]
      %v230 = vld [vmem:[%s176 + $0x120] sm:$0xff]
      %v231 = vld [vmem:[%s176 + $0x128] sm:$0xff]
      %v232 = vld [vmem:[%s176 + $0x130] sm:$0xf]
      %v233 = vld [vmem:[%s176 + $0x134] sm:$0xff]
      %v234 = vld [vmem:[%s176 + $0x13c] sm:$0xff]
      %v235 = vld [vmem:[%s176 + $0x144] sm:$0xff]
      %v236 = vld [vmem:[%s176 + $0x14c] sm:$0xf]
      %v237 = vld [vmem:[%s176 + $0x150] sm:$0xff]
      %v238 = vld [vmem:[%s176 + $0x158] sm:$0xff]
      %v239 = vld [vmem:[%s176 + $0x160] sm:$0xff]
      %v240 = vld [vmem:[%s176 + $0x168] sm:$0xf]
      %v241 = vld [vmem:[%s176 + $0x16c] sm:$0xff]
      %v242 = vld [vmem:[%s176 + $0x174] sm:$0xff]
      %v243 = vld [vmem:[%s176 + $0x17c] sm:$0xff]
      %v244 = vld [vmem:[%s176 + $0x184] sm:$0xf]
      %v245 = vld [vmem:[%s176 + $0x188] sm:$0xff]
      %v246 = vld [vmem:[%s176 + $0x190] sm:$0xff]
      %v247 = vld [vmem:[%s176 + $0x198] sm:$0xff]
      %v248 = vld [vmem:[%s176 + $0x1a0] sm:$0xf]
      %v249 = vld [vmem:[%s176 + $0x1a4] sm:$0xff]
      %v250 = vld [vmem:[%s176 + $0x1ac] sm:$0xff]
      %v251 = vld [vmem:[%s176 + $0x1b4] sm:$0xff]
      %v252 = vld [vmem:[%s176 + $0x1bc] sm:$0xf]
      %v253 = vld [vmem:[%s1] sm:$0xf]
      %v254 = vld [vmem:[%s1 + $0x4] sm:$0xf]
      %v255 = vld [vmem:[%s1 + $0x8] sm:$0xf]
      %v256 = vld [vmem:[%s1 + $0xc] sm:$0xf]
      %v257 = vld [vmem:[%s1 + $0x10] sm:$0xf]
      %v258 = vld [vmem:[%s1 + $0x14] sm:$0xf]
      %v259 = vld [vmem:[%s1 + $0x18] sm:$0xf]
      %v260 = vld [vmem:[%s1 + $0x1c] sm:$0xf]
      %v261 = vld [vmem:[%s1 + $0x20] sm:$0xf]
      %v262 = vld [vmem:[%s1 + $0x24] sm:$0xf]
      %v263 = vld [vmem:[%s1 + $0x28] sm:$0xf]
      %v264 = vld [vmem:[%s1 + $0x2c] sm:$0xf]
      %v265 = vld [vmem:[%s1 + $0x30] sm:$0xf]
      %v266 = vld [vmem:[%s1 + $0x34] sm:$0xf]
      %v267 = vld [vmem:[%s1 + $0x38] sm:$0xf]
      %v268 = vld [vmem:[%s1 + $0x3c] sm:$0xf]
      %v269 = vld [vmem:[%s1 + $0x40] sm:$0xf]
      %v270 = vld [vmem:[%s1 + $0x44] sm:$0xf]
      %v271 = vld [vmem:[%s1 + $0x48] sm:$0xf]
      %v272 = vld [vmem:[%s1 + $0x4c] sm:$0xf]
      %v273 = vld [vmem:[%s1 + $0x50] sm:$0xf]
      %v274 = vld [vmem:[%s1 + $0x54] sm:$0xf]
      %v275 = vld [vmem:[%s1 + $0x58] sm:$0xf]
      %v276 = vld [vmem:[%s1 + $0x5c] sm:$0xf]
      %v277 = vld [vmem:[%s1 + $0x60] sm:$0xf]
      %v278 = vld [vmem:[%s1 + $0x64] sm:$0xf]
      %v279 = vld [vmem:[%s1 + $0x68] sm:$0xf]
      %v280 = vld [vmem:[%s1 + $0x6c] sm:$0xf]
      %v281 = vld [vmem:[%s1 + $0x70] sm:$0xf]
      %v282 = vld [vmem:[%s1 + $0x74] sm:$0xf]
      %v283 = vld [vmem:[%s1 + $0x78] sm:$0xf]
      %v284 = vld [vmem:[%s1 + $0x7c] sm:$0xf]
      %v285 = vld [vmem:[%s1 + $0x80] sm:$0xf]
      %v286 = vld [vmem:[%s1 + $0x84] sm:$0xf]
      %v287 = vld [vmem:[%s1 + $0x88] sm:$0xf]
      %v288 = vld [vmem:[%s1 + $0x8c] sm:$0xf]
      %v289 = vld [vmem:[%s1 + $0x90] sm:$0xf]
      %v290 = vld [vmem:[%s1 + $0x94] sm:$0xf]
      %v291 = vld [vmem:[%s1 + $0x98] sm:$0xf]
      %v292 = vld [vmem:[%s1 + $0x9c] sm:$0xf]
      %v293 = vld [vmem:[%s1 + $0xa0] sm:$0xf]
      %v294 = vld [vmem:[%s1 + $0xa4] sm:$0xf]
      %v295 = vld [vmem:[%s1 + $0xa8] sm:$0xf]
      %v296 = vld [vmem:[%s1 + $0xac] sm:$0xf]
      %v297 = vld [vmem:[%s1 + $0xb0] sm:$0xf]
      %v298 = vld [vmem:[%s1 + $0xb4] sm:$0xf]
      %v299 = vld [vmem:[%s1 + $0xb8] sm:$0xf]
      %v300 = vld [vmem:[%s1 + $0xbc] sm:$0xf]
      %v301 = vld [vmem:[%s1 + $0xc0] sm:$0xf]
      %v302 = vld [vmem:[%s1 + $0xc4] sm:$0xf]
      %v303 = vld [vmem:[%s1 + $0xc8] sm:$0xf]
      %v304 = vld [vmem:[%s1 + $0xcc] sm:$0xf]
      %v305 = vld [vmem:[%s1 + $0xd0] sm:$0xf]
      %v306 = vld [vmem:[%s1 + $0xd4] sm:$0xf]
      %v307 = vld [vmem:[%s1 + $0xd8] sm:$0xf]
      %v308 = vld [vmem:[%s1 + $0xdc] sm:$0xf]
      %v309 = vld [vmem:[%s1 + $0xe0] sm:$0xf]
      %v310 = vld [vmem:[%s1 + $0xe4] sm:$0xf]
      %v311 = vld [vmem:[%s1 + $0xe8] sm:$0xf]
      %v312 = vld [vmem:[%s1 + $0xec] sm:$0xf]
      %v313 = vld [vmem:[%s1 + $0xf0] sm:$0xf]
      %v314 = vld [vmem:[%s1 + $0xf4] sm:$0xf]
      %v315 = vld [vmem:[%s1 + $0xf8] sm:$0xf]
      %v316 = vld [vmem:[%s1 + $0xfc] sm:$0xf]
      %v317 = vld [vmem:[%s1 + $0x100] sm:$0xf]
      %v318 = vld [vmem:[%s1 + $0x104] sm:$0xf]
      %v319 = vld [vmem:[%s1 + $0x108] sm:$0xf]
      %v320 = vld [vmem:[%s1 + $0x10c] sm:$0xf]
      %v321 = vld [vmem:[%s1 + $0x110] sm:$0xf]
      %v322 = vld [vmem:[%s1 + $0x114] sm:$0xf]
      %v323 = vld [vmem:[%s1 + $0x118] sm:$0xf]
      %v324 = vld [vmem:[%s1 + $0x11c] sm:$0xf]
      %v325 = vld [vmem:[%s1 + $0x120] sm:$0xf]
      %v326 = vld [vmem:[%s1 + $0x124] sm:$0xf]
      %v327 = vld [vmem:[%s1 + $0x128] sm:$0xf]
      %v328 = vld [vmem:[%s1 + $0x12c] sm:$0xf]
      %v329 = vld [vmem:[%s1 + $0x130] sm:$0xf]
      %v330 = vld [vmem:[%s1 + $0x134] sm:$0xf]
      %v331 = vld [vmem:[%s1 + $0x138] sm:$0xf]
      %v332 = vld [vmem:[%s1 + $0x13c] sm:$0xf]
      %v333 = vld [vmem:[%s1 + $0x140] sm:$0xf]
      %v334 = vld [vmem:[%s1 + $0x144] sm:$0xf]
      %v335 = vld [vmem:[%s1 + $0x148] sm:$0xf]
      %v336 = vld [vmem:[%s1 + $0x14c] sm:$0xf]
      %v337 = vld [vmem:[%s1 + $0x150] sm:$0xf]
      %v338 = vld [vmem:[%s1 + $0x154] sm:$0xf]
      %v339 = vld [vmem:[%s1 + $0x158] sm:$0xf]
      %v340 = vld [vmem:[%s1 + $0x15c] sm:$0xf]
      %v341 = vld [vmem:[%s1 + $0x160] sm:$0xf]
      %v342 = vld [vmem:[%s1 + $0x164] sm:$0xf]
      %v343 = vld [vmem:[%s1 + $0x168] sm:$0xf]
      %v344 = vld [vmem:[%s1 + $0x16c] sm:$0xf]
      %v345 = vld [vmem:[%s1 + $0x170] sm:$0xf]
      %v346 = vld [vmem:[%s1 + $0x174] sm:$0xf]
      %v347 = vld [vmem:[%s1 + $0x178] sm:$0xf]
      %v348 = vld [vmem:[%s1 + $0x17c] sm:$0xf]
      %v349 = vld [vmem:[%s1 + $0x180] sm:$0xf]
      %v350 = vld [vmem:[%s1 + $0x184] sm:$0xf]
      %v351 = vld [vmem:[%s1 + $0x188] sm:$0xf]
      %v352 = vld [vmem:[%s1 + $0x18c] sm:$0xf]
      %v353 = vld [vmem:[%s1 + $0x190] sm:$0xf]
      %v354 = vld [vmem:[%s1 + $0x194] sm:$0xf]
      %v355 = vld [vmem:[%s1 + $0x198] sm:$0xf]
      %v356 = vld [vmem:[%s1 + $0x19c] sm:$0xf]
      %v357 = vld [vmem:[%s1 + $0x1a0] sm:$0xf]
      %v358 = vld [vmem:[%s1 + $0x1a4] sm:$0xf]
      %v359 = vld [vmem:[%s1 + $0x1a8] sm:$0xf]
      %v360 = vld [vmem:[%s1 + $0x1ac] sm:$0xf]
      %v361 = vld [vmem:[%s1 + $0x1b0] sm:$0xf]
      %v362 = vld [vmem:[%s1 + $0x1b4] sm:$0xf]
      %v363 = vld [vmem:[%s1 + $0x1b8] sm:$0xf]
      %v364 = vld [vmem:[%s1 + $0x1bc] sm:$0xf]
      %v429 = vunpack.c.l.b16 %v189
      %v430 = vunpack.c.h.b16 %v189
      %v431 = vunpack.c.l.b16 %v190
      %v432 = vunpack.c.h.b16 %v190
      %v433 = vunpack.c.l.b16 %v191
      %v434 = vunpack.c.h.b16 %v191
      %v435 = vunpack.c.l.b16 %v192
      %v436 = vunpack.c.l.b16 %v193
      %v437 = vunpack.c.h.b16 %v193
      %v438 = vunpack.c.l.b16 %v194
      %v439 = vunpack.c.h.b16 %v194
      %v440 = vunpack.c.l.b16 %v195
      %v441 = vunpack.c.h.b16 %v195
      %v442 = vunpack.c.l.b16 %v196
      %v443 = vunpack.c.l.b16 %v197
      %v444 = vunpack.c.h.b16 %v197
      %v445 = vunpack.c.l.b16 %v198
      %v446 = vunpack.c.h.b16 %v198
      %v447 = vunpack.c.l.b16 %v199
      %v448 = vunpack.c.h.b16 %v199
      %v449 = vunpack.c.l.b16 %v200
      %v450 = vunpack.c.l.b16 %v201
      %v451 = vunpack.c.h.b16 %v201
      %v452 = vunpack.c.l.b16 %v202
      %v453 = vunpack.c.h.b16 %v202
      %v454 = vunpack.c.l.b16 %v203
      %v455 = vunpack.c.h.b16 %v203
      %v456 = vunpack.c.l.b16 %v204
      %v457 = vunpack.c.l.b16 %v205
      %v458 = vunpack.c.h.b16 %v205
      %v459 = vunpack.c.l.b16 %v206
      %v460 = vunpack.c.h.b16 %v206
      %v461 = vunpack.c.l.b16 %v207
      %v462 = vunpack.c.h.b16 %v207
      %v463 = vunpack.c.l.b16 %v208
      %v464 = vunpack.c.l.b16 %v209
      %v465 = vunpack.c.h.b16 %v209
      %v466 = vunpack.c.l.b16 %v210
      %v467 = vunpack.c.h.b16 %v210
      %v468 = vunpack.c.l.b16 %v211
      %v469 = vunpack.c.h.b16 %v211
      %v470 = vunpack.c.l.b16 %v212
      %v471 = vunpack.c.l.b16 %v213
      %v472 = vunpack.c.h.b16 %v213
      %v473 = vunpack.c.l.b16 %v214
      %v474 = vunpack.c.h.b16 %v214
      %v475 = vunpack.c.l.b16 %v215
      %v476 = vunpack.c.h.b16 %v215
      %v477 = vunpack.c.l.b16 %v216
      %v478 = vunpack.c.l.b16 %v217
      %v479 = vunpack.c.h.b16 %v217
      %v480 = vunpack.c.l.b16 %v218
      %v481 = vunpack.c.h.b16 %v218
      %v482 = vunpack.c.l.b16 %v219
      %v483 = vunpack.c.h.b16 %v219
      %v484 = vunpack.c.l.b16 %v220
      %v485 = vunpack.c.l.b16 %v221
      %v486 = vunpack.c.h.b16 %v221
      %v487 = vunpack.c.l.b16 %v222
      %v488 = vunpack.c.h.b16 %v222
      %v489 = vunpack.c.l.b16 %v223
      %v490 = vunpack.c.h.b16 %v223
      %v491 = vunpack.c.l.b16 %v224
      %v492 = vunpack.c.l.b16 %v225
      %v493 = vunpack.c.h.b16 %v225
      %v494 = vunpack.c.l.b16 %v226
      %v495 = vunpack.c.h.b16 %v226
      %v496 = vunpack.c.l.b16 %v227
      %v497 = vunpack.c.h.b16 %v227
      %v498 = vunpack.c.l.b16 %v228
      %v499 = vunpack.c.l.b16 %v229
      %v500 = vunpack.c.h.b16 %v229
      %v501 = vunpack.c.l.b16 %v230
      %v502 = vunpack.c.h.b16 %v230
      %v503 = vunpack.c.l.b16 %v231
      %v504 = vunpack.c.h.b16 %v231
      %v505 = vunpack.c.l.b16 %v232
      %v506 = vunpack.c.l.b16 %v233
      %v507 = vunpack.c.h.b16 %v233
      %v508 = vunpack.c.l.b16 %v234
      %v509 = vunpack.c.h.b16 %v234
      %v510 = vunpack.c.l.b16 %v235
      %v511 = vunpack.c.h.b16 %v235
      %v512 = vunpack.c.l.b16 %v236
      %v513 = vunpack.c.l.b16 %v237
      %v514 = vunpack.c.h.b16 %v237
      %v515 = vunpack.c.l.b16 %v238
      %v516 = vunpack.c.h.b16 %v238
      %v517 = vunpack.c.l.b16 %v239
      %v518 = vunpack.c.h.b16 %v239
      %v519 = vunpack.c.l.b16 %v240
      %v520 = vunpack.c.l.b16 %v241
      %v521 = vunpack.c.h.b16 %v241
      %v522 = vunpack.c.l.b16 %v242
      %v523 = vunpack.c.h.b16 %v242
      %v524 = vunpack.c.l.b16 %v243
      %v525 = vunpack.c.h.b16 %v243
      %v526 = vunpack.c.l.b16 %v244
      %v527 = vunpack.c.l.b16 %v245
      %v528 = vunpack.c.h.b16 %v245
      %v529 = vunpack.c.l.b16 %v246
      %v530 = vunpack.c.h.b16 %v246
      %v531 = vunpack.c.l.b16 %v247
      %v532 = vunpack.c.h.b16 %v247
      %v533 = vunpack.c.l.b16 %v248
      %v534 = vunpack.c.l.b16 %v249
      %v535 = vunpack.c.h.b16 %v249
      %v536 = vunpack.c.l.b16 %v250
      %v537 = vunpack.c.h.b16 %v250
      %v538 = vunpack.c.l.b16 %v251
      %v539 = vunpack.c.h.b16 %v251
      %v540 = vunpack.c.l.b16 %v252
      %v541 = vpack.c.b16 %v436, %v429
      %v542 = vpack.c.b16 %v437, %v430
      %v543 = vpack.c.b16 %v438, %v431
      %v544 = vpack.c.b16 %v439, %v432
      %v545 = vpack.c.b16 %v440, %v433
      %v546 = vpack.c.b16 %v441, %v434
      %v547 = vpack.c.b16 %v442, %v435
      %v548 = vpack.c.b16 %v450, %v443
      %v549 = vpack.c.b16 %v451, %v444
      %v550 = vpack.c.b16 %v452, %v445
      %v551 = vpack.c.b16 %v453, %v446
      %v552 = vpack.c.b16 %v454, %v447
      %v553 = vpack.c.b16 %v455, %v448
      %v554 = vpack.c.b16 %v456, %v449
      %v555 = vpack.c.b16 %v464, %v457
      %v556 = vpack.c.b16 %v465, %v458
      %v557 = vpack.c.b16 %v466, %v459
      %v558 = vpack.c.b16 %v467, %v460
      %v559 = vpack.c.b16 %v468, %v461
      %v560 = vpack.c.b16 %v469, %v462
      %v561 = vpack.c.b16 %v470, %v463
      %v562 = vpack.c.b16 %v478, %v471
      %v563 = vpack.c.b16 %v479, %v472
      %v564 = vpack.c.b16 %v480, %v473
      %v565 = vpack.c.b16 %v481, %v474
      %v566 = vpack.c.b16 %v482, %v475
      %v567 = vpack.c.b16 %v483, %v476
      %v568 = vpack.c.b16 %v484, %v477
      %v569 = vpack.c.b16 %v492, %v485
      %v570 = vpack.c.b16 %v493, %v486
      %v571 = vpack.c.b16 %v494, %v487
      %v572 = vpack.c.b16 %v495, %v488
      %v573 = vpack.c.b16 %v496, %v489
      %v574 = vpack.c.b16 %v497, %v490
      %v575 = vpack.c.b16 %v498, %v491
      %v576 = vpack.c.b16 %v506, %v499
      %v577 = vpack.c.b16 %v507, %v500
      %v578 = vpack.c.b16 %v508, %v501
      %v579 = vpack.c.b16 %v509, %v502
      %v580 = vpack.c.b16 %v510, %v503
      %v581 = vpack.c.b16 %v511, %v504
      %v582 = vpack.c.b16 %v512, %v505
      %v583 = vpack.c.b16 %v520, %v513
      %v584 = vpack.c.b16 %v521, %v514
      %v585 = vpack.c.b16 %v522, %v515
      %v586 = vpack.c.b16 %v523, %v516
      %v587 = vpack.c.b16 %v524, %v517
      %v588 = vpack.c.b16 %v525, %v518
      %v589 = vpack.c.b16 %v526, %v519
      %v590 = vpack.c.b16 %v534, %v527
      %v591 = vpack.c.b16 %v535, %v528
      %v592 = vpack.c.b16 %v536, %v529
      %v593 = vpack.c.b16 %v537, %v530
      %v594 = vpack.c.b16 %v538, %v531
      %v595 = vpack.c.b16 %v539, %v532
      %v596 = vpack.c.b16 %v540, %v533
      %v765 = vunpack.c.l.b16 %v253
      %v766 = vunpack.c.l.b16 %v254
      %v767 = vunpack.c.l.b16 %v255
      %v768 = vunpack.c.l.b16 %v256
      %v769 = vunpack.c.l.b16 %v257
      %v770 = vunpack.c.l.b16 %v258
      %v771 = vunpack.c.l.b16 %v259
      %v772 = vunpack.c.l.b16 %v260
      %v773 = vunpack.c.l.b16 %v261
      %v774 = vunpack.c.l.b16 %v262
      %v775 = vunpack.c.l.b16 %v263
      %v776 = vunpack.c.l.b16 %v264
      %v777 = vunpack.c.l.b16 %v265
      %v778 = vunpack.c.l.b16 %v266
      %v779 = vunpack.c.l.b16 %v267
      %v780 = vunpack.c.l.b16 %v268
      %v781 = vunpack.c.l.b16 %v269
      %v782 = vunpack.c.l.b16 %v270
      %v783 = vunpack.c.l.b16 %v271
      %v784 = vunpack.c.l.b16 %v272
      %v785 = vunpack.c.l.b16 %v273
      %v786 = vunpack.c.l.b16 %v274
      %v787 = vunpack.c.l.b16 %v275
      %v788 = vunpack.c.l.b16 %v276
      %v789 = vunpack.c.l.b16 %v277
      %v790 = vunpack.c.l.b16 %v278
      %v791 = vunpack.c.l.b16 %v279
      %v792 = vunpack.c.l.b16 %v280
      %v793 = vunpack.c.l.b16 %v281
      %v794 = vunpack.c.l.b16 %v282
      %v795 = vunpack.c.l.b16 %v283
      %v796 = vunpack.c.l.b16 %v284
      %v797 = vunpack.c.l.b16 %v285
      %v798 = vunpack.c.l.b16 %v286
      %v799 = vunpack.c.l.b16 %v287
      %v800 = vunpack.c.l.b16 %v288
      %v801 = vunpack.c.l.b16 %v289
      %v802 = vunpack.c.l.b16 %v290
      %v803 = vunpack.c.l.b16 %v291
      %v804 = vunpack.c.l.b16 %v292
      %v805 = vunpack.c.l.b16 %v293
      %v806 = vunpack.c.l.b16 %v294
      %v807 = vunpack.c.l.b16 %v295
      %v808 = vunpack.c.l.b16 %v296
      %v809 = vunpack.c.l.b16 %v297
      %v810 = vunpack.c.l.b16 %v298
      %v811 = vunpack.c.l.b16 %v299
      %v812 = vunpack.c.l.b16 %v300
      %v813 = vunpack.c.l.b16 %v301
      %v814 = vunpack.c.l.b16 %v302
      %v815 = vunpack.c.l.b16 %v303
      %v816 = vunpack.c.l.b16 %v304
      %v817 = vunpack.c.l.b16 %v305
      %v818 = vunpack.c.l.b16 %v306
      %v819 = vunpack.c.l.b16 %v307
      %v820 = vunpack.c.l.b16 %v308
      %v821 = vunpack.c.l.b16 %v309
      %v822 = vunpack.c.l.b16 %v310
      %v823 = vunpack.c.l.b16 %v311
      %v824 = vunpack.c.l.b16 %v312
      %v825 = vunpack.c.l.b16 %v313
      %v826 = vunpack.c.l.b16 %v314
      %v827 = vunpack.c.l.b16 %v315
      %v828 = vunpack.c.l.b16 %v316
      %v829 = vunpack.c.l.b16 %v317
      %v830 = vunpack.c.l.b16 %v318
      %v831 = vunpack.c.l.b16 %v319
      %v832 = vunpack.c.l.b16 %v320
      %v833 = vunpack.c.l.b16 %v321
      %v834 = vunpack.c.l.b16 %v322
      %v835 = vunpack.c.l.b16 %v323
      %v836 = vunpack.c.l.b16 %v324
      %v837 = vunpack.c.l.b16 %v325
      %v838 = vunpack.c.l.b16 %v326
      %v839 = vunpack.c.l.b16 %v327
      %v840 = vunpack.c.l.b16 %v328
      %v841 = vunpack.c.l.b16 %v329
      %v842 = vunpack.c.l.b16 %v330
      %v843 = vunpack.c.l.b16 %v331
      %v844 = vunpack.c.l.b16 %v332
      %v845 = vunpack.c.l.b16 %v333
      %v846 = vunpack.c.l.b16 %v334
      %v847 = vunpack.c.l.b16 %v335
      %v848 = vunpack.c.l.b16 %v336
      %v849 = vunpack.c.l.b16 %v337
      %v850 = vunpack.c.l.b16 %v338
      %v851 = vunpack.c.l.b16 %v339
      %v852 = vunpack.c.l.b16 %v340
      %v853 = vunpack.c.l.b16 %v341
      %v854 = vunpack.c.l.b16 %v342
      %v855 = vunpack.c.l.b16 %v343
      %v856 = vunpack.c.l.b16 %v344
      %v857 = vunpack.c.l.b16 %v345
      %v858 = vunpack.c.l.b16 %v346
      %v859 = vunpack.c.l.b16 %v347
      %v860 = vunpack.c.l.b16 %v348
      %v861 = vunpack.c.l.b16 %v349
      %v862 = vunpack.c.l.b16 %v350
      %v863 = vunpack.c.l.b16 %v351
      %v864 = vunpack.c.l.b16 %v352
      %v865 = vunpack.c.l.b16 %v353
      %v866 = vunpack.c.l.b16 %v354
      %v867 = vunpack.c.l.b16 %v355
      %v868 = vunpack.c.l.b16 %v356
      %v869 = vunpack.c.l.b16 %v357
      %v870 = vunpack.c.l.b16 %v358
      %v871 = vunpack.c.l.b16 %v359
      %v872 = vunpack.c.l.b16 %v360
      %v873 = vunpack.c.l.b16 %v361
      %v874 = vunpack.c.l.b16 %v362
      %v875 = vunpack.c.l.b16 %v363
      %v876 = vunpack.c.l.b16 %v364
      %v877 = vpack.c.b16 %v766, %v765
      %v878 = vpack.c.b16 %v768, %v767
      %v879 = vpack.c.b16 %v770, %v769
      %v880 = vpack.c.b16 %v772, %v771
      %v881 = vpack.c.b16 %v774, %v773
      %v882 = vpack.c.b16 %v776, %v775
      %v883 = vpack.c.b16 %v778, %v777
      %v884 = vpack.c.b16 %v780, %v779
      %v885 = vpack.c.b16 %v782, %v781
      %v886 = vpack.c.b16 %v784, %v783
      %v887 = vpack.c.b16 %v786, %v785
      %v888 = vpack.c.b16 %v788, %v787
      %v889 = vpack.c.b16 %v790, %v789
      %v890 = vpack.c.b16 %v792, %v791
      %v891 = vpack.c.b16 %v794, %v793
      %v892 = vpack.c.b16 %v796, %v795
      %v893 = vpack.c.b16 %v798, %v797
      %v894 = vpack.c.b16 %v800, %v799
      %v895 = vpack.c.b16 %v802, %v801
      %v896 = vpack.c.b16 %v804, %v803
      %v897 = vpack.c.b16 %v806, %v805
      %v898 = vpack.c.b16 %v808, %v807
      %v899 = vpack.c.b16 %v810, %v809
      %v900 = vpack.c.b16 %v812, %v811
      %v901 = vpack.c.b16 %v814, %v813
      %v902 = vpack.c.b16 %v816, %v815
      %v903 = vpack.c.b16 %v818, %v817
      %v904 = vpack.c.b16 %v820, %v819
      %v905 = vpack.c.b16 %v822, %v821
      %v906 = vpack.c.b16 %v824, %v823
      %v907 = vpack.c.b16 %v826, %v825
      %v908 = vpack.c.b16 %v828, %v827
      %v909 = vpack.c.b16 %v830, %v829
      %v910 = vpack.c.b16 %v832, %v831
      %v911 = vpack.c.b16 %v834, %v833
      %v912 = vpack.c.b16 %v836, %v835
      %v913 = vpack.c.b16 %v838, %v837
      %v914 = vpack.c.b16 %v840, %v839
      %v915 = vpack.c.b16 %v842, %v841
      %v916 = vpack.c.b16 %v844, %v843
      %v917 = vpack.c.b16 %v846, %v845
      %v918 = vpack.c.b16 %v848, %v847
      %v919 = vpack.c.b16 %v850, %v849
      %v920 = vpack.c.b16 %v852, %v851
      %v921 = vpack.c.b16 %v854, %v853
      %v922 = vpack.c.b16 %v856, %v855
      %v923 = vpack.c.b16 %v858, %v857
      %v924 = vpack.c.b16 %v860, %v859
      %v925 = vpack.c.b16 %v862, %v861
      %v926 = vpack.c.b16 %v864, %v863
      %v927 = vpack.c.b16 %v866, %v865
      %v928 = vpack.c.b16 %v868, %v867
      %v929 = vpack.c.b16 %v870, %v869
      %v930 = vpack.c.b16 %v872, %v871
      %v931 = vpack.c.b16 %v874, %v873
      %v932 = vpack.c.b16 %v876, %v875
      %989 = vmatprep.subr.bf16.mxu0 0
      %990 = vmatpush1.bf16.msra.mxu0 %v877
      %991 = vmatprep.subr.bf16.mxu0 0
      %992 = vmatpush1.bf16.msra.mxu0 %v878
      %993 = vmatprep.subr.bf16.mxu0 0
      %994 = vmatpush1.bf16.msra.mxu0 %v879
      %995 = vmatprep.subr.bf16.mxu0 0
      %996 = vmatpush1.bf16.msra.mxu0 %v880
      %997 = vmatprep.subr.bf16.mxu0 0
      %998 = vmatpush1.bf16.msra.mxu0 %v881
      %999 = vmatprep.subr.bf16.mxu0 0
      %1000 = vmatpush1.bf16.msra.mxu0 %v882
      %1001 = vmatprep.subr.bf16.mxu0 0
      %1002 = vmatpush1.bf16.msra.mxu0 %v883
      %1003 = vmatprep.subr.bf16.mxu0 0
      %1004 = vmatpush1.bf16.msra.mxu0 %v884
      %1005 = vmatprep.subr.bf16.mxu0 0
      %1006 = vmatpush1.bf16.msra.mxu0 %v885
      %1007 = vmatprep.subr.bf16.mxu0 0
      %1008 = vmatpush1.bf16.msra.mxu0 %v886
      %1009 = vmatprep.subr.bf16.mxu0 0
      %1010 = vmatpush1.bf16.msra.mxu0 %v887
      %1011 = vmatprep.subr.bf16.mxu0 0
      %1012 = vmatpush1.bf16.msra.mxu0 %v888
      %1013 = vmatprep.subr.bf16.mxu0 0
      %1014 = vmatpush1.bf16.msra.mxu0 %v889
      %1015 = vmatprep.subr.bf16.mxu0 0
      %1016 = vmatpush1.bf16.msra.mxu0 %v890
      %1017 = vmatprep.subr.bf16.mxu0 0
      %1018 = vmatpush1.bf16.msra.mxu0 %v891
      %1019 = vmatprep.subr.bf16.mxu0 0
      %1020 = vmatpush1.bf16.msra.mxu0 %v892
      %1021 = vmatprep.mubr.bf16.mxu0 %v542
      %1022 = vmatmul.mubr.bf16.gmra.mrb[0].mxu0 %v541
      %v1023 = vpop.f32.mrb[0].mxu0
      %v1024 = vadd.f32 0.0, %v1023
      %v1025 = vpop.f32.mrb[0].mxu0
      %v1026 = vpop.f32.mrb[0].mxu0
      %v1027 = vadd.f32 0.0, %v1026
      %v1028 = vpop.f32.mrb[0].mxu0
      %1029 = vmatprep.mubr.bf16.mxu0 %v549
      %1030 = vmatmul.mubr.bf16.gmra.mrb[0].mxu0 %v548
      %v1031 = vpop.f32.mrb[0].mxu0
      %v1032 = vadd.f32 0.0, %v1031
      %v1033 = vpop.f32.mrb[0].mxu0
      %v1034 = vpop.f32.mrb[0].mxu0
      %v1035 = vadd.f32 0.0, %v1034
      %v1036 = vpop.f32.mrb[0].mxu0
      %1037 = vmatprep.mubr.bf16.mxu0 %v556
      %1038 = vmatmul.mubr.bf16.gmra.mrb[0].mxu0 %v555
      %v1039 = vpop.f32.mrb[0].mxu0
      %v1040 = vadd.f32 0.0, %v1039
      %v1041 = vpop.f32.mrb[0].mxu0
      %v1042 = vpop.f32.mrb[0].mxu0
      %v1043 = vadd.f32 0.0, %v1042
      %v1044 = vpop.f32.mrb[0].mxu0
      %1045 = vmatprep.mubr.bf16.mxu0 %v563
      %1046 = vmatmul.mubr.bf16.gmra.mrb[0].mxu0 %v562
      %v1047 = vpop.f32.mrb[0].mxu0
      %v1048 = vadd.f32 0.0, %v1047
      %v1049 = vpop.f32.mrb[0].mxu0
      %v1050 = vpop.f32.mrb[0].mxu0
      %v1051 = vadd.f32 0.0, %v1050
      %v1052 = vpop.f32.mrb[0].mxu0
      %1053 = vmatprep.mubr.bf16.mxu0 %v570
      %1054 = vmatmul.mubr.bf16.gmra.mrb[0].mxu0 %v569
      %v1055 = vpop.f32.mrb[0].mxu0
      %v1056 = vadd.f32 0.0, %v1055
      %v1057 = vpop.f32.mrb[0].mxu0
      %v1058 = vpop.f32.mrb[0].mxu0
      %v1059 = vadd.f32 0.0, %v1058
      %v1060 = vpop.f32.mrb[0].mxu0
      %1061 = vmatprep.mubr.bf16.mxu0 %v577
      %1062 = vmatmul.mubr.bf16.gmra.mrb[0].mxu0 %v576
      %v1063 = vpop.f32.mrb[0].mxu0
      %v1064 = vadd.f32 0.0, %v1063
      %v1065 = vpop.f32.mrb[0].mxu0
      %v1066 = vpop.f32.mrb[0].mxu0
      %v1067 = vadd.f32 0.0, %v1066
      %v1068 = vpop.f32.mrb[0].mxu0
      %1069 = vmatprep.mubr.bf16.mxu0 %v584
      %1070 = vmatmul.mubr.bf16.gmra.mrb[0].mxu0 %v583
      %v1071 = vpop.f32.mrb[0].mxu0
      %v1072 = vadd.f32 0.0, %v1071
      %v1073 = vpop.f32.mrb[0].mxu0
      %v1074 = vpop.f32.mrb[0].mxu0
      %v1075 = vadd.f32 0.0, %v1074
      %v1076 = vpop.f32.mrb[0].mxu0
      %1077 = vmatprep.mubr.bf16.mxu0 %v591
      %1078 = vmatmul.mubr.bf16.gmra.mrb[0].mxu0 %v590
      %v1079 = vpop.f32.mrb[0].mxu0
      %v1080 = vadd.f32 0.0, %v1079
      %v1081 = vpop.f32.mrb[0].mxu0
      %v1082 = vpop.f32.mrb[0].mxu0
      %v1083 = vadd.f32 0.0, %v1082
      %v1084 = vpop.f32.mrb[0].mxu0
      %1085 = vdwg.mxu0
      %1086 = vmatprep.subr.bf16.mxu0 0
      %1087 = vmatpush1.bf16.msra.mxu0 %v893
      %1088 = vmatprep.subr.bf16.mxu0 0
      %1089 = vmatpush1.bf16.msra.mxu0 %v894
      %1090 = vmatprep.subr.bf16.mxu0 0
      %1091 = vmatpush1.bf16.msra.mxu0 %v895
      %1092 = vmatprep.subr.bf16.mxu0 0
      %1093 = vmatpush1.bf16.msra.mxu0 %v896
      %1094 = vmatprep.subr.bf16.mxu0 0
      %1095 = vmatpush1.bf16.msra.mxu0 %v897
      %1096 = vmatprep.subr.bf16.mxu0 0
      %1097 = vmatpush1.bf16.msra.mxu0 %v898
      %1098 = vmatprep.subr.bf16.mxu0 0
      %1099 = vmatpush1.bf16.msra.mxu0 %v899
      %1100 = vmatprep.subr.bf16.mxu0 0
      %1101 = vmatpush1.bf16.msra.mxu0 %v900
      %1102 = vmatprep.subr.bf16.mxu0 0
      %1103 = vmatpush1.bf16.msra.mxu0 %v901
      %1104 = vmatprep.subr.bf16.mxu0 0
      %1105 = vmatpush1.bf16.msra.mxu0 %v902
      %1106 = vmatprep.subr.bf16.mxu0 0
      %1107 = vmatpush1.bf16.msra.mxu0 %v903
      %1108 = vmatprep.subr.bf16.mxu0 0
      %1109 = vmatpush1.bf16.msra.mxu0 %v904
      %1110 = vmatprep.subr.bf16.mxu0 0
      %1111 = vmatpush1.bf16.msra.mxu0 %v905
      %1112 = vmatprep.subr.bf16.mxu0 0
      %1113 = vmatpush1.bf16.msra.mxu0 %v906
      %1114 = vmatprep.subr.bf16.mxu0 0
      %1115 = vmatpush1.bf16.msra.mxu0 %v907
      %1116 = vmatprep.subr.bf16.mxu0 0
      %1117 = vmatpush1.bf16.msra.mxu0 %v908
      %1118 = vmatprep.mubr.bf16.mxu0 %v544
      %1119 = vmatmul.mubr.bf16.gmra.mrb[0].mxu0 %v543
      %v1120 = vpop.f32.mrb[0].mxu0
      %v1121 = vadd.f32 %v1024, %v1120
      %v1122 = vpop.f32.mrb[0].mxu0
      %v1123 = vpop.f32.mrb[0].mxu0
      %v1124 = vadd.f32 %v1027, %v1123
      %v1125 = vpop.f32.mrb[0].mxu0
      %1126 = vmatprep.mubr.bf16.mxu0 %v551
      %1127 = vmatmul.mubr.bf16.gmra.mrb[0].mxu0 %v550
      %v1128 = vpop.f32.mrb[0].mxu0
      %v1129 = vadd.f32 %v1032, %v1128
      %v1130 = vpop.f32.mrb[0].mxu0
      %v1131 = vpop.f32.mrb[0].mxu0
      %v1132 = vadd.f32 %v1035, %v1131
      %v1133 = vpop.f32.mrb[0].mxu0
      %1134 = vmatprep.mubr.bf16.mxu0 %v558
      %1135 = vmatmul.mubr.bf16.gmra.mrb[0].mxu0 %v557
      %v1136 = vpop.f32.mrb[0].mxu0
      %v1137 = vadd.f32 %v1040, %v1136
      %v1138 = vpop.f32.mrb[0].mxu0
      %v1139 = vpop.f32.mrb[0].mxu0
      %v1140 = vadd.f32 %v1043, %v1139
      %v1141 = vpop.f32.mrb[0].mxu0
      %1142 = vmatprep.mubr.bf16.mxu0 %v565
      %1143 = vmatmul.mubr.bf16.gmra.mrb[0].mxu0 %v564
      %v1144 = vpop.f32.mrb[0].mxu0
      %v1145 = vadd.f32 %v1048, %v1144
      %v1146 = vpop.f32.mrb[0].mxu0
      %v1147 = vpop.f32.mrb[0].mxu0
      %v1148 = vadd.f32 %v1051, %v1147
      %v1149 = vpop.f32.mrb[0].mxu0
      %1150 = vmatprep.mubr.bf16.mxu0 %v572
      %1151 = vmatmul.mubr.bf16.gmra.mrb[0].mxu0 %v571
      %v1152 = vpop.f32.mrb[0].mxu0
      %v1153 = vadd.f32 %v1056, %v1152
      %v1154 = vpop.f32.mrb[0].mxu0
      %v1155 = vpop.f32.mrb[0].mxu0
      %v1156 = vadd.f32 %v1059, %v1155
      %v1157 = vpop.f32.mrb[0].mxu0
      %1158 = vmatprep.mubr.bf16.mxu0 %v579
      %1159 = vmatmul.mubr.bf16.gmra.mrb[0].mxu0 %v578
      %v1160 = vpop.f32.mrb[0].mxu0
      %v1161 = vadd.f32 %v1064, %v1160
      %v1162 = vpop.f32.mrb[0].mxu0
      %v1163 = vpop.f32.mrb[0].mxu0
      %v1164 = vadd.f32 %v1067, %v1163
      %v1165 = vpop.f32.mrb[0].mxu0
      %1166 = vmatprep.mubr.bf16.mxu0 %v586
      %1167 = vmatmul.mubr.bf16.gmra.mrb[0].mxu0 %v585
      %v1168 = vpop.f32.mrb[0].mxu0
      %v1169 = vadd.f32 %v1072, %v1168
      %v1170 = vpop.f32.mrb[0].mxu0
      %v1171 = vpop.f32.mrb[0].mxu0
      %v1172 = vadd.f32 %v1075, %v1171
      %v1173 = vpop.f32.mrb[0].mxu0
      %1174 = vmatprep.mubr.bf16.mxu0 %v593
      %1175 = vmatmul.mubr.bf16.gmra.mrb[0].mxu0 %v592
      %v1176 = vpop.f32.mrb[0].mxu0
      %v1177 = vadd.f32 %v1080, %v1176
      %v1178 = vpop.f32.mrb[0].mxu0
      %v1179 = vpop.f32.mrb[0].mxu0
      %v1180 = vadd.f32 %v1083, %v1179
      %v1181 = vpop.f32.mrb[0].mxu0
      %1182 = vdwg.mxu0
      %1183 = vmatprep.subr.bf16.mxu0 0
      %1184 = vmatpush1.bf16.msra.mxu0 %v909
      %1185 = vmatprep.subr.bf16.mxu0 0
      %1186 = vmatpush1.bf16.msra.mxu0 %v910
      %1187 = vmatprep.subr.bf16.mxu0 0
      %1188 = vmatpush1.bf16.msra.mxu0 %v911
      %1189 = vmatprep.subr.bf16.mxu0 0
      %1190 = vmatpush1.bf16.msra.mxu0 %v912
      %1191 = vmatprep.subr.bf16.mxu0 0
      %1192 = vmatpush1.bf16.msra.mxu0 %v913
      %1193 = vmatprep.subr.bf16.mxu0 0
      %1194 = vmatpush1.bf16.msra.mxu0 %v914
      %1195 = vmatprep.subr.bf16.mxu0 0
      %1196 = vmatpush1.bf16.msra.mxu0 %v915
      %1197 = vmatprep.subr.bf16.mxu0 0
      %1198 = vmatpush1.bf16.msra.mxu0 %v916
      %1199 = vmatprep.subr.bf16.mxu0 0
      %1200 = vmatpush1.bf16.msra.mxu0 %v917
      %1201 = vmatprep.subr.bf16.mxu0 0
      %1202 = vmatpush1.bf16.msra.mxu0 %v918
      %1203 = vmatprep.subr.bf16.mxu0 0
      %1204 = vmatpush1.bf16.msra.mxu0 %v919
      %1205 = vmatprep.subr.bf16.mxu0 0
      %1206 = vmatpush1.bf16.msra.mxu0 %v920
      %1207 = vmatprep.subr.bf16.mxu0 0
      %1208 = vmatpush1.bf16.msra.mxu0 %v921
      %1209 = vmatprep.subr.bf16.mxu0 0
      %1210 = vmatpush1.bf16.msra.mxu0 %v922
      %1211 = vmatprep.subr.bf16.mxu0 0
      %1212 = vmatpush1.bf16.msra.mxu0 %v923
      %1213 = vmatprep.subr.bf16.mxu0 0
      %1214 = vmatpush1.bf16.msra.mxu0 %v924
      %1215 = vmatprep.mubr.bf16.mxu0 %v546
      %1216 = vmatmul.mubr.bf16.gmra.mrb[0].mxu0 %v545
      %v1217 = vpop.f32.mrb[0].mxu0
      %v1218 = vadd.f32 %v1121, %v1217
      %v1219 = vpop.f32.mrb[0].mxu0
      %v1220 = vpop.f32.mrb[0].mxu0
      %v1221 = vadd.f32 %v1124, %v1220
      %v1222 = vpop.f32.mrb[0].mxu0
      %1223 = vmatprep.mubr.bf16.mxu0 %v553
      %1224 = vmatmul.mubr.bf16.gmra.mrb[0].mxu0 %v552
      %v1225 = vpop.f32.mrb[0].mxu0
      %v1226 = vadd.f32 %v1129, %v1225
      %v1227 = vpop.f32.mrb[0].mxu0
      %v1228 = vpop.f32.mrb[0].mxu0
      %v1229 = vadd.f32 %v1132, %v1228
      %v1230 = vpop.f32.mrb[0].mxu0
      %1231 = vmatprep.mubr.bf16.mxu0 %v560
      %1232 = vmatmul.mubr.bf16.gmra.mrb[0].mxu0 %v559
      %v1233 = vpop.f32.mrb[0].mxu0
      %v1234 = vadd.f32 %v1137, %v1233
      %v1235 = vpop.f32.mrb[0].mxu0
      %v1236 = vpop.f32.mrb[0].mxu0
      %v1237 = vadd.f32 %v1140, %v1236
      %v1238 = vpop.f32.mrb[0].mxu0
      %1239 = vmatprep.mubr.bf16.mxu0 %v567
      %1240 = vmatmul.mubr.bf16.gmra.mrb[0].mxu0 %v566
      %v1241 = vpop.f32.mrb[0].mxu0
      %v1242 = vadd.f32 %v1145, %v1241
      %v1243 = vpop.f32.mrb[0].mxu0
      %v1244 = vpop.f32.mrb[0].mxu0
      %v1245 = vadd.f32 %v1148, %v1244
      %v1246 = vpop.f32.mrb[0].mxu0
      %1247 = vmatprep.mubr.bf16.mxu0 %v574
      %1248 = vmatmul.mubr.bf16.gmra.mrb[0].mxu0 %v573
      %v1249 = vpop.f32.mrb[0].mxu0
      %v1250 = vadd.f32 %v1153, %v1249
      %v1251 = vpop.f32.mrb[0].mxu0
      %v1252 = vpop.f32.mrb[0].mxu0
      %v1253 = vadd.f32 %v1156, %v1252
      %v1254 = vpop.f32.mrb[0].mxu0
      %1255 = vmatprep.mubr.bf16.mxu0 %v581
      %1256 = vmatmul.mubr.bf16.gmra.mrb[0].mxu0 %v580
      %v1257 = vpop.f32.mrb[0].mxu0
      %v1258 = vadd.f32 %v1161, %v1257
      %v1259 = vpop.f32.mrb[0].mxu0
      %v1260 = vpop.f32.mrb[0].mxu0
      %v1261 = vadd.f32 %v1164, %v1260
      %v1262 = vpop.f32.mrb[0].mxu0
      %1263 = vmatprep.mubr.bf16.mxu0 %v588
      %1264 = vmatmul.mubr.bf16.gmra.mrb[0].mxu0 %v587
      %v1265 = vpop.f32.mrb[0].mxu0
      %v1266 = vadd.f32 %v1169, %v1265
      %v1267 = vpop.f32.mrb[0].mxu0
      %v1268 = vpop.f32.mrb[0].mxu0
      %v1269 = vadd.f32 %v1172, %v1268
      %v1270 = vpop.f32.mrb[0].mxu0
      %1271 = vmatprep.mubr.bf16.mxu0 %v595
      %1272 = vmatmul.mubr.bf16.gmra.mrb[0].mxu0 %v594
      %v1273 = vpop.f32.mrb[0].mxu0
      %v1274 = vadd.f32 %v1177, %v1273
      %v1275 = vpop.f32.mrb[0].mxu0
      %v1276 = vpop.f32.mrb[0].mxu0
      %v1277 = vadd.f32 %v1180, %v1276
      %v1278 = vpop.f32.mrb[0].mxu0
      %1279 = vdwg.mxu0
      %1280 = vmatprep.subr.bf16.mxu0 0
      %1281 = vmatpush1.bf16.msra.mxu0 %v925
      %1282 = vmatprep.subr.bf16.mxu0 0
      %1283 = vmatpush1.bf16.msra.mxu0 %v926
      %1284 = vmatprep.subr.bf16.mxu0 0
      %1285 = vmatpush1.bf16.msra.mxu0 %v927
      %1286 = vmatprep.subr.bf16.mxu0 0
      %1287 = vmatpush1.bf16.msra.mxu0 %v928
      %1288 = vmatprep.subr.bf16.mxu0 0
      %1289 = vmatpush1.bf16.msra.mxu0 %v929
      %1290 = vmatprep.subr.bf16.mxu0 0
      %1291 = vmatpush1.bf16.msra.mxu0 %v930
      %1292 = vmatprep.subr.bf16.mxu0 0
      %1293 = vmatpush1.bf16.msra.mxu0 %v931
      %1294 = vmatprep.subr.bf16.mxu0 0
      %1295 = vmatpush1.bf16.msra.mxu0 %v932
      %1296 = vmatprep.subr.bf16.mxu0 0
      %1297 = vmatpush1.bf16.msra.mxu0 0
      %1298 = vmatprep.subr.bf16.mxu0 0
      %1299 = vmatpush1.bf16.msra.mxu0 0
      %1300 = vmatprep.subr.bf16.mxu0 0
      %1301 = vmatpush1.bf16.msra.mxu0 0
      %1302 = vmatprep.subr.bf16.mxu0 0
      %1303 = vmatpush1.bf16.msra.mxu0 0
      %1304 = vmatprep.subr.bf16.mxu0 0
      %1305 = vmatpush1.bf16.msra.mxu0 0
      %1306 = vmatprep.subr.bf16.mxu0 0
      %1307 = vmatpush1.bf16.msra.mxu0 0
      %1308 = vmatprep.subr.bf16.mxu0 0
      %1309 = vmatpush1.bf16.msra.mxu0 0
      %1310 = vmatprep.subr.bf16.mxu0 0
      %1311 = vmatpush1.bf16.msra.mxu0 0
      %1312 = vmatprep.mubr.bf16.mxu0 0
      %1313 = vmatmul.mubr.bf16.gmra.mrb[0].mxu0 %v547
      %v1314 = vpop.f32.mrb[0].mxu0
      %v1315 = vadd.f32 %v1218, %v1314
      %v1316 = vpop.f32.mrb[0].mxu0
      %v1317 = vpop.f32.mrb[0].mxu0
      %v1318 = vadd.f32 %v1221, %v1317
      %v1319 = vpop.f32.mrb[0].mxu0
      %1320 = vmatprep.mubr.bf16.mxu0 0
      %1321 = vmatmul.mubr.bf16.gmra.mrb[0].mxu0 %v554
      %v1322 = vpop.f32.mrb[0].mxu0
      %v1323 = vadd.f32 %v1226, %v1322
      %v1324 = vpop.f32.mrb[0].mxu0
      %v1325 = vpop.f32.mrb[0].mxu0
      %v1326 = vadd.f32 %v1229, %v1325
      %v1327 = vpop.f32.mrb[0].mxu0
      %1328 = vmatprep.mubr.bf16.mxu0 0
      %1329 = vmatmul.mubr.bf16.gmra.mrb[0].mxu0 %v561
      %v1330 = vpop.f32.mrb[0].mxu0
      %v1331 = vadd.f32 %v1234, %v1330
      %v1332 = vpop.f32.mrb[0].mxu0
      %v1333 = vpop.f32.mrb[0].mxu0
      %v1334 = vadd.f32 %v1237, %v1333
      %v1335 = vpop.f32.mrb[0].mxu0
      %1336 = vmatprep.mubr.bf16.mxu0 0
      %1337 = vmatmul.mubr.bf16.gmra.mrb[0].mxu0 %v568
      %v1338 = vpop.f32.mrb[0].mxu0
      %v1339 = vadd.f32 %v1242, %v1338
      %v1340 = vpop.f32.mrb[0].mxu0
      %v1341 = vpop.f32.mrb[0].mxu0
      %v1342 = vadd.f32 %v1245, %v1341
      %v1343 = vpop.f32.mrb[0].mxu0
      %1344 = vmatprep.mubr.bf16.mxu0 0
      %1345 = vmatmul.mubr.bf16.gmra.mrb[0].mxu0 %v575
      %v1346 = vpop.f32.mrb[0].mxu0
      %v1347 = vadd.f32 %v1250, %v1346
      %v1348 = vpop.f32.mrb[0].mxu0
      %v1349 = vpop.f32.mrb[0].mxu0
      %v1350 = vadd.f32 %v1253, %v1349
      %v1351 = vpop.f32.mrb[0].mxu0
      %1352 = vmatprep.mubr.bf16.mxu0 0
      %1353 = vmatmul.mubr.bf16.gmra.mrb[0].mxu0 %v582
      %v1354 = vpop.f32.mrb[0].mxu0
      %v1355 = vadd.f32 %v1258, %v1354
      %v1356 = vpop.f32.mrb[0].mxu0
      %v1357 = vpop.f32.mrb[0].mxu0
      %v1358 = vadd.f32 %v1261, %v1357
      %v1359 = vpop.f32.mrb[0].mxu0
      %1360 = vmatprep.mubr.bf16.mxu0 0
      %1361 = vmatmul.mubr.bf16.gmra.mrb[0].mxu0 %v589
      %v1362 = vpop.f32.mrb[0].mxu0
      %v1363 = vadd.f32 %v1266, %v1362
      %v1364 = vpop.f32.mrb[0].mxu0
      %v1365 = vpop.f32.mrb[0].mxu0
      %v1366 = vadd.f32 %v1269, %v1365
      %v1367 = vpop.f32.mrb[0].mxu0
      %1368 = vmatprep.mubr.bf16.mxu0 0
      %1369 = vmatmul.mubr.bf16.gmra.mrb[0].mxu0 %v596
      %v1370 = vpop.f32.mrb[0].mxu0
      %v1371 = vadd.f32 %v1274, %v1370
      %v1372 = vpop.f32.mrb[0].mxu0
      %v1373 = vpop.f32.mrb[0].mxu0
      %v1374 = vadd.f32 %v1277, %v1373
      %v1375 = vpop.f32.mrb[0].mxu0
      %1376 = vdwg.mxu0
      %1377 = vst [vmem:[%s182] sm:$0xff] %v1315
      %1378 = vst [vmem:[%s182 + $0x8] sm:$0xff] %v1318
      %1379 = vst [vmem:[%s182 + $0x10] sm:$0xff] %v1323
      %1380 = vst [vmem:[%s182 + $0x18] sm:$0xff] %v1326
      %1381 = vst [vmem:[%s182 + $0x20] sm:$0xff] %v1331
      %1382 = vst [vmem:[%s182 + $0x28] sm:$0xff] %v1334
      %1383 = vst [vmem:[%s182 + $0x30] sm:$0xff] %v1339
      %1384 = vst [vmem:[%s182 + $0x38] sm:$0xff] %v1342
      %1385 = vst [vmem:[%s182 + $0x40] sm:$0xff] %v1347
      %1386 = vst [vmem:[%s182 + $0x48] sm:$0xff] %v1350
      %1387 = vst [vmem:[%s182 + $0x50] sm:$0xff] %v1355
      %1388 = vst [vmem:[%s182 + $0x58] sm:$0xff] %v1358
      %1389 = vst [vmem:[%s182 + $0x60] sm:$0xff] %v1363
      %1390 = vst [vmem:[%s182 + $0x68] sm:$0xff] %v1366
      %1391 = vst [vmem:[%s182 + $0x70] sm:$0xff] %v1371
      %1392 = vst [vmem:[%s182 + $0x78] sm:$0xff] %v1374
      %v1393 = vadd.f32 %v1315, %v1318
      %v1394 = vadd.f32 %v1393, %v1323
      %v1395 = vadd.f32 %v1394, %v1326
      %v1396 = vadd.f32 %v1395, %v1331
      %v1397 = vadd.f32 %v1396, %v1334
      %v1398 = vadd.f32 %v1397, %v1339
      %v1399 = vadd.f32 %v1398, %v1342
      %v1400 = vadd.f32 %v1399, %v1347
      %v1401 = vadd.f32 %v1400, %v1350
      %v1402 = vadd.f32 %v1401, %v1355
      %v1403 = vadd.f32 %v1402, %v1358
      %v1404 = vadd.f32 %v1403, %v1363
      %v1405 = vadd.f32 %v1404, %v1366
      %v1406 = vadd.f32 %v1405, %v1371
      %v1407 = vadd.f32 %v1406, %v1374
      %v1408 = vrot.slane %v1407, 4
      %v1409 = vadd.f32 %v1407, %v1408
      %v1410 = vrot.slane %v1409, 2
      %v1411 = vadd.f32 %v1409, %v1410
      %v1412 = vrot.slane %v1411, 1
      %v1413 = vadd.f32 %v1411, %v1412
      %v1414 = vmul.f32 %v1315, %v1315
      %v1415 = vmul.f32 %v1318, %v1318
      %v1416 = vmul.f32 %v1323, %v1323
      %v1417 = vmul.f32 %v1326, %v1326
      %v1418 = vmul.f32 %v1331, %v1331
      %v1419 = vmul.f32 %v1334, %v1334
      %v1420 = vmul.f32 %v1339, %v1339
      %v1421 = vmul.f32 %v1342, %v1342
      %v1422 = vmul.f32 %v1347, %v1347
      %v1423 = vmul.f32 %v1350, %v1350
      %v1424 = vmul.f32 %v1355, %v1355
      %v1425 = vmul.f32 %v1358, %v1358
      %v1426 = vmul.f32 %v1363, %v1363
      %v1427 = vmul.f32 %v1366, %v1366
      %v1428 = vmul.f32 %v1371, %v1371
      %v1429 = vmul.f32 %v1374, %v1374
      %v1430 = vadd.f32 %v1414, %v1415
      %v1431 = vadd.f32 %v1430, %v1416
      %v1432 = vadd.f32 %v1431, %v1417
      %v1433 = vadd.f32 %v1432, %v1418
      %v1434 = vadd.f32 %v1433, %v1419
      %v1435 = vadd.f32 %v1434, %v1420
      %v1436 = vadd.f32 %v1435, %v1421
      %v1437 = vadd.f32 %v1436, %v1422
      %v1438 = vadd.f32 %v1437, %v1423
      %v1439 = vadd.f32 %v1438, %v1424
      %v1440 = vadd.f32 %v1439, %v1425
      %v1441 = vadd.f32 %v1440, %v1426
      %v1442 = vadd.f32 %v1441, %v1427
      %v1443 = vadd.f32 %v1442, %v1428
      %v1444 = vadd.f32 %v1443, %v1429
      %v1445 = vrot.slane %v1444, 4
      %v1446 = vadd.f32 %v1444, %v1445
      %v1447 = vrot.slane %v1446, 2
      %v1448 = vadd.f32 %v1446, %v1447
      %v1449 = vrot.slane %v1448, 1
      %v1450 = vadd.f32 %v1448, %v1449
      %v1451 = vlaneseq
      %v1452 = vshrl.u32 %v1451, 7
      %vm1453 = vcmp.eq.s32.totalorder %v1452, 0
      %vm1454 = vcmp.eq.s32.totalorder %v1452, 1
      %v1455 = vsel %vm1454, %v1450, 0.0
      %v1456 = vsel %vm1453, %v1413, %v1455
      %1457 = vst [vmem:[%s187] sm:$0xff] %v1456
      %s1458 = smul.u32 16, %s15
      %p1459 = scmp.lt.s32.totalorder %s1458, 31
      %s1460 = scalar_select %p1459, %s1458, 31
      %s1461 = smul.addr %s1460, 8
      %s1462 = scalar_lea.vmem %s2, %s1461
      %p1463 = scmp.lt.s32.totalorder %s15, 1
      %s1464 = scalar_select %p1463, %s15, 1
      %s1465 = smul.addr %s1464, 8
      %s1466 = scalar_lea.vmem %s3, %s1465
      // Predicated region
      $region29: #{sparse_residual_block_pallas.7} parent=27 // pred_check
        %p1467 = pneg %p80
      $region30: #{sparse_residual_block_pallas.7} parent=27 // pred_check_branch
        %1469 = sbr.rel (%p1467) target = $region32
      $region31: #{sparse_residual_block_pallas.7} parent=27 // pred_region
        %s1470 = smul.u32 16, %s15
      $region32: #{sparse_residual_block_pallas.7} parent=27 // pred_fallthru
        _
      // Predicated region
      $region33: #{sparse_residual_block_pallas.7} parent=27 // pred_check
        %p1471 = pneg %p106
      $region34: #{sparse_residual_block_pallas.7} parent=27 // pred_check_branch
        %1473 = sbr.rel (%p1471) target = $region36
      $region35: #{sparse_residual_block_pallas.7} parent=27 // pred_region
        _
      $region36: #{sparse_residual_block_pallas.7} parent=27 // pred_fallthru
        _
    $region28: #{sparse_residual_block_pallas.7} parent=5 // pred_fallthru
      _
    %p1474 = scmp.le.s32.totalorder 2, %s10
    // Predicated region
    $region37: #{sparse_residual_block_pallas.7} parent=5 // pred_check
      %p1475 = pneg %p1474
    $region38: #{sparse_residual_block_pallas.7} parent=5 // pred_check_branch
      %1477 = sbr.rel (%p1475) target = $region40
    $region39: #{sparse_residual_block_pallas.7} parent=5 // pred_region
      %s1478 = ssub.s32 %s10, 2
      // Predicated region
      $region41: #{sparse_residual_block_pallas.7} parent=39 // pred_check
        %p1479 = pneg %p86
      $region42: #{sparse_residual_block_pallas.7} parent=39 // pred_check_branch
        %1481 = sbr.rel (%p1479) target = $region44
      $region43: #{sparse_residual_block_pallas.7} parent=39 // pred_region
        %s1482 = smul.u32 16, %s16
        %p1483 = scmp.lt.s32.totalorder %s1482, 31
        %s1484 = scalar_select %p1483, %s1482, 31
        %s1485 = smul.addr %s1484, 8
        %s1486 = scalar_lea.vmem %s2, %s1485
      $region44: #{sparse_residual_block_pallas.7} parent=39 // pred_fallthru
        _
      // Predicated region
      $region45: #{sparse_residual_block_pallas.7} parent=39 // pred_check
        %p1487 = pneg %p112
      $region46: #{sparse_residual_block_pallas.7} parent=39 // pred_check_branch
        %1489 = sbr.rel (%p1487) target = $region48
      $region47: #{sparse_residual_block_pallas.7} parent=39 // pred_region
        %p1490 = scmp.lt.s32.totalorder %s16, 1
        %s1491 = scalar_select %p1490, %s16, 1
        %s1492 = smul.addr %s1491, 8
        %s1493 = scalar_lea.vmem %s3, %s1492
      $region48: #{sparse_residual_block_pallas.7} parent=39 // pred_fallthru
        _
    $region40: #{sparse_residual_block_pallas.7} parent=5 // pred_fallthru
      _
  $region6: #{sparse_residual_block_pallas.7} parent=0 // loop_footer
    %s14 = sadd.s32 1, %s10
  $region7: #{sparse_residual_block_pallas.7} parent=0 // loop_footer_branch
    %9 = sbr.rel target = $region3
  $region8: #{sparse_residual_block_pallas.7} parent=0 // loop_exit
    _

// kernel: sparse_residual_block_pallas.8
$region0: #{sparse_residual_block_pallas.8}
  #allocation0 [shape = 'u32[]', space=smem, size = 0x4, offset = 0x4, fixed_abs, tag = 'smem constant byte address 0x4 - core index']
  #allocation1 [shape = 'u32[144,128]{1,0:T(1,128)}', space=vmem, size = 0x12000, scoped, tag = 'internal scratch']
  %s0 = inlined_call_operand.vmem [shape: bf16[256,128], index: 0, kind: input, shape index: {}]
  %s1 = inlined_call_operand.vmem [shape: bf16[128,128], index: 1, kind: input, shape index: {}]
  %s2 = inlined_call_operand.vmem [shape: f32[256,128], index: 2, kind: output, shape index: {0}]
  %s3 = inlined_call_operand.vmem [shape: f32[2,8,128], index: 3, kind: output, shape index: {1}]
  %4 = xla_tuple %s2, %s3
  %s5 = sld [smem:[#allocation0]]
  $region49: #{sparse_residual_block_pallas.8} parent=0
    _
  %s7 = ssub.s32 1, %s5
  %s8 = scalar_select 0, %s7, %s5
  loop: start=0, step=1, limit=4
  $region2: #{sparse_residual_block_pallas.8} parent=0 // loop_pre_header
    _
  $region3: #{sparse_residual_block_pallas.8} parent=0 // loop_header
    %s10 = sphi 0, %s14
    %p11 = scmp.ge.s32.totalorder %s10, 4
    %s20 = sphi 0, %s22
    %s23 = sphi 0, %s20
    %s24 = sphi 0, %s23
    %s40 = sphi 0, %s24
    %s44 = sphi 0, %s44
    %s46 = sphi 0, %s44
    %s47 = sphi 0, %s46
    %s61 = sphi 0, %s47
    %s67 = sphi 0, %s69
    %s70 = sphi 0, %s67
    %s71 = sphi 0, %s70
    %s87 = sphi 0, %s71
    %s93 = sphi 0, %s95
    %s96 = sphi 0, %s93
    %s97 = sphi 0, %s96
    %s113 = sphi 0, %s97
  $region4: #{sparse_residual_block_pallas.8} parent=0 // loop_header_branch
    %13 = sbr.rel (%p11) target = $region8
  $region5: #{sparse_residual_block_pallas.8} parent=0 // loop_body
    %s15 = ssub.s32 %s10, 1
    %s16 = ssub.s32 %s10, 2
    %s17 = sadd.s32 %s10, 1
    %s18 = ssub.s32 %s10, %s17
    %p19 = scmp.eq.s32.totalorder %s18, 0
    %s21 = sadd.s32 %s20, 1
    %s22 = scalar_select %p19, %s20, %s21
    %p25 = pneg %p19
    %p26 = scmp.eq.s32.totalorder %s10, 1
    %p27 = por %p25, %p26
    %p28 = scmp.ne.s32.totalorder %s20, %s23
    %p29 = scmp.eq.s32.totalorder %s10, 0
    %p30 = por %p28, %p29
    %p31 = scmp.ne.s32.totalorder %s20, %s23
    %p32 = scmp.eq.s32.totalorder %s15, 1
    %p33 = por %p31, %p32
    %p34 = scmp.ne.s32.totalorder %s23, %s24
    %p35 = scmp.eq.s32.totalorder %s15, 0
    %p36 = por %p34, %p35
    %p37 = scmp.ne.s32.totalorder %s23, %s24
    %p38 = scmp.eq.s32.totalorder %s16, 1
    %p39 = por %p37, %p38
    %p41 = scmp.ne.s32.totalorder %s24, %s40
    %p42 = scmp.eq.s32.totalorder %s16, 0
    %p43 = por %p41, %p42
    %s45 = sadd.s32 %s44, 1
    %p48 = scmp.eq.s32.totalorder %s10, 1
    %p49 = scmp.ne.s32.totalorder %s44, %s46
    %p50 = scmp.eq.s32.totalorder %s10, 0
    %p51 = por %p49, %p50
    %p52 = scmp.ne.s32.totalorder %s44, %s46
    %p53 = scmp.eq.s32.totalorder %s15, 1
    %p54 = por %p52, %p53
    %p55 = scmp.ne.s32.totalorder %s46, %s47
    %p56 = scmp.eq.s32.totalorder %s15, 0
    %p57 = por %p55, %p56
    %p58 = scmp.ne.s32.totalorder %s46, %s47
    %p59 = scmp.eq.s32.totalorder %s16, 1
    %p60 = por %p58, %p59
    %p62 = scmp.ne.s32.totalorder %s47, %s61
    %p63 = scmp.eq.s32.totalorder %s16, 0
    %p64 = por %p62, %p63
    %s65 = ssub.s32 %s10, %s17
    %p66 = scmp.eq.s32.totalorder %s65, 0
    %s68 = sadd.s32 %s67, 1
    %s69 = scalar_select %p66, %s67, %s68
    %p72 = pneg %p66
    %p73 = scmp.eq.s32.totalorder %s10, 1
    %p74 = por %p72, %p73
    %p75 = scmp.ne.s32.totalorder %s67, %s70
    %p76 = scmp.eq.s32.totalorder %s10, 0
    %p77 = por %p75, %p76
    %p78 = scmp.ne.s32.totalorder %s67, %s70
    %p79 = scmp.eq.s32.totalorder %s15, 1
    %p80 = por %p78, %p79
    %p81 = scmp.ne.s32.totalorder %s70, %s71
    %p82 = scmp.eq.s32.totalorder %s15, 0
    %p83 = por %p81, %p82
    %p84 = scmp.ne.s32.totalorder %s70, %s71
    %p85 = scmp.eq.s32.totalorder %s16, 1
    %p86 = por %p84, %p85
    %p88 = scmp.ne.s32.totalorder %s71, %s87
    %p89 = scmp.eq.s32.totalorder %s16, 0
    %p90 = por %p88, %p89
    %s91 = ssub.s32 %s10, %s17
    %p92 = scmp.eq.s32.totalorder %s91, 0
    %s94 = sadd.s32 %s93, 1
    %s95 = scalar_select %p92, %s93, %s94
    %p98 = pneg %p92
    %p99 = scmp.eq.s32.totalorder %s10, 1
    %p100 = por %p98, %p99
    %p101 = scmp.ne.s32.totalorder %s93, %s96
    %p102 = scmp.eq.s32.totalorder %s10, 0
    %p103 = por %p101, %p102
    %p104 = scmp.ne.s32.totalorder %s93, %s96
    %p105 = scmp.eq.s32.totalorder %s15, 1
    %p106 = por %p104, %p105
    %p107 = scmp.ne.s32.totalorder %s96, %s97
    %p108 = scmp.eq.s32.totalorder %s15, 0
    %p109 = por %p107, %p108
    %p110 = scmp.ne.s32.totalorder %s96, %s97
    %p111 = scmp.eq.s32.totalorder %s16, 1
    %p112 = por %p110, %p111
    %p114 = scmp.ne.s32.totalorder %s97, %s113
    %p115 = scmp.eq.s32.totalorder %s16, 0
    %p116 = por %p114, %p115
    %p117 = scmp.le.s32.totalorder 1, %s10
    %p118 = scmp.lt.s32.totalorder %s10, 3
    %p119 = pnand %p117, %p118
    %p120 = pneg %p119
    // Predicated region
    $region9: #{sparse_residual_block_pallas.8} parent=5 // pred_check
      _
    $region10: #{sparse_residual_block_pallas.8} parent=5 // pred_check_branch
      %122 = sbr.rel (%p119) target = $region12
    $region11: #{sparse_residual_block_pallas.8} parent=5 // pred_region
      %s123 = ssub.s32 %s10, 1
      // Predicated region
      $region13: #{sparse_residual_block_pallas.8} parent=11 // pred_check
        %p124 = pneg %p57
      $region14: #{sparse_residual_block_pallas.8} parent=11 // pred_check_branch
        %126 = sbr.rel (%p124) target = $region16
      $region15: #{sparse_residual_block_pallas.8} parent=11 // pred_region
        _
      $region16: #{sparse_residual_block_pallas.8} parent=11 // pred_fallthru
        _
    $region12: #{sparse_residual_block_pallas.8} parent=5 // pred_fallthru
      _
    %p127 = scmp.lt.s32.totalorder %s10, 2
    // Predicated region
    $region17: #{sparse_residual_block_pallas.8} parent=5 // pred_check
      %p128 = pneg %p127
    $region18: #{sparse_residual_block_pallas.8} parent=5 // pred_check_branch
      %130 = sbr.rel (%p128) target = $region20
    $region19: #{sparse_residual_block_pallas.8} parent=5 // pred_region
      // Predicated region
      $region21: #{sparse_residual_block_pallas.8} parent=19 // pred_check
        %p131 = pneg %p30
      $region22: #{sparse_residual_block_pallas.8} parent=19 // pred_check_branch
        %133 = sbr.rel (%p131) target = $region24
      $region23: #{sparse_residual_block_pallas.8} parent=19 // pred_region
        %s134 = smul.u32 16, %s10
        %p135 = scmp.lt.s32.totalorder %s134, 31
        %s136 = scalar_select %p135, %s134, 31
        %s137 = smul.addr %s136, 4
        %s138 = scalar_lea.vmem %s0, %s137
        %s139 = smul.u32 16, %s10
      $region24: #{sparse_residual_block_pallas.8} parent=19 // pred_fallthru
        _
    $region20: #{sparse_residual_block_pallas.8} parent=5 // pred_fallthru
      _
    %p140 = scmp.le.s32.totalorder 1, %s10
    %p141 = scmp.lt.s32.totalorder %s10, 3
    %p142 = pnand %p140, %p141
    %p143 = pneg %p142
    // Predicated region
    $region25: #{sparse_residual_block_pallas.8} parent=5 // pred_check
      _
    $region26: #{sparse_residual_block_pallas.8} parent=5 // pred_check_branch
      %145 = sbr.rel (%p142) target = $region28
    $region27: #{sparse_residual_block_pallas.8} parent=5 // pred_region
      %s146 = ssub.s32 %s10, 1
      %s147 = smul.u32 16, %s15
      %p148 = scmp.lt.s32.totalorder %s147, 31
      %s149 = scalar_select %p148, %s147, 31
      %s150 = smul.addr %s149, 4
      %s151 = scalar_lea.vmem %s0, %s150
      %p152 = pneg %p36
      %p153 = pneg %p33
      %p154 = pneg %p57
      %p155 = pneg %p54
      %p156 = pneg %p83
      %p157 = pneg %p80
      %s158 = smul.u32 16, %s15
      %p159 = scmp.lt.s32.totalorder %s158, 31
      %s160 = scalar_select %p159, %s158, 31
      %s161 = smul.addr %s160, 8
      %s162 = scalar_lea.vmem %s2, %s161
      %p163 = pneg %p109
      %p164 = pneg %p106
      %p165 = scmp.lt.s32.totalorder %s15, 1
      %s166 = scalar_select %p165, %s15, 1
      %s167 = smul.addr %s166, 8
      %s168 = scalar_lea.vmem %s3, %s167
      %s169 = smul.u32 16, %s15
      %p170 = scmp.lt.s32.totalorder %s169, 31
      %s171 = scalar_select %p170, %s169, 31
      %s172 = smul.addr %s171, 4
      %s173 = scalar_lea.vmem %s0, %s172
      %s174 = smul.u32 16, %s15
      %s175 = smul.u32 16, %s15
      %p176 = scmp.lt.s32.totalorder %s175, 31
      %s177 = scalar_select %p176, %s175, 31
      %s178 = smul.addr %s177, 8
      %s179 = scalar_lea.vmem %s2, %s178
      %s180 = smul.u32 16, %s15
      %p181 = scmp.lt.s32.totalorder %s15, 1
      %s182 = scalar_select %p181, %s15, 1
      %s183 = smul.addr %s182, 8
      %s184 = scalar_lea.vmem %s3, %s183
      %v186 = vld [vmem:[%s173] sm:$0xf]
      %v187 = vld [vmem:[%s173 + $0x4] sm:$0xf]
      %v188 = vld [vmem:[%s173 + $0x8] sm:$0xf]
      %v189 = vld [vmem:[%s173 + $0xc] sm:$0xf]
      %v190 = vld [vmem:[%s173 + $0x10] sm:$0xf]
      %v191 = vld [vmem:[%s173 + $0x14] sm:$0xf]
      %v192 = vld [vmem:[%s173 + $0x18] sm:$0xf]
      %v193 = vld [vmem:[%s173 + $0x1c] sm:$0xf]
      %v194 = vld [vmem:[%s173 + $0x20] sm:$0xf]
      %v195 = vld [vmem:[%s173 + $0x24] sm:$0xf]
      %v196 = vld [vmem:[%s173 + $0x28] sm:$0xf]
      %v197 = vld [vmem:[%s173 + $0x2c] sm:$0xf]
      %v198 = vld [vmem:[%s173 + $0x30] sm:$0xf]
      %v199 = vld [vmem:[%s173 + $0x34] sm:$0xf]
      %v200 = vld [vmem:[%s173 + $0x38] sm:$0xf]
      %v201 = vld [vmem:[%s173 + $0x3c] sm:$0xf]
      %v202 = vld [vmem:[%s1] sm:$0xf]
      %v203 = vld [vmem:[%s1 + $0x4] sm:$0xf]
      %v204 = vld [vmem:[%s1 + $0x8] sm:$0xf]
      %v205 = vld [vmem:[%s1 + $0xc] sm:$0xf]
      %v206 = vld [vmem:[%s1 + $0x10] sm:$0xf]
      %v207 = vld [vmem:[%s1 + $0x14] sm:$0xf]
      %v208 = vld [vmem:[%s1 + $0x18] sm:$0xf]
      %v209 = vld [vmem:[%s1 + $0x1c] sm:$0xf]
      %v210 = vld [vmem:[%s1 + $0x20] sm:$0xf]
      %v211 = vld [vmem:[%s1 + $0x24] sm:$0xf]
      %v212 = vld [vmem:[%s1 + $0x28] sm:$0xf]
      %v213 = vld [vmem:[%s1 + $0x2c] sm:$0xf]
      %v214 = vld [vmem:[%s1 + $0x30] sm:$0xf]
      %v215 = vld [vmem:[%s1 + $0x34] sm:$0xf]
      %v216 = vld [vmem:[%s1 + $0x38] sm:$0xf]
      %v217 = vld [vmem:[%s1 + $0x3c] sm:$0xf]
      %v234 = vunpack.c.l.b16 %v186
      %v235 = vunpack.c.l.b16 %v187
      %v236 = vunpack.c.l.b16 %v188
      %v237 = vunpack.c.l.b16 %v189
      %v238 = vunpack.c.l.b16 %v190
      %v239 = vunpack.c.l.b16 %v191
      %v240 = vunpack.c.l.b16 %v192
      %v241 = vunpack.c.l.b16 %v193
      %v242 = vunpack.c.l.b16 %v194
      %v243 = vunpack.c.l.b16 %v195
      %v244 = vunpack.c.l.b16 %v196
      %v245 = vunpack.c.l.b16 %v197
      %v246 = vunpack.c.l.b16 %v198
      %v247 = vunpack.c.l.b16 %v199
      %v248 = vunpack.c.l.b16 %v200
      %v249 = vunpack.c.l.b16 %v201
      %v250 = vpack.c.b16 %v235, %v234
      %v251 = vpack.c.b16 %v237, %v236
      %v252 = vpack.c.b16 %v239, %v238
      %v253 = vpack.c.b16 %v241, %v240
      %v254 = vpack.c.b16 %v243, %v242
      %v255 = vpack.c.b16 %v245, %v244
      %v256 = vpack.c.b16 %v247, %v246
      %v257 = vpack.c.b16 %v249, %v248
      %v282 = vunpack.c.l.b16 %v202
      %v283 = vunpack.c.l.b16 %v203
      %v284 = vunpack.c.l.b16 %v204
      %v285 = vunpack.c.l.b16 %v205
      %v286 = vunpack.c.l.b16 %v206
      %v287 = vunpack.c.l.b16 %v207
      %v288 = vunpack.c.l.b16 %v208
      %v289 = vunpack.c.l.b16 %v209
      %v290 = vunpack.c.l.b16 %v210
      %v291 = vunpack.c.l.b16 %v211
      %v292 = vunpack.c.l.b16 %v212
      %v293 = vunpack.c.l.b16 %v213
      %v294 = vunpack.c.l.b16 %v214
      %v295 = vunpack.c.l.b16 %v215
      %v296 = vunpack.c.l.b16 %v216
      %v297 = vunpack.c.l.b16 %v217
      %v298 = vpack.c.b16 %v283, %v282
      %v299 = vpack.c.b16 %v285, %v284
      %v300 = vpack.c.b16 %v287, %v286
      %v301 = vpack.c.b16 %v289, %v288
      %v302 = vpack.c.b16 %v291, %v290
      %v303 = vpack.c.b16 %v293, %v292
      %v304 = vpack.c.b16 %v295, %v294
      %v305 = vpack.c.b16 %v297, %v296
      %314 = vmatprep.subr.bf16.mxu0 0
      %315 = vmatpush1.bf16.msra.mxu0 %v298
      %316 = vmatprep.subr.bf16.mxu0 0
      %317 = vmatpush1.bf16.msra.mxu0 %v299
      %318 = vmatprep.subr.bf16.mxu0 0
      %319 = vmatpush1.bf16.msra.mxu0 %v300
      %320 = vmatprep.subr.bf16.mxu0 0
      %321 = vmatpush1.bf16.msra.mxu0 %v301
      %322 = vmatprep.subr.bf16.mxu0 0
      %323 = vmatpush1.bf16.msra.mxu0 %v302
      %324 = vmatprep.subr.bf16.mxu0 0
      %325 = vmatpush1.bf16.msra.mxu0 %v303
      %326 = vmatprep.subr.bf16.mxu0 0
      %327 = vmatpush1.bf16.msra.mxu0 %v304
      %328 = vmatprep.subr.bf16.mxu0 0
      %329 = vmatpush1.bf16.msra.mxu0 %v305
      %330 = vmatprep.subr.bf16.mxu0 0
      %331 = vmatpush1.bf16.msra.mxu0 0
      %332 = vmatprep.subr.bf16.mxu0 0
      %333 = vmatpush1.bf16.msra.mxu0 0
      %334 = vmatprep.subr.bf16.mxu0 0
      %335 = vmatpush1.bf16.msra.mxu0 0
      %336 = vmatprep.subr.bf16.mxu0 0
      %337 = vmatpush1.bf16.msra.mxu0 0
      %338 = vmatprep.subr.bf16.mxu0 0
      %339 = vmatpush1.bf16.msra.mxu0 0
      %340 = vmatprep.subr.bf16.mxu0 0
      %341 = vmatpush1.bf16.msra.mxu0 0
      %342 = vmatprep.subr.bf16.mxu0 0
      %343 = vmatpush1.bf16.msra.mxu0 0
      %344 = vmatprep.subr.bf16.mxu0 0
      %345 = vmatpush1.bf16.msra.mxu0 0
      %346 = vmatprep.mubr.bf16.mxu0 0
      %347 = vmatmul.mubr.bf16.gmra.mrb[0].mxu0 %v250
      %v348 = vpop.f32.mrb[0].mxu0
      %v349 = vadd.f32 0.0, %v348
      %v350 = vpop.f32.mrb[0].mxu0
      %v351 = vpop.f32.mrb[0].mxu0
      %v352 = vadd.f32 0.0, %v351
      %v353 = vpop.f32.mrb[0].mxu0
      %354 = vmatprep.mubr.bf16.mxu0 0
      %355 = vmatmul.mubr.bf16.gmra.mrb[0].mxu0 %v251
      %v356 = vpop.f32.mrb[0].mxu0
      %v357 = vadd.f32 0.0, %v356
      %v358 = vpop.f32.mrb[0].mxu0
      %v359 = vpop.f32.mrb[0].mxu0
      %v360 = vadd.f32 0.0, %v359
      %v361 = vpop.f32.mrb[0].mxu0
      %362 = vmatprep.mubr.bf16.mxu0 0
      %363 = vmatmul.mubr.bf16.gmra.mrb[0].mxu0 %v252
      %v364 = vpop.f32.mrb[0].mxu0
      %v365 = vadd.f32 0.0, %v364
      %v366 = vpop.f32.mrb[0].mxu0
      %v367 = vpop.f32.mrb[0].mxu0
      %v368 = vadd.f32 0.0, %v367
      %v369 = vpop.f32.mrb[0].mxu0
      %370 = vmatprep.mubr.bf16.mxu0 0
      %371 = vmatmul.mubr.bf16.gmra.mrb[0].mxu0 %v253
      %v372 = vpop.f32.mrb[0].mxu0
      %v373 = vadd.f32 0.0, %v372
      %v374 = vpop.f32.mrb[0].mxu0
      %v375 = vpop.f32.mrb[0].mxu0
      %v376 = vadd.f32 0.0, %v375
      %v377 = vpop.f32.mrb[0].mxu0
      %378 = vmatprep.mubr.bf16.mxu0 0
      %379 = vmatmul.mubr.bf16.gmra.mrb[0].mxu0 %v254
      %v380 = vpop.f32.mrb[0].mxu0
      %v381 = vadd.f32 0.0, %v380
      %v382 = vpop.f32.mrb[0].mxu0
      %v383 = vpop.f32.mrb[0].mxu0
      %v384 = vadd.f32 0.0, %v383
      %v385 = vpop.f32.mrb[0].mxu0
      %386 = vmatprep.mubr.bf16.mxu0 0
      %387 = vmatmul.mubr.bf16.gmra.mrb[0].mxu0 %v255
      %v388 = vpop.f32.mrb[0].mxu0
      %v389 = vadd.f32 0.0, %v388
      %v390 = vpop.f32.mrb[0].mxu0
      %v391 = vpop.f32.mrb[0].mxu0
      %v392 = vadd.f32 0.0, %v391
      %v393 = vpop.f32.mrb[0].mxu0
      %394 = vmatprep.mubr.bf16.mxu0 0
      %395 = vmatmul.mubr.bf16.gmra.mrb[0].mxu0 %v256
      %v396 = vpop.f32.mrb[0].mxu0
      %v397 = vadd.f32 0.0, %v396
      %v398 = vpop.f32.mrb[0].mxu0
      %v399 = vpop.f32.mrb[0].mxu0
      %v400 = vadd.f32 0.0, %v399
      %v401 = vpop.f32.mrb[0].mxu0
      %402 = vmatprep.mubr.bf16.mxu0 0
      %403 = vmatmul.mubr.bf16.gmra.mrb[0].mxu0 %v257
      %v404 = vpop.f32.mrb[0].mxu0
      %v405 = vadd.f32 0.0, %v404
      %v406 = vpop.f32.mrb[0].mxu0
      %v407 = vpop.f32.mrb[0].mxu0
      %v408 = vadd.f32 0.0, %v407
      %v409 = vpop.f32.mrb[0].mxu0
      %410 = vdwg.mxu0
      %411 = vst [vmem:[%s179] sm:$0xff] %v349
      %412 = vst [vmem:[%s179 + $0x8] sm:$0xff] %v352
      %413 = vst [vmem:[%s179 + $0x10] sm:$0xff] %v357
      %414 = vst [vmem:[%s179 + $0x18] sm:$0xff] %v360
      %415 = vst [vmem:[%s179 + $0x20] sm:$0xff] %v365
      %416 = vst [vmem:[%s179 + $0x28] sm:$0xff] %v368
      %417 = vst [vmem:[%s179 + $0x30] sm:$0xff] %v373
      %418 = vst [vmem:[%s179 + $0x38] sm:$0xff] %v376
      %419 = vst [vmem:[%s179 + $0x40] sm:$0xff] %v381
      %420 = vst [vmem:[%s179 + $0x48] sm:$0xff] %v384
      %421 = vst [vmem:[%s179 + $0x50] sm:$0xff] %v389
      %422 = vst [vmem:[%s179 + $0x58] sm:$0xff] %v392
      %423 = vst [vmem:[%s179 + $0x60] sm:$0xff] %v397
      %424 = vst [vmem:[%s179 + $0x68] sm:$0xff] %v400
      %425 = vst [vmem:[%s179 + $0x70] sm:$0xff] %v405
      %426 = vst [vmem:[%s179 + $0x78] sm:$0xff] %v408
      %v427 = vadd.f32 %v349, %v352
      %v428 = vadd.f32 %v427, %v357
      %v429 = vadd.f32 %v428, %v360
      %v430 = vadd.f32 %v429, %v365
      %v431 = vadd.f32 %v430, %v368
      %v432 = vadd.f32 %v431, %v373
      %v433 = vadd.f32 %v432, %v376
      %v434 = vadd.f32 %v433, %v381
      %v435 = vadd.f32 %v434, %v384
      %v436 = vadd.f32 %v435, %v389
      %v437 = vadd.f32 %v436, %v392
      %v438 = vadd.f32 %v437, %v397
      %v439 = vadd.f32 %v438, %v400
      %v440 = vadd.f32 %v439, %v405
      %v441 = vadd.f32 %v440, %v408
      %v442 = vrot.slane %v441, 4
      %v443 = vadd.f32 %v441, %v442
      %v444 = vrot.slane %v443, 2
      %v445 = vadd.f32 %v443, %v444
      %v446 = vrot.slane %v445, 1
      %v447 = vadd.f32 %v445, %v446
      %v448 = vmul.f32 %v349, %v349
      %v449 = vmul.f32 %v352, %v352
      %v450 = vmul.f32 %v357, %v357
      %v451 = vmul.f32 %v360, %v360
      %v452 = vmul.f32 %v365, %v365
      %v453 = vmul.f32 %v368, %v368
      %v454 = vmul.f32 %v373, %v373
      %v455 = vmul.f32 %v376, %v376
      %v456 = vmul.f32 %v381, %v381
      %v457 = vmul.f32 %v384, %v384
      %v458 = vmul.f32 %v389, %v389
      %v459 = vmul.f32 %v392, %v392
      %v460 = vmul.f32 %v397, %v397
      %v461 = vmul.f32 %v400, %v400
      %v462 = vmul.f32 %v405, %v405
      %v463 = vmul.f32 %v408, %v408
      %v464 = vadd.f32 %v448, %v449
      %v465 = vadd.f32 %v464, %v450
      %v466 = vadd.f32 %v465, %v451
      %v467 = vadd.f32 %v466, %v452
      %v468 = vadd.f32 %v467, %v453
      %v469 = vadd.f32 %v468, %v454
      %v470 = vadd.f32 %v469, %v455
      %v471 = vadd.f32 %v470, %v456
      %v472 = vadd.f32 %v471, %v457
      %v473 = vadd.f32 %v472, %v458
      %v474 = vadd.f32 %v473, %v459
      %v475 = vadd.f32 %v474, %v460
      %v476 = vadd.f32 %v475, %v461
      %v477 = vadd.f32 %v476, %v462
      %v478 = vadd.f32 %v477, %v463
      %v479 = vrot.slane %v478, 4
      %v480 = vadd.f32 %v478, %v479
      %v481 = vrot.slane %v480, 2
      %v482 = vadd.f32 %v480, %v481
      %v483 = vrot.slane %v482, 1
      %v484 = vadd.f32 %v482, %v483
      %v485 = vlaneseq
      %v486 = vshrl.u32 %v485, 7
      %vm487 = vcmp.eq.s32.totalorder %v486, 0
      %vm488 = vcmp.eq.s32.totalorder %v486, 1
      %v489 = vsel %vm488, %v484, 0.0
      %v490 = vsel %vm487, %v447, %v489
      %491 = vst [vmem:[%s184] sm:$0xff] %v490
      %s492 = smul.u32 16, %s15
      %p493 = scmp.lt.s32.totalorder %s492, 31
      %s494 = scalar_select %p493, %s492, 31
      %s495 = smul.addr %s494, 8
      %s496 = scalar_lea.vmem %s2, %s495
      %p497 = scmp.lt.s32.totalorder %s15, 1
      %s498 = scalar_select %p497, %s15, 1
      %s499 = smul.addr %s498, 8
      %s500 = scalar_lea.vmem %s3, %s499
      // Predicated region
      $region29: #{sparse_residual_block_pallas.8} parent=27 // pred_check
        %p501 = pneg %p80
      $region30: #{sparse_residual_block_pallas.8} parent=27 // pred_check_branch
        %503 = sbr.rel (%p501) target = $region32
      $region31: #{sparse_residual_block_pallas.8} parent=27 // pred_region
        %s504 = smul.u32 16, %s15
      $region32: #{sparse_residual_block_pallas.8} parent=27 // pred_fallthru
        _
      // Predicated region
      $region33: #{sparse_residual_block_pallas.8} parent=27 // pred_check
        %p505 = pneg %p106
      $region34: #{sparse_residual_block_pallas.8} parent=27 // pred_check_branch
        %507 = sbr.rel (%p505) target = $region36
      $region35: #{sparse_residual_block_pallas.8} parent=27 // pred_region
        _
      $region36: #{sparse_residual_block_pallas.8} parent=27 // pred_fallthru
        _
    $region28: #{sparse_residual_block_pallas.8} parent=5 // pred_fallthru
      _
    %p508 = scmp.le.s32.totalorder 2, %s10
    // Predicated region
    $region37: #{sparse_residual_block_pallas.8} parent=5 // pred_check
      %p509 = pneg %p508
    $region38: #{sparse_residual_block_pallas.8} parent=5 // pred_check_branch
      %511 = sbr.rel (%p509) target = $region40
    $region39: #{sparse_residual_block_pallas.8} parent=5 // pred_region
      %s512 = ssub.s32 %s10, 2
      // Predicated region
      $region41: #{sparse_residual_block_pallas.8} parent=39 // pred_check
        %p513 = pneg %p86
      $region42: #{sparse_residual_block_pallas.8} parent=39 // pred_check_branch
        %515 = sbr.rel (%p513) target = $region44
      $region43: #{sparse_residual_block_pallas.8} parent=39 // pred_region
        %s516 = smul.u32 16, %s16
        %p517 = scmp.lt.s32.totalorder %s516, 31
        %s518 = scalar_select %p517, %s516, 31
        %s519 = smul.addr %s518, 8
        %s520 = scalar_lea.vmem %s2, %s519
      $region44: #{sparse_residual_block_pallas.8} parent=39 // pred_fallthru
        _
      // Predicated region
      $region45: #{sparse_residual_block_pallas.8} parent=39 // pred_check
        %p521 = pneg %p112
      $region46: #{sparse_residual_block_pallas.8} parent=39 // pred_check_branch
        %523 = sbr.rel (%p521) target = $region48
      $region47: #{sparse_residual_block_pallas.8} parent=39 // pred_region
        %p524 = scmp.lt.s32.totalorder %s16, 1
        %s525 = scalar_select %p524, %s16, 1
        %s526 = smul.addr %s525, 8
        %s527 = scalar_lea.vmem %s3, %s526
      $region48: #{sparse_residual_block_pallas.8} parent=39 // pred_fallthru
        _
    $region40: #{sparse_residual_block_pallas.8} parent=5 // pred_fallthru
      _
  $region6: #{sparse_residual_block_pallas.8} parent=0 // loop_footer
    %s14 = sadd.s32 1, %s10
  $region7: #{sparse_residual_block_pallas.8} parent=0 // loop_footer_branch
    %9 = sbr.rel target = $region3
  $region8: #{sparse_residual_block_pallas.8} parent=0 // loop_exit
    _

// kernel: sparse_residual_block_pallas.9
$region0: #{sparse_residual_block_pallas.9}
  #allocation0 [shape = 'u32[]', space=smem, size = 0x4, offset = 0x4, fixed_abs, tag = 'smem constant byte address 0x4 - core index']
  #allocation1 [shape = 'u32[144,128]{1,0:T(1,128)}', space=vmem, size = 0x12000, scoped, tag = 'internal scratch']
  %s0 = inlined_call_operand.vmem [shape: f32[256,128], index: 0, kind: input, shape index: {}]
  %s1 = inlined_call_operand.vmem [shape: f32[256,128], index: 1, kind: input, shape index: {}]
  %s2 = inlined_call_operand.vmem [shape: f32[1,128], index: 2, kind: input, shape index: {}]
  %s3 = inlined_call_operand.vmem [shape: f32[1,128], index: 3, kind: input, shape index: {}]
  %s4 = inlined_call_operand.vmem [shape: f32[1,128], index: 4, kind: input, shape index: {}]
  %s5 = inlined_call_operand.vmem [shape: f32[1,128], index: 5, kind: input, shape index: {}]
  %s6 = inlined_call_operand.vmem [shape: f32[256,128], index: 6, kind: output, shape index: {}]
  %s7 = sld [smem:[#allocation0]]
  $region57: #{sparse_residual_block_pallas.9} parent=0
    _
  %s9 = ssub.s32 1, %s7
  %s10 = scalar_select 0, %s9, %s7
  loop: start=0, step=1, limit=4
  $region2: #{sparse_residual_block_pallas.9} parent=0 // loop_pre_header
    _
  $region3: #{sparse_residual_block_pallas.9} parent=0 // loop_header
    %s12 = sphi 0, %s16
    %p13 = scmp.ge.s32.totalorder %s12, 4
    %s22 = sphi 0, %s24
    %s25 = sphi 0, %s22
    %s26 = sphi 0, %s25
    %s42 = sphi 0, %s26
    %s48 = sphi 0, %s50
    %s51 = sphi 0, %s48
    %s52 = sphi 0, %s51
    %s68 = sphi 0, %s52
    %s72 = sphi 0, %s72
    %s74 = sphi 0, %s72
    %s75 = sphi 0, %s74
    %s89 = sphi 0, %s75
    %s93 = sphi 0, %s93
    %s95 = sphi 0, %s93
    %s96 = sphi 0, %s95
    %s110 = sphi 0, %s96
    %s114 = sphi 0, %s114
    %s116 = sphi 0, %s114
    %s117 = sphi 0, %s116
    %s131 = sphi 0, %s117
    %s135 = sphi 0, %s135
    %s137 = sphi 0, %s135
    %s138 = sphi 0, %s137
    %s152 = sphi 0, %s138
    %s158 = sphi 0, %s160
    %s161 = sphi 0, %s158
    %s162 = sphi 0, %s161
    %s178 = sphi 0, %s162
  $region4: #{sparse_residual_block_pallas.9} parent=0 // loop_header_branch
    %15 = sbr.rel (%p13) target = $region8
  $region5: #{sparse_residual_block_pallas.9} parent=0 // loop_body
    %s17 = ssub.s32 %s12, 1
    %s18 = ssub.s32 %s12, 2
    %s19 = sadd.s32 %s12, 1
    %s20 = ssub.s32 %s12, %s19
    %p21 = scmp.eq.s32.totalorder %s20, 0
    %s23 = sadd.s32 %s22, 1
    %s24 = scalar_select %p21, %s22, %s23
    %p27 = pneg %p21
    %p28 = scmp.eq.s32.totalorder %s12, 1
    %p29 = por %p27, %p28
    %p30 = scmp.ne.s32.totalorder %s22, %s25
    %p31 = scmp.eq.s32.totalorder %s12, 0
    %p32 = por %p30, %p31
    %p33 = scmp.ne.s32.totalorder %s22, %s25
    %p34 = scmp.eq.s32.totalorder %s17, 1
    %p35 = por %p33, %p34
    %p36 = scmp.ne.s32.totalorder %s25, %s26
    %p37 = scmp.eq.s32.totalorder %s17, 0
    %p38 = por %p36, %p37
    %p39 = scmp.ne.s32.totalorder %s25, %s26
    %p40 = scmp.eq.s32.totalorder %s18, 1
    %p41 = por %p39, %p40
    %p43 = scmp.ne.s32.totalorder %s26, %s42
    %p44 = scmp.eq.s32.totalorder %s18, 0
    %p45 = por %p43, %p44
    %s46 = ssub.s32 %s12, %s19
    %p47 = scmp.eq.s32.totalorder %s46, 0
    %s49 = sadd.s32 %s48, 1
    %s50 = scalar_select %p47, %s48, %s49
    %p53 = pneg %p47
    %p54 = scmp.eq.s32.totalorder %s12, 1
    %p55 = por %p53, %p54
    %p56 = scmp.ne.s32.totalorder %s48, %s51
    %p57 = scmp.eq.s32.totalorder %s12, 0
    %p58 = por %p56, %p57
    %p59 = scmp.ne.s32.totalorder %s48, %s51
    %p60 = scmp.eq.s32.totalorder %s17, 1
    %p61 = por %p59, %p60
    %p62 = scmp.ne.s32.totalorder %s51, %s52
    %p63 = scmp.eq.s32.totalorder %s17, 0
    %p64 = por %p62, %p63
    %p65 = scmp.ne.s32.totalorder %s51, %s52
    %p66 = scmp.eq.s32.totalorder %s18, 1
    %p67 = por %p65, %p66
    %p69 = scmp.ne.s32.totalorder %s52, %s68
    %p70 = scmp.eq.s32.totalorder %s18, 0
    %p71 = por %p69, %p70
    %s73 = sadd.s32 %s72, 1
    %p76 = scmp.eq.s32.totalorder %s12, 1
    %p77 = scmp.ne.s32.totalorder %s72, %s74
    %p78 = scmp.eq.s32.totalorder %s12, 0
    %p79 = por %p77, %p78
    %p80 = scmp.ne.s32.totalorder %s72, %s74
    %p81 = scmp.eq.s32.totalorder %s17, 1
    %p82 = por %p80, %p81
    %p83 = scmp.ne.s32.totalorder %s74, %s75
    %p84 = scmp.eq.s32.totalorder %s17, 0
    %p85 = por %p83, %p84
    %p86 = scmp.ne.s32.totalorder %s74, %s75
    %p87 = scmp.eq.s32.totalorder %s18, 1
    %p88 = por %p86, %p87
    %p90 = scmp.ne.s32.totalorder %s75, %s89
    %p91 = scmp.eq.s32.totalorder %s18, 0
    %p92 = por %p90, %p91
    %s94 = sadd.s32 %s93, 1
    %p97 = scmp.eq.s32.totalorder %s12, 1
    %p98 = scmp.ne.s32.totalorder %s93, %s95
    %p99 = scmp.eq.s32.totalorder %s12, 0
    %p100 = por %p98, %p99
    %p101 = scmp.ne.s32.totalorder %s93, %s95
    %p102 = scmp.eq.s32.totalorder %s17, 1
    %p103 = por %p101, %p102
    %p104 = scmp.ne.s32.totalorder %s95, %s96
    %p105 = scmp.eq.s32.totalorder %s17, 0
    %p106 = por %p104, %p105
    %p107 = scmp.ne.s32.totalorder %s95, %s96
    %p108 = scmp.eq.s32.totalorder %s18, 1
    %p109 = por %p107, %p108
    %p111 = scmp.ne.s32.totalorder %s96, %s110
    %p112 = scmp.eq.s32.totalorder %s18, 0
    %p113 = por %p111, %p112
    %s115 = sadd.s32 %s114, 1
    %p118 = scmp.eq.s32.totalorder %s12, 1
    %p119 = scmp.ne.s32.totalorder %s114, %s116
    %p120 = scmp.eq.s32.totalorder %s12, 0
    %p121 = por %p119, %p120
    %p122 = scmp.ne.s32.totalorder %s114, %s116
    %p123 = scmp.eq.s32.totalorder %s17, 1
    %p124 = por %p122, %p123
    %p125 = scmp.ne.s32.totalorder %s116, %s117
    %p126 = scmp.eq.s32.totalorder %s17, 0
    %p127 = por %p125, %p126
    %p128 = scmp.ne.s32.totalorder %s116, %s117
    %p129 = scmp.eq.s32.totalorder %s18, 1
    %p130 = por %p128, %p129
    %p132 = scmp.ne.s32.totalorder %s117, %s131
    %p133 = scmp.eq.s32.totalorder %s18, 0
    %p134 = por %p132, %p133
    %s136 = sadd.s32 %s135, 1
    %p139 = scmp.eq.s32.totalorder %s12, 1
    %p140 = scmp.ne.s32.totalorder %s135, %s137
    %p141 = scmp.eq.s32.totalorder %s12, 0
    %p142 = por %p140, %p141
    %p143 = scmp.ne.s32.totalorder %s135, %s137
    %p144 = scmp.eq.s32.totalorder %s17, 1
    %p145 = por %p143, %p144
    %p146 = scmp.ne.s32.totalorder %s137, %s138
    %p147 = scmp.eq.s32.totalorder %s17, 0
    %p148 = por %p146, %p147
    %p149 = scmp.ne.s32.totalorder %s137, %s138
    %p150 = scmp.eq.s32.totalorder %s18, 1
    %p151 = por %p149, %p150
    %p153 = scmp.ne.s32.totalorder %s138, %s152
    %p154 = scmp.eq.s32.totalorder %s18, 0
    %p155 = por %p153, %p154
    %s156 = ssub.s32 %s12, %s19
    %p157 = scmp.eq.s32.totalorder %s156, 0
    %s159 = sadd.s32 %s158, 1
    %s160 = scalar_select %p157, %s158, %s159
    %p163 = pneg %p157
    %p164 = scmp.eq.s32.totalorder %s12, 1
    %p165 = por %p163, %p164
    %p166 = scmp.ne.s32.totalorder %s158, %s161
    %p167 = scmp.eq.s32.totalorder %s12, 0
    %p168 = por %p166, %p167
    %p169 = scmp.ne.s32.totalorder %s158, %s161
    %p170 = scmp.eq.s32.totalorder %s17, 1
    %p171 = por %p169, %p170
    %p172 = scmp.ne.s32.totalorder %s161, %s162
    %p173 = scmp.eq.s32.totalorder %s17, 0
    %p174 = por %p172, %p173
    %p175 = scmp.ne.s32.totalorder %s161, %s162
    %p176 = scmp.eq.s32.totalorder %s18, 1
    %p177 = por %p175, %p176
    %p179 = scmp.ne.s32.totalorder %s162, %s178
    %p180 = scmp.eq.s32.totalorder %s18, 0
    %p181 = por %p179, %p180
    %p182 = scmp.le.s32.totalorder 1, %s12
    %p183 = scmp.lt.s32.totalorder %s12, 3
    %p184 = pnand %p182, %p183
    %p185 = pneg %p184
    // Predicated region
    $region9: #{sparse_residual_block_pallas.9} parent=5 // pred_check
      _
    $region10: #{sparse_residual_block_pallas.9} parent=5 // pred_check_branch
      %187 = sbr.rel (%p184) target = $region12
    $region11: #{sparse_residual_block_pallas.9} parent=5 // pred_region
      %s188 = ssub.s32 %s12, 1
      // Predicated region
      $region13: #{sparse_residual_block_pallas.9} parent=11 // pred_check
        %p189 = pneg %p85
      $region14: #{sparse_residual_block_pallas.9} parent=11 // pred_check_branch
        %191 = sbr.rel (%p189) target = $region16
      $region15: #{sparse_residual_block_pallas.9} parent=11 // pred_region
        _
      $region16: #{sparse_residual_block_pallas.9} parent=11 // pred_fallthru
        _
      // Predicated region
      $region17: #{sparse_residual_block_pallas.9} parent=11 // pred_check
        %p192 = pneg %p106
      $region18: #{sparse_residual_block_pallas.9} parent=11 // pred_check_branch
        %194 = sbr.rel (%p192) target = $region20
      $region19: #{sparse_residual_block_pallas.9} parent=11 // pred_region
        _
      $region20: #{sparse_residual_block_pallas.9} parent=11 // pred_fallthru
        _
      // Predicated region
      $region21: #{sparse_residual_block_pallas.9} parent=11 // pred_check
        %p195 = pneg %p127
      $region22: #{sparse_residual_block_pallas.9} parent=11 // pred_check_branch
        %197 = sbr.rel (%p195) target = $region24
      $region23: #{sparse_residual_block_pallas.9} parent=11 // pred_region
        _
      $region24: #{sparse_residual_block_pallas.9} parent=11 // pred_fallthru
        _
      // Predicated region
      $region25: #{sparse_residual_block_pallas.9} parent=11 // pred_check
        %p198 = pneg %p148
      $region26: #{sparse_residual_block_pallas.9} parent=11 // pred_check_branch
        %200 = sbr.rel (%p198) target = $region28
      $region27: #{sparse_residual_block_pallas.9} parent=11 // pred_region
        _
      $region28: #{sparse_residual_block_pallas.9} parent=11 // pred_fallthru
        _
    $region12: #{sparse_residual_block_pallas.9} parent=5 // pred_fallthru
      _
    %p201 = scmp.lt.s32.totalorder %s12, 2
    // Predicated region
    $region29: #{sparse_residual_block_pallas.9} parent=5 // pred_check
      %p202 = pneg %p201
    $region30: #{sparse_residual_block_pallas.9} parent=5 // pred_check_branch
      %204 = sbr.rel (%p202) target = $region32
    $region31: #{sparse_residual_block_pallas.9} parent=5 // pred_region
      // Predicated region
      $region33: #{sparse_residual_block_pallas.9} parent=31 // pred_check
        %p205 = pneg %p32
      $region34: #{sparse_residual_block_pallas.9} parent=31 // pred_check_branch
        %207 = sbr.rel (%p205) target = $region36
      $region35: #{sparse_residual_block_pallas.9} parent=31 // pred_region
        %s208 = smul.u32 16, %s12
        %p209 = scmp.lt.s32.totalorder %s208, 31
        %s210 = scalar_select %p209, %s208, 31
        %s211 = smul.addr %s210, 8
        %s212 = scalar_lea.vmem %s0, %s211
        %s213 = smul.u32 16, %s12
      $region36: #{sparse_residual_block_pallas.9} parent=31 // pred_fallthru
        _
      // Predicated region
      $region37: #{sparse_residual_block_pallas.9} parent=31 // pred_check
        %p214 = pneg %p58
      $region38: #{sparse_residual_block_pallas.9} parent=31 // pred_check_branch
        %216 = sbr.rel (%p214) target = $region40
      $region39: #{sparse_residual_block_pallas.9} parent=31 // pred_region
        %s217 = smul.u32 16, %s12
        %p218 = scmp.lt.s32.totalorder %s217, 31
        %s219 = scalar_select %p218, %s217, 31
        %s220 = smul.addr %s219, 8
        %s221 = scalar_lea.vmem %s1, %s220
        %s222 = smul.u32 16, %s12
      $region40: #{sparse_residual_block_pallas.9} parent=31 // pred_fallthru
        _
    $region32: #{sparse_residual_block_pallas.9} parent=5 // pred_fallthru
      _
    %p223 = scmp.le.s32.totalorder 1, %s12
    %p224 = scmp.lt.s32.totalorder %s12, 3
    %p225 = pnand %p223, %p224
    %p226 = pneg %p225
    // Predicated region
    $region41: #{sparse_residual_block_pallas.9} parent=5 // pred_check
      _
    $region42: #{sparse_residual_block_pallas.9} parent=5 // pred_check_branch
      %228 = sbr.rel (%p225) target = $region44
    $region43: #{sparse_residual_block_pallas.9} parent=5 // pred_region
      %s229 = ssub.s32 %s12, 1
      %s230 = smul.u32 16, %s17
      %p231 = scmp.lt.s32.totalorder %s230, 31
      %s232 = scalar_select %p231, %s230, 31
      %s233 = smul.addr %s232, 8
      %s234 = scalar_lea.vmem %s0, %s233
      %p235 = pneg %p38
      %p236 = pneg %p35
      %s237 = smul.u32 16, %s17
      %p238 = scmp.lt.s32.totalorder %s237, 31
      %s239 = scalar_select %p238, %s237, 31
      %s240 = smul.addr %s239, 8
      %s241 = scalar_lea.vmem %s1, %s240
      %p242 = pneg %p64
      %p243 = pneg %p61
      %p244 = pneg %p85
      %p245 = pneg %p82
      %p246 = pneg %p106
      %p247 = pneg %p103
      %p248 = pneg %p127
      %p249 = pneg %p124
      %p250 = pneg %p148
      %p251 = pneg %p145
      %p252 = pneg %p174
      %p253 = pneg %p171
      %s254 = smul.u32 16, %s17
      %p255 = scmp.lt.s32.totalorder %s254, 31
      %s256 = scalar_select %p255, %s254, 31
      %s257 = smul.addr %s256, 8
      %s258 = scalar_lea.vmem %s6, %s257
      %s259 = smul.u32 16, %s17
      %p260 = scmp.lt.s32.totalorder %s259, 31
      %s261 = scalar_select %p260, %s259, 31
      %s262 = smul.addr %s261, 8
      %s263 = scalar_lea.vmem %s0, %s262
      %s264 = smul.u32 16, %s17
      %s265 = smul.u32 16, %s17
      %p266 = scmp.lt.s32.totalorder %s265, 31
      %s267 = scalar_select %p266, %s265, 31
      %s268 = smul.addr %s267, 8
      %s269 = scalar_lea.vmem %s1, %s268
      %s270 = smul.u32 16, %s17
      %s271 = smul.u32 16, %s17
      %p272 = scmp.lt.s32.totalorder %s271, 31
      %s273 = scalar_select %p272, %s271, 31
      %s274 = smul.addr %s273, 8
      %s275 = scalar_lea.vmem %s6, %s274
      %s276 = smul.u32 16, %s17
      %v277 = vld [vmem:[%s263] sm:$0xff]
      %v278 = vld [vmem:[%s263 + $0x8] sm:$0xff]
      %v279 = vld [vmem:[%s263 + $0x10] sm:$0xff]
      %v280 = vld [vmem:[%s263 + $0x18] sm:$0xff]
      %v281 = vld [vmem:[%s263 + $0x20] sm:$0xff]
      %v282 = vld [vmem:[%s263 + $0x28] sm:$0xff]
      %v283 = vld [vmem:[%s263 + $0x30] sm:$0xff]
      %v284 = vld [vmem:[%s263 + $0x38] sm:$0xff]
      %v285 = vld [vmem:[%s263 + $0x40] sm:$0xff]
      %v286 = vld [vmem:[%s263 + $0x48] sm:$0xff]
      %v287 = vld [vmem:[%s263 + $0x50] sm:$0xff]
      %v288 = vld [vmem:[%s263 + $0x58] sm:$0xff]
      %v289 = vld [vmem:[%s263 + $0x60] sm:$0xff]
      %v290 = vld [vmem:[%s263 + $0x68] sm:$0xff]
      %v291 = vld [vmem:[%s263 + $0x70] sm:$0xff]
      %v292 = vld [vmem:[%s263 + $0x78] sm:$0xff]
      %v293 = vld [vmem:[%s2] sm:$0x1]
      %v295 = vlaneseq
      %v296 = vshrl.u32 %v295, 7
      %v297 = vsub.s32 0, %v296
      %v298 = vrot.slane %v293, %v297
      %v300 = vmul.f32 %v277, %v298
      %v301 = vmul.f32 %v278, %v298
      %v302 = vmul.f32 %v279, %v298
      %v303 = vmul.f32 %v280, %v298
      %v304 = vmul.f32 %v281, %v298
      %v305 = vmul.f32 %v282, %v298
      %v306 = vmul.f32 %v283, %v298
      %v307 = vmul.f32 %v284, %v298
      %v308 = vmul.f32 %v285, %v298
      %v309 = vmul.f32 %v286, %v298
      %v310 = vmul.f32 %v287, %v298
      %v311 = vmul.f32 %v288, %v298
      %v312 = vmul.f32 %v289, %v298
      %v313 = vmul.f32 %v290, %v298
      %v314 = vmul.f32 %v291, %v298
      %v315 = vmul.f32 %v292, %v298
      %v316 = vld [vmem:[%s3] sm:$0x1]
      %v318 = vlaneseq
      %v319 = vshrl.u32 %v318, 7
      %v320 = vsub.s32 0, %v319
      %v321 = vrot.slane %v316, %v320
      %v323 = vadd.f32 %v300, %v321
      %v324 = vadd.f32 %v301, %v321
      %v325 = vadd.f32 %v302, %v321
      %v326 = vadd.f32 %v303, %v321
      %v327 = vadd.f32 %v304, %v321
      %v328 = vadd.f32 %v305, %v321
      %v329 = vadd.f32 %v306, %v321
      %v330 = vadd.f32 %v307, %v321
      %v331 = vadd.f32 %v308, %v321
      %v332 = vadd.f32 %v309, %v321
      %v333 = vadd.f32 %v310, %v321
      %v334 = vadd.f32 %v311, %v321
      %v335 = vadd.f32 %v312, %v321
      %v336 = vadd.f32 %v313, %v321
      %v337 = vadd.f32 %v314, %v321
      %v338 = vadd.f32 %v315, %v321
      %v339 = vld [vmem:[%s269] sm:$0xff]
      %v340 = vld [vmem:[%s269 + $0x8] sm:$0xff]
      %v341 = vld [vmem:[%s269 + $0x10] sm:$0xff]
      %v342 = vld [vmem:[%s269 + $0x18] sm:$0xff]
      %v343 = vld [vmem:[%s269 + $0x20] sm:$0xff]
      %v344 = vld [vmem:[%s269 + $0x28] sm:$0xff]
      %v345 = vld [vmem:[%s269 + $0x30] sm:$0xff]
      %v346 = vld [vmem:[%s269 + $0x38] sm:$0xff]
      %v347 = vld [vmem:[%s269 + $0x40] sm:$0xff]
      %v348 = vld [vmem:[%s269 + $0x48] sm:$0xff]
      %v349 = vld [vmem:[%s269 + $0x50] sm:$0xff]
      %v350 = vld [vmem:[%s269 + $0x58] sm:$0xff]
      %v351 = vld [vmem:[%s269 + $0x60] sm:$0xff]
      %v352 = vld [vmem:[%s269 + $0x68] sm:$0xff]
      %v353 = vld [vmem:[%s269 + $0x70] sm:$0xff]
      %v354 = vld [vmem:[%s269 + $0x78] sm:$0xff]
      %v355 = vld [vmem:[%s4] sm:$0x1]
      %v357 = vlaneseq
      %v358 = vshrl.u32 %v357, 7
      %v359 = vsub.s32 0, %v358
      %v360 = vrot.slane %v355, %v359
      %v362 = vmul.f32 %v339, %v360
      %v363 = vmul.f32 %v340, %v360
      %v364 = vmul.f32 %v341, %v360
      %v365 = vmul.f32 %v342, %v360
      %v366 = vmul.f32 %v343, %v360
      %v367 = vmul.f32 %v344, %v360
      %v368 = vmul.f32 %v345, %v360
      %v369 = vmul.f32 %v346, %v360
      %v370 = vmul.f32 %v347, %v360
      %v371 = vmul.f32 %v348, %v360
      %v372 = vmul.f32 %v349, %v360
      %v373 = vmul.f32 %v350, %v360
      %v374 = vmul.f32 %v351, %v360
      %v375 = vmul.f32 %v352, %v360
      %v376 = vmul.f32 %v353, %v360
      %v377 = vmul.f32 %v354, %v360
      %v378 = vld [vmem:[%s5] sm:$0x1]
      %v380 = vlaneseq
      %v381 = vshrl.u32 %v380, 7
      %v382 = vsub.s32 0, %v381
      %v383 = vrot.slane %v378, %v382
      %v385 = vadd.f32 %v362, %v383
      %v386 = vadd.f32 %v363, %v383
      %v387 = vadd.f32 %v364, %v383
      %v388 = vadd.f32 %v365, %v383
      %v389 = vadd.f32 %v366, %v383
      %v390 = vadd.f32 %v367, %v383
      %v391 = vadd.f32 %v368, %v383
      %v392 = vadd.f32 %v369, %v383
      %v393 = vadd.f32 %v370, %v383
      %v394 = vadd.f32 %v371, %v383
      %v395 = vadd.f32 %v372, %v383
      %v396 = vadd.f32 %v373, %v383
      %v397 = vadd.f32 %v374, %v383
      %v398 = vadd.f32 %v375, %v383
      %v399 = vadd.f32 %v376, %v383
      %v400 = vadd.f32 %v377, %v383
      %v401 = vadd.f32 %v323, %v385
      %v402 = vadd.f32 %v324, %v386
      %v403 = vadd.f32 %v325, %v387
      %v404 = vadd.f32 %v326, %v388
      %v405 = vadd.f32 %v327, %v389
      %v406 = vadd.f32 %v328, %v390
      %v407 = vadd.f32 %v329, %v391
      %v408 = vadd.f32 %v330, %v392
      %v409 = vadd.f32 %v331, %v393
      %v410 = vadd.f32 %v332, %v394
      %v411 = vadd.f32 %v333, %v395
      %v412 = vadd.f32 %v334, %v396
      %v413 = vadd.f32 %v335, %v397
      %v414 = vadd.f32 %v336, %v398
      %v415 = vadd.f32 %v337, %v399
      %v416 = vadd.f32 %v338, %v400
      %v417 = vmax.f32 %v401, 0.0
      %v418 = vmax.f32 %v402, 0.0
      %v419 = vmax.f32 %v403, 0.0
      %v420 = vmax.f32 %v404, 0.0
      %v421 = vmax.f32 %v405, 0.0
      %v422 = vmax.f32 %v406, 0.0
      %v423 = vmax.f32 %v407, 0.0
      %v424 = vmax.f32 %v408, 0.0
      %v425 = vmax.f32 %v409, 0.0
      %v426 = vmax.f32 %v410, 0.0
      %v427 = vmax.f32 %v411, 0.0
      %v428 = vmax.f32 %v412, 0.0
      %v429 = vmax.f32 %v413, 0.0
      %v430 = vmax.f32 %v414, 0.0
      %v431 = vmax.f32 %v415, 0.0
      %v432 = vmax.f32 %v416, 0.0
      %433 = vst [vmem:[%s275] sm:$0xff] %v417
      %434 = vst [vmem:[%s275 + $0x8] sm:$0xff] %v418
      %435 = vst [vmem:[%s275 + $0x10] sm:$0xff] %v419
      %436 = vst [vmem:[%s275 + $0x18] sm:$0xff] %v420
      %437 = vst [vmem:[%s275 + $0x20] sm:$0xff] %v421
      %438 = vst [vmem:[%s275 + $0x28] sm:$0xff] %v422
      %439 = vst [vmem:[%s275 + $0x30] sm:$0xff] %v423
      %440 = vst [vmem:[%s275 + $0x38] sm:$0xff] %v424
      %441 = vst [vmem:[%s275 + $0x40] sm:$0xff] %v425
      %442 = vst [vmem:[%s275 + $0x48] sm:$0xff] %v426
      %443 = vst [vmem:[%s275 + $0x50] sm:$0xff] %v427
      %444 = vst [vmem:[%s275 + $0x58] sm:$0xff] %v428
      %445 = vst [vmem:[%s275 + $0x60] sm:$0xff] %v429
      %446 = vst [vmem:[%s275 + $0x68] sm:$0xff] %v430
      %447 = vst [vmem:[%s275 + $0x70] sm:$0xff] %v431
      %448 = vst [vmem:[%s275 + $0x78] sm:$0xff] %v432
      %s449 = smul.u32 16, %s17
      %p450 = scmp.lt.s32.totalorder %s449, 31
      %s451 = scalar_select %p450, %s449, 31
      %s452 = smul.addr %s451, 8
      %s453 = scalar_lea.vmem %s6, %s452
      // Predicated region
      $region45: #{sparse_residual_block_pallas.9} parent=43 // pred_check
        %p454 = pneg %p171
      $region46: #{sparse_residual_block_pallas.9} parent=43 // pred_check_branch
        %456 = sbr.rel (%p454) target = $region48
      $region47: #{sparse_residual_block_pallas.9} parent=43 // pred_region
        %s457 = smul.u32 16, %s17
      $region48: #{sparse_residual_block_pallas.9} parent=43 // pred_fallthru
        _
    $region44: #{sparse_residual_block_pallas.9} parent=5 // pred_fallthru
      _
    %p458 = scmp.le.s32.totalorder 2, %s12
    // Predicated region
    $region49: #{sparse_residual_block_pallas.9} parent=5 // pred_check
      %p459 = pneg %p458
    $region50: #{sparse_residual_block_pallas.9} parent=5 // pred_check_branch
      %461 = sbr.rel (%p459) target = $region52
    $region51: #{sparse_residual_block_pallas.9} parent=5 // pred_region
      %s462 = ssub.s32 %s12, 2
      // Predicated region
      $region53: #{sparse_residual_block_pallas.9} parent=51 // pred_check
        %p463 = pneg %p177
      $region54: #{sparse_residual_block_pallas.9} parent=51 // pred_check_branch
        %465 = sbr.rel (%p463) target = $region56
      $region55: #{sparse_residual_block_pallas.9} parent=51 // pred_region
        %s466 = smul.u32 16, %s18
        %p467 = scmp.lt.s32.totalorder %s466, 31
        %s468 = scalar_select %p467, %s466, 31
        %s469 = smul.addr %s468, 8
        %s470 = scalar_lea.vmem %s6, %s469
      $region56: #{sparse_residual_block_pallas.9} parent=51 // pred_fallthru
        _
    $region52: #{sparse_residual_block_pallas.9} parent=5 // pred_fallthru
      _
  $region6: #{sparse_residual_block_pallas.9} parent=0 // loop_footer
    %s16 = sadd.s32 1, %s12
  $region7: #{sparse_residual_block_pallas.9} parent=0 // loop_footer_branch
    %11 = sbr.rel target = $region3
  $region8: #{sparse_residual_block_pallas.9} parent=0 // loop_exit
    _

</llo_original>
